<compile_context>
chip_gen: v6e
topology: v6e:2x2x1
jax: 0.10.0
libtpu: 0.0.40
codegen_flags: <defaults>
</compile_context>

<pallas_src>
import jax
import jax.numpy as jnp
from jax.experimental import pallas as pl
from jax.experimental.pallas import tpu as pltpu

IN_FEATURES = 2048
HIDDEN = 1024
OUT_FEATURES = 1
LEAKY_SLOPE = 0.01


def _make_kernel(single_k: bool, fold_b2: bool):
    """Build the kernel body for the statically-chosen configuration.

    single_k: the K (=2048) reduction fits in one grid step -> no accumulator.
    fold_b2 : add the final bias in-kernel (n_tiles == 1 path) so the wrapper
              returns the pallas_call output directly.
    """

    def epilogue(acc, b1_ref, w2_ref, b2_ref, o_ref):
        # Bias + LeakyReLU(0.01).  max(h, s*h) == leaky_relu for 0 < s < 1 and
        # is a single VPU op on the serial epilogue.
        h = acc + b1_ref[...]
        h = jnp.maximum(h, jnp.float32(LEAKY_SLOPE) * h)
        # Linear #2 restricted to this HIDDEN tile: the single output column is
        # a VPU multiply + lane reduction (avoids a 1/256-lane-wide MXU matmul).
        out = jnp.sum(h * w2_ref[...], axis=-1, keepdims=True)  # (B, 1)
        if fold_b2:
            out = out + b2_ref[...]
        o_ref[...] = out.astype(o_ref.dtype)

    if single_k:

        def kernel(x_ref, w1_ref, b1_ref, w2_ref, b2_ref, o_ref):
            acc = jnp.dot(
                x_ref[...], w1_ref[...], preferred_element_type=jnp.float32
            )
            epilogue(acc, b1_ref, w2_ref, b2_ref, o_ref)

    else:

        def kernel(x_ref, w1_ref, b1_ref, w2_ref, b2_ref, o_ref, acc_ref):
            k = pl.program_id(1)
            part = jnp.dot(
                x_ref[...], w1_ref[...], preferred_element_type=jnp.float32
            )

            @pl.when(k == 0)
            def _():
                acc_ref[...] = part          # no zero-fill + reload at k == 0

            @pl.when(k != 0)
            def _():
                acc_ref[...] += part

            @pl.when(k == pl.num_programs(1) - 1)
            def _():
                epilogue(acc_ref[...], b1_ref, w2_ref, b2_ref, o_ref)

    return kernel


def _default_n_tiles():
    """Split HIDDEN across TensorCores only where it can help (v7x: 2 TCs)."""
    try:
        kind = jax.devices()[0].device_kind.lower()
        if "v7" in kind or "7x" in kind:
            return 2
    except Exception:
        pass
    return 1


def discriminator_fea_forward(x, w1, b1, w2, b2, *, tk=IN_FEATURES, n_tiles=None):
    """x: (B, 2048) -> (B, 1) float32.  ReverseLayerF is identity in forward.

    x and w1 are streamed in the dtype they arrive in (store them in bf16
    persistently for ~2x less HBM traffic); there is no per-call cast on the
    hot path.  MXU accumulation is always f32.
    """
    B, K = x.shape
    assert K == IN_FEATURES and K % tk == 0 and tk % 128 == 0
    if n_tiles is None:
        n_tiles = _default_n_tiles()
    assert HIDDEN % n_tiles == 0
    n_block = HIDDEN // n_tiles
    assert n_block % 128 == 0
    k_tiles = K // tk
    single_k = k_tiles == 1
    fold_b2 = n_tiles == 1

    # Tiny operands: reshaping/casting these per call is negligible.
    b1_2d = b1.reshape(1, HIDDEN).astype(jnp.float32)
    w2_row = w2.reshape(1, HIDDEN).astype(jnp.float32)    # (1024, 1) -> (1, 1024)
    b2_2d = b2.reshape(1, OUT_FEATURES).astype(jnp.float32)

    if fold_b2:
        out_shape = jax.ShapeDtypeStruct((B, OUT_FEATURES), jnp.float32)
        out_spec = pl.BlockSpec((B, OUT_FEATURES), lambda n, k: (0, 0))
    else:
        out_shape = jax.ShapeDtypeStruct((n_tiles, B, OUT_FEATURES), jnp.float32)
        out_spec = pl.BlockSpec((None, B, OUT_FEATURES), lambda n, k: (n, 0, 0))

    cost = pl.CostEstimate(
        flops=2 * B * K * HIDDEN + 2 * B * HIDDEN,
        transcendentals=0,
        bytes_accessed=(
            x.size * x.dtype.itemsize
            + w1.size * w1.dtype.itemsize
            + b1_2d.size * 4
            + w2_row.size * 4
            + b2_2d.size * 4
            + n_tiles * B * OUT_FEATURES * 4
        ),
    )

    out = pl.pallas_call(
        _make_kernel(single_k, fold_b2),
        out_shape=out_shape,
        grid_spec=pltpu.PrefetchScalarGridSpec(
            num_scalar_prefetch=0,
            grid=(n_tiles, k_tiles),
            in_specs=[
                pl.BlockSpec((B, tk), lambda n, k: (0, k)),            # x tile
                pl.BlockSpec((tk, n_block), lambda n, k: (k, n)),      # W1 tile
                pl.BlockSpec((1, n_block), lambda n, k: (0, n)),       # b1 tile
                pl.BlockSpec((1, n_block), lambda n, k: (0, n)),       # w2 row tile
                pl.BlockSpec((1, OUT_FEATURES), lambda n, k: (0, 0)),  # b2 scalar
            ],
            out_specs=out_spec,
            scratch_shapes=(
                [] if single_k else [pltpu.VMEM((B, n_block), jnp.float32)]
            ),
        ),
        compiler_params=pltpu.CompilerParams(
            # TODO(synk): verify with xprof that "parallel" actually shards the
            # HIDDEN axis across v7x's two TensorCores; if it serializes,
            # switch to pltpu.CORE_PARALLEL or an explicit pl.core_map split.
            dimension_semantics=("parallel", "arbitrary"),
        ),
        cost_estimate=cost,
    )(x, w1, b1_2d, w2_row, b2_2d)

    if fold_b2:
        return out
    # Exact recombination of the HIDDEN-split partials + final bias
    # (LeakyReLU is elementwise and applied before the w2 contraction per tile).
    return out.sum(axis=0) + b2_2d


def _reference_forward(x_bf, w1_bf, b1, w2, b2):
    x = x_bf.astype(jnp.float32)
    w1 = w1_bf.astype(jnp.float32)
    h = jnp.dot(x, w1, precision=jax.lax.Precision.HIGHEST) + b1
    h = jnp.where(h > 0, h, LEAKY_SLOPE * h)
    return jnp.dot(h, w2, precision=jax.lax.Precision.HIGHEST) + b2


if __name__ == "__main__":
    key = jax.random.PRNGKey(0)
    k_x, k_w1, k_b1, k_w2, k_b2 = jax.random.split(key, 5)

    B = 8  # small batch; feature dims fixed by the module (2048 -> 1024 -> 1)
    x_f32 = jax.random.normal(k_x, (B, IN_FEATURES), dtype=jnp.float32)

    lim1 = 1.0 / (IN_FEATURES ** 0.5)
    lim2 = 1.0 / (HIDDEN ** 0.5)
    w1_f32 = jax.random.uniform(k_w1, (IN_FEATURES, HIDDEN), jnp.float32, -lim1, lim1)
    b1 = jax.random.uniform(k_b1, (HIDDEN,), jnp.float32, -lim1, lim1)
    w2 = jax.random.uniform(k_w2, (HIDDEN, OUT_FEATURES), jnp.float32, -lim2, lim2)
    b2 = jax.random.uniform(k_b2, (OUT_FEATURES,), jnp.float32, -lim2, lim2)

    # One-time (init-time) bf16 storage of the streamed operands.  The forward
    # wrapper never casts, so the hot path streams exactly these arrays.
    x_bf = jax.block_until_ready(x_f32.astype(jnp.bfloat16))
    w1_bf = jax.block_until_ready(w1_f32.astype(jnp.bfloat16))

    ref = _reference_forward(x_bf, w1_bf, b1, w2, b2)

    configs = [
        dict(tk=IN_FEATURES, n_tiles=1),     # single-TC path, b2 folded in-kernel
        dict(tk=IN_FEATURES, n_tiles=2),     # megacore HIDDEN split (v7x)
        dict(tk=512, n_tiles=1),             # K-accumulation path, b2 in-kernel
        dict(tk=512, n_tiles=2),             # K-accumulation + HIDDEN split
        dict(tk=IN_FEATURES, n_tiles=None),  # auto chip-gated default
    ]
    for cfg in configs:
        out = discriminator_fea_forward(x_bf, w1_bf, b1, w2, b2, **cfg)
        out = jax.block_until_ready(out)
        assert out.shape == (B, OUT_FEATURES), (out.shape, cfg)
        assert jnp.allclose(out, ref, atol=1e-3, rtol=1e-3), f"mismatch: {cfg}"

    print("KERNEL_OK")
</pallas_src>

<mosaic_0001>
module attributes {stable_mosaic.version = 11 : i64} {
  func.func @kernel(%arg0: i32, %arg1: i32, %arg2: memref<8x2048xbf16, #tpu.memory_space<vmem>>, %arg3: memref<2048x1024xbf16, #tpu.memory_space<vmem>>, %arg4: memref<1x1024xf32, #tpu.memory_space<vmem>>, %arg5: memref<1x1024xf32, #tpu.memory_space<vmem>>, %arg6: memref<1x1xf32, #tpu.memory_space<vmem>>, %arg7: memref<8x1xf32, #tpu.memory_space<vmem>>) attributes {dimension_semantics = [#tpu.dimension_semantics<parallel>, #tpu.dimension_semantics<arbitrary>], iteration_bounds = array<i64: 1, 1>, scalar_prefetch = 0 : i64, scratch_operands = 0 : i64, tpu.core_type = #tpu.core_type<tc>, window_params = [{transform_indices = @transform_0, window_bounds = array<i64: 8, 2048>}, {transform_indices = @transform_1, window_bounds = array<i64: 2048, 1024>}, {transform_indices = @transform_2, window_bounds = array<i64: 1, 1024>}, {transform_indices = @transform_3, window_bounds = array<i64: 1, 1024>}, {pipeline_mode = #tpu.pipeline_mode<synchronous>, transform_indices = @transform_4, window_bounds = array<i64: 1, 1>}, {pipeline_mode = #tpu.pipeline_mode<synchronous>, transform_indices = @transform_5, window_bounds = array<i64: 8, 1>}]} {
    %c0 = arith.constant 0 : index
    %c0_0 = arith.constant 0 : index
    %0 = vector.load %arg2[%c0, %c0_0] : memref<8x2048xbf16, #tpu.memory_space<vmem>>, vector<8x2048xbf16>
    %c0_1 = arith.constant 0 : index
    %c0_2 = arith.constant 0 : index
    %1 = vector.load %arg3[%c0_1, %c0_2] : memref<2048x1024xbf16, #tpu.memory_space<vmem>>, vector<2048x1024xbf16>
    %cst = arith.constant dense<0.000000e+00> : vector<8x1024xf32>
    %2 = tpu.matmul %0, %1, %cst {dimension_numbers = #tpu.dot_dimension_numbers<[1], [0], [0], [1], [0, 0, 1, 1], [], []>} : vector<8x2048xbf16>, vector<2048x1024xbf16>, vector<8x1024xf32> -> vector<8x1024xf32>
    %c0_3 = arith.constant 0 : index
    %c0_4 = arith.constant 0 : index
    %3 = vector.load %arg4[%c0_3, %c0_4] : memref<1x1024xf32, #tpu.memory_space<vmem>>, vector<1x1024xf32>
    %4 = vector.broadcast %3 : vector<1x1024xf32> to vector<8x1024xf32>
    %5 = arith.addf %2, %4 : vector<8x1024xf32>
    %cst_5 = arith.constant 0.00999999977 : f32
    %6 = vector.broadcast %cst_5 : f32 to vector<8x1024xf32>
    %7 = arith.mulf %6, %5 : vector<8x1024xf32>
    %8 = arith.maximumf %5, %7 : vector<8x1024xf32>
    %c0_6 = arith.constant 0 : index
    %c0_7 = arith.constant 0 : index
    %9 = vector.load %arg5[%c0_6, %c0_7] : memref<1x1024xf32, #tpu.memory_space<vmem>>, vector<1x1024xf32>
    %10 = vector.broadcast %9 : vector<1x1024xf32> to vector<8x1024xf32>
    %11 = arith.mulf %8, %10 : vector<8x1024xf32>
    %cst_8 = arith.constant dense<0.000000e+00> : vector<8xf32>
    %12 = vector.multi_reduction <add>, %11, %cst_8 [1] : vector<8x1024xf32> to vector<8xf32>
    %13 = vector.shape_cast %12 : vector<8xf32> to vector<8x1xf32>
    %c0_9 = arith.constant 0 : index
    %c0_10 = arith.constant 0 : index
    %14 = vector.load %arg6[%c0_9, %c0_10] : memref<1x1xf32, #tpu.memory_space<vmem>>, vector<1x1xf32>
    %15 = vector.broadcast %14 : vector<1x1xf32> to vector<8x1xf32>
    %16 = arith.addf %13, %15 : vector<8x1xf32>
    %c0_11 = arith.constant 0 : index
    %c0_12 = arith.constant 0 : index
    %17 = vector.load %arg7[%c0_11, %c0_12] : memref<8x1xf32, #tpu.memory_space<vmem>>, vector<8x1xf32>
    tpu.vector_store %arg7[%c0_11, %c0_12], %16 {strides = array<i32>} : memref<8x1xf32, #tpu.memory_space<vmem>>, vector<8x1xf32>,
    return
  }
  func.func @transform_0(%arg0: i32, %arg1: i32) -> (i32, i32) {
    %c0_i32 = arith.constant 0 : i32
    %c0_i32_0 = arith.constant 0 : i32
    return %c0_i32, %arg1 : i32, i32
  }
  func.func @transform_1(%arg0: i32, %arg1: i32) -> (i32, i32) {
    %c0_i32 = arith.constant 0 : i32
    return %arg1, %arg0 : i32, i32
  }
  func.func @transform_2(%arg0: i32, %arg1: i32) -> (i32, i32) {
    %c0_i32 = arith.constant 0 : i32
    %c0_i32_0 = arith.constant 0 : i32
    return %c0_i32, %arg0 : i32, i32
  }
  func.func @transform_3(%arg0: i32, %arg1: i32) -> (i32, i32) {
    %c0_i32 = arith.constant 0 : i32
    %c0_i32_0 = arith.constant 0 : i32
    return %c0_i32, %arg0 : i32, i32
  }
  func.func @transform_4(%arg0: i32, %arg1: i32) -> (i32, i32) {
    %c0_i32 = arith.constant 0 : i32
    %c0_i32_0 = arith.constant 0 : i32
    %c0_i32_1 = arith.constant 0 : i32
    return %c0_i32, %c0_i32_0 : i32, i32
  }
  func.func @transform_5(%arg0: i32, %arg1: i32) -> (i32, i32) {
    %c0_i32 = arith.constant 0 : i32
    %c0_i32_0 = arith.constant 0 : i32
    %c0_i32_1 = arith.constant 0 : i32
    return %c0_i32, %c0_i32_0 : i32, i32
  }
}

</mosaic_0001>

<llo_original>
// kernel: tpu_custom_call.1
$region0: #{tpu_custom_call.1}
  #allocation0 [shape = 'u32[]', space=smem, size = 0x4, offset = 0x4, fixed_abs, tag = 'smem constant byte address 0x4 - core index']
  #allocation1 [shape = 'u32[144,128]{1,0:T(1,128)}', space=vmem, size = 0x12000, scoped, tag = 'internal scratch']
  #allocation2 [shape = 'f32[1,1]{1,0:T(1,128)S(1)}', space=vmem, size = 0x200, scoped, tag = 'scoped memory for tpu_custom_call.1']
  %s0 = inlined_call_operand.hbm [shape: bf16[8,2048], index: 0, kind: input, shape index: {}]
  %s1 = inlined_call_operand.hbm [shape: bf16[2048,1024], index: 1, kind: input, shape index: {}]
  %s2 = inlined_call_operand.hbm [shape: f32[1,1024], index: 2, kind: input, shape index: {}]
  %s3 = inlined_call_operand.hbm [shape: f32[1,1024], index: 3, kind: input, shape index: {}]
  %s4 = inlined_call_operand.<no memory space> [shape: f32[1,1], index: 4, kind: input, shape index: {}]
  %s5 = inlined_call_operand.vmem [shape: f32[8,1], index: 5, kind: output, shape index: {}]
  %s6 = sld [smem:[#allocation0]]
  $region46: #{tpu_custom_call.1} parent=0
    _
  %s8 = ssub.s32 1, %s6
  %s9 = scalar_select 0, %s8, %s6
  %v10 = vstv %s4
  %11 = vst [vmem:[#allocation2] sm:$0x1] %v10
  $region1: #{tpu_custom_call.1} parent=0
    #allocation3 [shape = 'u8[32768]{0}', space=vmem, size = 0x8000, scoped, tag = 'input window, operand 0, single buffered']
    #allocation4 [shape = 's32[1]{0}', space=sflag, size = 0x4, scoped, tag = 'scoped memory for tpu_custom_call.1']
    #allocation5 [shape = 'u8[4194304]{0}', space=vmem, size = 0x400000, scoped, tag = 'input window, operand 1, single buffered']
    #allocation6 [shape = 's32[1]{0}', space=sflag, size = 0x4, scoped, tag = 'scoped memory for tpu_custom_call.1']
    #allocation7 [shape = 'u8[4096]{0}', space=vmem, size = 0x1000, scoped, tag = 'input window, operand 2, single buffered']
    #allocation8 [shape = 'u8[4096]{0}', space=vmem, size = 0x1000, scoped, tag = 'input window, operand 3, single buffered']
    #allocation9 [shape = 's32[1]{0}', space=sflag, size = 0x4, scoped, tag = 'scoped memory for tpu_custom_call.1']
    %12 = vsyncpa [#allocation4], 0
    %13 = vsyncpa [#allocation6], 0
    %14 = vsyncpa [#allocation9], 0
    // Predicated region
    $region2: #{tpu_custom_call.1} parent=1 // pred_check
      _
    $region3: #{tpu_custom_call.1} parent=1 // pred_check_branch
      %16 = sbr.rel (0) target = $region5
    $region4: #{tpu_custom_call.1} parent=1 // pred_region
      %s18 = ssub.s32 1024, 1024
      %19 = vsyncadd [#allocation4], %s18
      %s21 = sshll.u32 [#allocation3], 4
      %s22 = int_to_ptr.vmem [resolvable:$true] %s21
      %24 = dma.hbm_to_vmem [thread:$0]  %s0, 1024, %s22, [#allocation4]
    $region5: #{tpu_custom_call.1} parent=1 // pred_fallthru
      _
    // Predicated region
    $region6: #{tpu_custom_call.1} parent=1 // pred_check
      _
    $region7: #{tpu_custom_call.1} parent=1 // pred_check_branch
      %26 = sbr.rel (0) target = $region9
    $region8: #{tpu_custom_call.1} parent=1 // pred_region
      %s28 = ssub.s32 131072, 131072
      %29 = vsyncadd [#allocation6], %s28
      %s30 = sshll.u32 [#allocation5], 4
      %s31 = int_to_ptr.vmem [resolvable:$true] %s30
      %36 = dma.hbm_to_vmem [thread:$0]  %s1, 131072, %s31, [#allocation6], 512, 512, 32
    $region9: #{tpu_custom_call.1} parent=1 // pred_fallthru
      _
    // Predicated region
    $region10: #{tpu_custom_call.1} parent=1 // pred_check
      _
    $region11: #{tpu_custom_call.1} parent=1 // pred_check_branch
      %38 = sbr.rel (0) target = $region13
    $region12: #{tpu_custom_call.1} parent=1 // pred_region
      %s40 = ssub.s32 128, 128
      %41 = vsyncadd [#allocation6], %s40
      %s43 = sshll.u32 [#allocation7], 4
      %s44 = int_to_ptr.vmem [resolvable:$true] %s43
      %46 = dma.hbm_to_vmem [thread:$0]  %s2, 128, %s44, [#allocation6]
    $region13: #{tpu_custom_call.1} parent=1 // pred_fallthru
      _
    // Predicated region
    $region14: #{tpu_custom_call.1} parent=1 // pred_check
      _
    $region15: #{tpu_custom_call.1} parent=1 // pred_check_branch
      %48 = sbr.rel (0) target = $region17
    $region16: #{tpu_custom_call.1} parent=1 // pred_region
      %s50 = ssub.s32 128, 128
      %51 = vsyncadd [#allocation9], %s50
      %s53 = sshll.u32 [#allocation8], 4
      %s54 = int_to_ptr.vmem [resolvable:$true] %s53
      %56 = dma.hbm_to_vmem [thread:$0]  %s3, 128, %s54, [#allocation9]
    $region17: #{tpu_custom_call.1} parent=1 // pred_fallthru
      _
    // Predicated region
    $region18: #{tpu_custom_call.1} parent=1 // pred_check
      _
    $region19: #{tpu_custom_call.1} parent=1 // pred_check_branch
      %58 = sbr.rel (0) target = $region21
    $region20: #{tpu_custom_call.1} parent=1 // pred_region
      _
    $region21: #{tpu_custom_call.1} parent=1 // pred_fallthru
      _
    // Predicated region
    $region22: #{tpu_custom_call.1} parent=1 // pred_check
      _
    $region23: #{tpu_custom_call.1} parent=1 // pred_check_branch
      %60 = sbr.rel (0) target = $region25
    $region24: #{tpu_custom_call.1} parent=1 // pred_region
      %61 = dma.done [#allocation4], 1024
    $region25: #{tpu_custom_call.1} parent=1 // pred_fallthru
      _
    // Predicated region
    $region26: #{tpu_custom_call.1} parent=1 // pred_check
      _
    $region27: #{tpu_custom_call.1} parent=1 // pred_check_branch
      %63 = sbr.rel (0) target = $region29
    $region28: #{tpu_custom_call.1} parent=1 // pred_region
      %64 = dma.done [#allocation6], 131072
    $region29: #{tpu_custom_call.1} parent=1 // pred_fallthru
      _
    // Predicated region
    $region30: #{tpu_custom_call.1} parent=1 // pred_check
      _
    $region31: #{tpu_custom_call.1} parent=1 // pred_check_branch
      %66 = sbr.rel (0) target = $region33
    $region32: #{tpu_custom_call.1} parent=1 // pred_region
      %67 = dma.done [#allocation6], 128
    $region33: #{tpu_custom_call.1} parent=1 // pred_fallthru
      _
    // Predicated region
    $region34: #{tpu_custom_call.1} parent=1 // pred_check
      _
    $region35: #{tpu_custom_call.1} parent=1 // pred_check_branch
      %69 = sbr.rel (0) target = $region37
    $region36: #{tpu_custom_call.1} parent=1 // pred_region
      %70 = dma.done [#allocation9], 128
    $region37: #{tpu_custom_call.1} parent=1 // pred_fallthru
      _
    %v71 = vld [vmem:[#allocation3] sm:$0xff]
    %v72 = vld [vmem:[#allocation3 + $0x8] sm:$0xff]
    %v73 = vld [vmem:[#allocation3 + $0x10] sm:$0xff]
    %v74 = vld [vmem:[#allocation3 + $0x18] sm:$0xff]
    %v75 = vld [vmem:[#allocation3 + $0x20] sm:$0xff]
    %v76 = vld [vmem:[#allocation3 + $0x28] sm:$0xff]
    %v77 = vld [vmem:[#allocation3 + $0x30] sm:$0xff]
    %v78 = vld [vmem:[#allocation3 + $0x38] sm:$0xff]
    %v79 = vld [vmem:[#allocation5] sm:$0xff]
    %v80 = vld [vmem:[#allocation5 + $0x8] sm:$0xff]
    %v81 = vld [vmem:[#allocation5 + $0x10] sm:$0xff]
    %v82 = vld [vmem:[#allocation5 + $0x18] sm:$0xff]
    %v83 = vld [vmem:[#allocation5 + $0x20] sm:$0xff]
    %v84 = vld [vmem:[#allocation5 + $0x28] sm:$0xff]
    %v85 = vld [vmem:[#allocation5 + $0x30] sm:$0xff]
    %v86 = vld [vmem:[#allocation5 + $0x38] sm:$0xff]
    %v87 = vld [vmem:[#allocation5 + $0x40] sm:$0xff]
    %v88 = vld [vmem:[#allocation5 + $0x48] sm:$0xff]
    %v89 = vld [vmem:[#allocation5 + $0x50] sm:$0xff]
    %v90 = vld [vmem:[#allocation5 + $0x58] sm:$0xff]
    %v91 = vld [vmem:[#allocation5 + $0x60] sm:$0xff]
    %v92 = vld [vmem:[#allocation5 + $0x68] sm:$0xff]
    %v93 = vld [vmem:[#allocation5 + $0x70] sm:$0xff]
    %v94 = vld [vmem:[#allocation5 + $0x78] sm:$0xff]
    %v95 = vld [vmem:[#allocation5 + $0x80] sm:$0xff]
    %v96 = vld [vmem:[#allocation5 + $0x88] sm:$0xff]
    %v97 = vld [vmem:[#allocation5 + $0x90] sm:$0xff]
    %v98 = vld [vmem:[#allocation5 + $0x98] sm:$0xff]
    %v99 = vld [vmem:[#allocation5 + $0xa0] sm:$0xff]
    %v100 = vld [vmem:[#allocation5 + $0xa8] sm:$0xff]
    %v101 = vld [vmem:[#allocation5 + $0xb0] sm:$0xff]
    %v102 = vld [vmem:[#allocation5 + $0xb8] sm:$0xff]
    %v103 = vld [vmem:[#allocation5 + $0xc0] sm:$0xff]
    %v104 = vld [vmem:[#allocation5 + $0xc8] sm:$0xff]
    %v105 = vld [vmem:[#allocation5 + $0xd0] sm:$0xff]
    %v106 = vld [vmem:[#allocation5 + $0xd8] sm:$0xff]
    %v107 = vld [vmem:[#allocation5 + $0xe0] sm:$0xff]
    %v108 = vld [vmem:[#allocation5 + $0xe8] sm:$0xff]
    %v109 = vld [vmem:[#allocation5 + $0xf0] sm:$0xff]
    %v110 = vld [vmem:[#allocation5 + $0xf8] sm:$0xff]
    %v111 = vld [vmem:[#allocation5 + $0x100] sm:$0xff]
    %v112 = vld [vmem:[#allocation5 + $0x108] sm:$0xff]
    %v113 = vld [vmem:[#allocation5 + $0x110] sm:$0xff]
    %v114 = vld [vmem:[#allocation5 + $0x118] sm:$0xff]
    %v115 = vld [vmem:[#allocation5 + $0x120] sm:$0xff]
    %v116 = vld [vmem:[#allocation5 + $0x128] sm:$0xff]
    %v117 = vld [vmem:[#allocation5 + $0x130] sm:$0xff]
    %v118 = vld [vmem:[#allocation5 + $0x138] sm:$0xff]
    %v119 = vld [vmem:[#allocation5 + $0x140] sm:$0xff]
    %v120 = vld [vmem:[#allocation5 + $0x148] sm:$0xff]
    %v121 = vld [vmem:[#allocation5 + $0x150] sm:$0xff]
    %v122 = vld [vmem:[#allocation5 + $0x158] sm:$0xff]
    %v123 = vld [vmem:[#allocation5 + $0x160] sm:$0xff]
    %v124 = vld [vmem:[#allocation5 + $0x168] sm:$0xff]
    %v125 = vld [vmem:[#allocation5 + $0x170] sm:$0xff]
    %v126 = vld [vmem:[#allocation5 + $0x178] sm:$0xff]
    %v127 = vld [vmem:[#allocation5 + $0x180] sm:$0xff]
    %v128 = vld [vmem:[#allocation5 + $0x188] sm:$0xff]
    %v129 = vld [vmem:[#allocation5 + $0x190] sm:$0xff]
    %v130 = vld [vmem:[#allocation5 + $0x198] sm:$0xff]
    %v131 = vld [vmem:[#allocation5 + $0x1a0] sm:$0xff]
    %v132 = vld [vmem:[#allocation5 + $0x1a8] sm:$0xff]
    %v133 = vld [vmem:[#allocation5 + $0x1b0] sm:$0xff]
    %v134 = vld [vmem:[#allocation5 + $0x1b8] sm:$0xff]
    %v135 = vld [vmem:[#allocation5 + $0x1c0] sm:$0xff]
    %v136 = vld [vmem:[#allocation5 + $0x1c8] sm:$0xff]
    %v137 = vld [vmem:[#allocation5 + $0x1d0] sm:$0xff]
    %v138 = vld [vmem:[#allocation5 + $0x1d8] sm:$0xff]
    %v139 = vld [vmem:[#allocation5 + $0x1e0] sm:$0xff]
    %v140 = vld [vmem:[#allocation5 + $0x1e8] sm:$0xff]
    %v141 = vld [vmem:[#allocation5 + $0x1f0] sm:$0xff]
    %v142 = vld [vmem:[#allocation5 + $0x1f8] sm:$0xff]
    %v143 = vld [vmem:[#allocation5 + $0x200] sm:$0xff]
    %v144 = vld [vmem:[#allocation5 + $0x208] sm:$0xff]
    %v145 = vld [vmem:[#allocation5 + $0x210] sm:$0xff]
    %v146 = vld [vmem:[#allocation5 + $0x218] sm:$0xff]
    %v147 = vld [vmem:[#allocation5 + $0x220] sm:$0xff]
    %v148 = vld [vmem:[#allocation5 + $0x228] sm:$0xff]
    %v149 = vld [vmem:[#allocation5 + $0x230] sm:$0xff]
    %v150 = vld [vmem:[#allocation5 + $0x238] sm:$0xff]
    %v151 = vld [vmem:[#allocation5 + $0x240] sm:$0xff]
    %v152 = vld [vmem:[#allocation5 + $0x248] sm:$0xff]
    %v153 = vld [vmem:[#allocation5 + $0x250] sm:$0xff]
    %v154 = vld [vmem:[#allocation5 + $0x258] sm:$0xff]
    %v155 = vld [vmem:[#allocation5 + $0x260] sm:$0xff]
    %v156 = vld [vmem:[#allocation5 + $0x268] sm:$0xff]
    %v157 = vld [vmem:[#allocation5 + $0x270] sm:$0xff]
    %v158 = vld [vmem:[#allocation5 + $0x278] sm:$0xff]
    %v159 = vld [vmem:[#allocation5 + $0x280] sm:$0xff]
    %v160 = vld [vmem:[#allocation5 + $0x288] sm:$0xff]
    %v161 = vld [vmem:[#allocation5 + $0x290] sm:$0xff]
    %v162 = vld [vmem:[#allocation5 + $0x298] sm:$0xff]
    %v163 = vld [vmem:[#allocation5 + $0x2a0] sm:$0xff]
    %v164 = vld [vmem:[#allocation5 + $0x2a8] sm:$0xff]
    %v165 = vld [vmem:[#allocation5 + $0x2b0] sm:$0xff]
    %v166 = vld [vmem:[#allocation5 + $0x2b8] sm:$0xff]
    %v167 = vld [vmem:[#allocation5 + $0x2c0] sm:$0xff]
    %v168 = vld [vmem:[#allocation5 + $0x2c8] sm:$0xff]
    %v169 = vld [vmem:[#allocation5 + $0x2d0] sm:$0xff]
    %v170 = vld [vmem:[#allocation5 + $0x2d8] sm:$0xff]
    %v171 = vld [vmem:[#allocation5 + $0x2e0] sm:$0xff]
    %v172 = vld [vmem:[#allocation5 + $0x2e8] sm:$0xff]
    %v173 = vld [vmem:[#allocation5 + $0x2f0] sm:$0xff]
    %v174 = vld [vmem:[#allocation5 + $0x2f8] sm:$0xff]
    %v175 = vld [vmem:[#allocation5 + $0x300] sm:$0xff]
    %v176 = vld [vmem:[#allocation5 + $0x308] sm:$0xff]
    %v177 = vld [vmem:[#allocation5 + $0x310] sm:$0xff]
    %v178 = vld [vmem:[#allocation5 + $0x318] sm:$0xff]
    %v179 = vld [vmem:[#allocation5 + $0x320] sm:$0xff]
    %v180 = vld [vmem:[#allocation5 + $0x328] sm:$0xff]
    %v181 = vld [vmem:[#allocation5 + $0x330] sm:$0xff]
    %v182 = vld [vmem:[#allocation5 + $0x338] sm:$0xff]
    %v183 = vld [vmem:[#allocation5 + $0x340] sm:$0xff]
    %v184 = vld [vmem:[#allocation5 + $0x348] sm:$0xff]
    %v185 = vld [vmem:[#allocation5 + $0x350] sm:$0xff]
    %v186 = vld [vmem:[#allocation5 + $0x358] sm:$0xff]
    %v187 = vld [vmem:[#allocation5 + $0x360] sm:$0xff]
    %v188 = vld [vmem:[#allocation5 + $0x368] sm:$0xff]
    %v189 = vld [vmem:[#allocation5 + $0x370] sm:$0xff]
    %v190 = vld [vmem:[#allocation5 + $0x378] sm:$0xff]
    %v191 = vld [vmem:[#allocation5 + $0x380] sm:$0xff]
    %v192 = vld [vmem:[#allocation5 + $0x388] sm:$0xff]
    %v193 = vld [vmem:[#allocation5 + $0x390] sm:$0xff]
    %v194 = vld [vmem:[#allocation5 + $0x398] sm:$0xff]
    %v195 = vld [vmem:[#allocation5 + $0x3a0] sm:$0xff]
    %v196 = vld [vmem:[#allocation5 + $0x3a8] sm:$0xff]
    %v197 = vld [vmem:[#allocation5 + $0x3b0] sm:$0xff]
    %v198 = vld [vmem:[#allocation5 + $0x3b8] sm:$0xff]
    %v199 = vld [vmem:[#allocation5 + $0x3c0] sm:$0xff]
    %v200 = vld [vmem:[#allocation5 + $0x3c8] sm:$0xff]
    %v201 = vld [vmem:[#allocation5 + $0x3d0] sm:$0xff]
    %v202 = vld [vmem:[#allocation5 + $0x3d8] sm:$0xff]
    %v203 = vld [vmem:[#allocation5 + $0x3e0] sm:$0xff]
    %v204 = vld [vmem:[#allocation5 + $0x3e8] sm:$0xff]
    %v205 = vld [vmem:[#allocation5 + $0x3f0] sm:$0xff]
    %v206 = vld [vmem:[#allocation5 + $0x3f8] sm:$0xff]
    %v207 = vld [vmem:[#allocation5 + $0x400] sm:$0xff]
    %v208 = vld [vmem:[#allocation5 + $0x408] sm:$0xff]
    %v209 = vld [vmem:[#allocation5 + $0x410] sm:$0xff]
    %v210 = vld [vmem:[#allocation5 + $0x418] sm:$0xff]
    %v211 = vld [vmem:[#allocation5 + $0x420] sm:$0xff]
    %v212 = vld [vmem:[#allocation5 + $0x428] sm:$0xff]
    %v213 = vld [vmem:[#allocation5 + $0x430] sm:$0xff]
    %v214 = vld [vmem:[#allocation5 + $0x438] sm:$0xff]
    %v215 = vld [vmem:[#allocation5 + $0x440] sm:$0xff]
    %v216 = vld [vmem:[#allocation5 + $0x448] sm:$0xff]
    %v217 = vld [vmem:[#allocation5 + $0x450] sm:$0xff]
    %v218 = vld [vmem:[#allocation5 + $0x458] sm:$0xff]
    %v219 = vld [vmem:[#allocation5 + $0x460] sm:$0xff]
    %v220 = vld [vmem:[#allocation5 + $0x468] sm:$0xff]
    %v221 = vld [vmem:[#allocation5 + $0x470] sm:$0xff]
    %v222 = vld [vmem:[#allocation5 + $0x478] sm:$0xff]
    %v223 = vld [vmem:[#allocation5 + $0x480] sm:$0xff]
    %v224 = vld [vmem:[#allocation5 + $0x488] sm:$0xff]
    %v225 = vld [vmem:[#allocation5 + $0x490] sm:$0xff]
    %v226 = vld [vmem:[#allocation5 + $0x498] sm:$0xff]
    %v227 = vld [vmem:[#allocation5 + $0x4a0] sm:$0xff]
    %v228 = vld [vmem:[#allocation5 + $0x4a8] sm:$0xff]
    %v229 = vld [vmem:[#allocation5 + $0x4b0] sm:$0xff]
    %v230 = vld [vmem:[#allocation5 + $0x4b8] sm:$0xff]
    %v231 = vld [vmem:[#allocation5 + $0x4c0] sm:$0xff]
    %v232 = vld [vmem:[#allocation5 + $0x4c8] sm:$0xff]
    %v233 = vld [vmem:[#allocation5 + $0x4d0] sm:$0xff]
    %v234 = vld [vmem:[#allocation5 + $0x4d8] sm:$0xff]
    %v235 = vld [vmem:[#allocation5 + $0x4e0] sm:$0xff]
    %v236 = vld [vmem:[#allocation5 + $0x4e8] sm:$0xff]
    %v237 = vld [vmem:[#allocation5 + $0x4f0] sm:$0xff]
    %v238 = vld [vmem:[#allocation5 + $0x4f8] sm:$0xff]
    %v239 = vld [vmem:[#allocation5 + $0x500] sm:$0xff]
    %v240 = vld [vmem:[#allocation5 + $0x508] sm:$0xff]
    %v241 = vld [vmem:[#allocation5 + $0x510] sm:$0xff]
    %v242 = vld [vmem:[#allocation5 + $0x518] sm:$0xff]
    %v243 = vld [vmem:[#allocation5 + $0x520] sm:$0xff]
    %v244 = vld [vmem:[#allocation5 + $0x528] sm:$0xff]
    %v245 = vld [vmem:[#allocation5 + $0x530] sm:$0xff]
    %v246 = vld [vmem:[#allocation5 + $0x538] sm:$0xff]
    %v247 = vld [vmem:[#allocation5 + $0x540] sm:$0xff]
    %v248 = vld [vmem:[#allocation5 + $0x548] sm:$0xff]
    %v249 = vld [vmem:[#allocation5 + $0x550] sm:$0xff]
    %v250 = vld [vmem:[#allocation5 + $0x558] sm:$0xff]
    %v251 = vld [vmem:[#allocation5 + $0x560] sm:$0xff]
    %v252 = vld [vmem:[#allocation5 + $0x568] sm:$0xff]
    %v253 = vld [vmem:[#allocation5 + $0x570] sm:$0xff]
    %v254 = vld [vmem:[#allocation5 + $0x578] sm:$0xff]
    %v255 = vld [vmem:[#allocation5 + $0x580] sm:$0xff]
    %v256 = vld [vmem:[#allocation5 + $0x588] sm:$0xff]
    %v257 = vld [vmem:[#allocation5 + $0x590] sm:$0xff]
    %v258 = vld [vmem:[#allocation5 + $0x598] sm:$0xff]
    %v259 = vld [vmem:[#allocation5 + $0x5a0] sm:$0xff]
    %v260 = vld [vmem:[#allocation5 + $0x5a8] sm:$0xff]
    %v261 = vld [vmem:[#allocation5 + $0x5b0] sm:$0xff]
    %v262 = vld [vmem:[#allocation5 + $0x5b8] sm:$0xff]
    %v263 = vld [vmem:[#allocation5 + $0x5c0] sm:$0xff]
    %v264 = vld [vmem:[#allocation5 + $0x5c8] sm:$0xff]
    %v265 = vld [vmem:[#allocation5 + $0x5d0] sm:$0xff]
    %v266 = vld [vmem:[#allocation5 + $0x5d8] sm:$0xff]
    %v267 = vld [vmem:[#allocation5 + $0x5e0] sm:$0xff]
    %v268 = vld [vmem:[#allocation5 + $0x5e8] sm:$0xff]
    %v269 = vld [vmem:[#allocation5 + $0x5f0] sm:$0xff]
    %v270 = vld [vmem:[#allocation5 + $0x5f8] sm:$0xff]
    %v271 = vld [vmem:[#allocation5 + $0x600] sm:$0xff]
    %v272 = vld [vmem:[#allocation5 + $0x608] sm:$0xff]
    %v273 = vld [vmem:[#allocation5 + $0x610] sm:$0xff]
    %v274 = vld [vmem:[#allocation5 + $0x618] sm:$0xff]
    %v275 = vld [vmem:[#allocation5 + $0x620] sm:$0xff]
    %v276 = vld [vmem:[#allocation5 + $0x628] sm:$0xff]
    %v277 = vld [vmem:[#allocation5 + $0x630] sm:$0xff]
    %v278 = vld [vmem:[#allocation5 + $0x638] sm:$0xff]
    %v279 = vld [vmem:[#allocation5 + $0x640] sm:$0xff]
    %v280 = vld [vmem:[#allocation5 + $0x648] sm:$0xff]
    %v281 = vld [vmem:[#allocation5 + $0x650] sm:$0xff]
    %v282 = vld [vmem:[#allocation5 + $0x658] sm:$0xff]
    %v283 = vld [vmem:[#allocation5 + $0x660] sm:$0xff]
    %v284 = vld [vmem:[#allocation5 + $0x668] sm:$0xff]
    %v285 = vld [vmem:[#allocation5 + $0x670] sm:$0xff]
    %v286 = vld [vmem:[#allocation5 + $0x678] sm:$0xff]
    %v287 = vld [vmem:[#allocation5 + $0x680] sm:$0xff]
    %v288 = vld [vmem:[#allocation5 + $0x688] sm:$0xff]
    %v289 = vld [vmem:[#allocation5 + $0x690] sm:$0xff]
    %v290 = vld [vmem:[#allocation5 + $0x698] sm:$0xff]
    %v291 = vld [vmem:[#allocation5 + $0x6a0] sm:$0xff]
    %v292 = vld [vmem:[#allocation5 + $0x6a8] sm:$0xff]
    %v293 = vld [vmem:[#allocation5 + $0x6b0] sm:$0xff]
    %v294 = vld [vmem:[#allocation5 + $0x6b8] sm:$0xff]
    %v295 = vld [vmem:[#allocation5 + $0x6c0] sm:$0xff]
    %v296 = vld [vmem:[#allocation5 + $0x6c8] sm:$0xff]
    %v297 = vld [vmem:[#allocation5 + $0x6d0] sm:$0xff]
    %v298 = vld [vmem:[#allocation5 + $0x6d8] sm:$0xff]
    %v299 = vld [vmem:[#allocation5 + $0x6e0] sm:$0xff]
    %v300 = vld [vmem:[#allocation5 + $0x6e8] sm:$0xff]
    %v301 = vld [vmem:[#allocation5 + $0x6f0] sm:$0xff]
    %v302 = vld [vmem:[#allocation5 + $0x6f8] sm:$0xff]
    %v303 = vld [vmem:[#allocation5 + $0x700] sm:$0xff]
    %v304 = vld [vmem:[#allocation5 + $0x708] sm:$0xff]
    %v305 = vld [vmem:[#allocation5 + $0x710] sm:$0xff]
    %v306 = vld [vmem:[#allocation5 + $0x718] sm:$0xff]
    %v307 = vld [vmem:[#allocation5 + $0x720] sm:$0xff]
    %v308 = vld [vmem:[#allocation5 + $0x728] sm:$0xff]
    %v309 = vld [vmem:[#allocation5 + $0x730] sm:$0xff]
    %v310 = vld [vmem:[#allocation5 + $0x738] sm:$0xff]
    %v311 = vld [vmem:[#allocation5 + $0x740] sm:$0xff]
    %v312 = vld [vmem:[#allocation5 + $0x748] sm:$0xff]
    %v313 = vld [vmem:[#allocation5 + $0x750] sm:$0xff]
    %v314 = vld [vmem:[#allocation5 + $0x758] sm:$0xff]
    %v315 = vld [vmem:[#allocation5 + $0x760] sm:$0xff]
    %v316 = vld [vmem:[#allocation5 + $0x768] sm:$0xff]
    %v317 = vld [vmem:[#allocation5 + $0x770] sm:$0xff]
    %v318 = vld [vmem:[#allocation5 + $0x778] sm:$0xff]
    %v319 = vld [vmem:[#allocation5 + $0x780] sm:$0xff]
    %v320 = vld [vmem:[#allocation5 + $0x788] sm:$0xff]
    %v321 = vld [vmem:[#allocation5 + $0x790] sm:$0xff]
    %v322 = vld [vmem:[#allocation5 + $0x798] sm:$0xff]
    %v323 = vld [vmem:[#allocation5 + $0x7a0] sm:$0xff]
    %v324 = vld [vmem:[#allocation5 + $0x7a8] sm:$0xff]
    %v325 = vld [vmem:[#allocation5 + $0x7b0] sm:$0xff]
    %v326 = vld [vmem:[#allocation5 + $0x7b8] sm:$0xff]
    %v327 = vld [vmem:[#allocation5 + $0x7c0] sm:$0xff]
    %v328 = vld [vmem:[#allocation5 + $0x7c8] sm:$0xff]
    %v329 = vld [vmem:[#allocation5 + $0x7d0] sm:$0xff]
    %v330 = vld [vmem:[#allocation5 + $0x7d8] sm:$0xff]
    %v331 = vld [vmem:[#allocation5 + $0x7e0] sm:$0xff]
    %v332 = vld [vmem:[#allocation5 + $0x7e8] sm:$0xff]
    %v333 = vld [vmem:[#allocation5 + $0x7f0] sm:$0xff]
    %v334 = vld [vmem:[#allocation5 + $0x7f8] sm:$0xff]
    %v335 = vld [vmem:[#allocation5 + $0x800] sm:$0xff]
    %v336 = vld [vmem:[#allocation5 + $0x808] sm:$0xff]
    %v337 = vld [vmem:[#allocation5 + $0x810] sm:$0xff]
    %v338 = vld [vmem:[#allocation5 + $0x818] sm:$0xff]
    %v339 = vld [vmem:[#allocation5 + $0x820] sm:$0xff]
    %v340 = vld [vmem:[#allocation5 + $0x828] sm:$0xff]
    %v341 = vld [vmem:[#allocation5 + $0x830] sm:$0xff]
    %v342 = vld [vmem:[#allocation5 + $0x838] sm:$0xff]
    %v343 = vld [vmem:[#allocation5 + $0x840] sm:$0xff]
    %v344 = vld [vmem:[#allocation5 + $0x848] sm:$0xff]
    %v345 = vld [vmem:[#allocation5 + $0x850] sm:$0xff]
    %v346 = vld [vmem:[#allocation5 + $0x858] sm:$0xff]
    %v347 = vld [vmem:[#allocation5 + $0x860] sm:$0xff]
    %v348 = vld [vmem:[#allocation5 + $0x868] sm:$0xff]
    %v349 = vld [vmem:[#allocation5 + $0x870] sm:$0xff]
    %v350 = vld [vmem:[#allocation5 + $0x878] sm:$0xff]
    %v351 = vld [vmem:[#allocation5 + $0x880] sm:$0xff]
    %v352 = vld [vmem:[#allocation5 + $0x888] sm:$0xff]
    %v353 = vld [vmem:[#allocation5 + $0x890] sm:$0xff]
    %v354 = vld [vmem:[#allocation5 + $0x898] sm:$0xff]
    %v355 = vld [vmem:[#allocation5 + $0x8a0] sm:$0xff]
    %v356 = vld [vmem:[#allocation5 + $0x8a8] sm:$0xff]
    %v357 = vld [vmem:[#allocation5 + $0x8b0] sm:$0xff]
    %v358 = vld [vmem:[#allocation5 + $0x8b8] sm:$0xff]
    %v359 = vld [vmem:[#allocation5 + $0x8c0] sm:$0xff]
    %v360 = vld [vmem:[#allocation5 + $0x8c8] sm:$0xff]
    %v361 = vld [vmem:[#allocation5 + $0x8d0] sm:$0xff]
    %v362 = vld [vmem:[#allocation5 + $0x8d8] sm:$0xff]
    %v363 = vld [vmem:[#allocation5 + $0x8e0] sm:$0xff]
    %v364 = vld [vmem:[#allocation5 + $0x8e8] sm:$0xff]
    %v365 = vld [vmem:[#allocation5 + $0x8f0] sm:$0xff]
    %v366 = vld [vmem:[#allocation5 + $0x8f8] sm:$0xff]
    %v367 = vld [vmem:[#allocation5 + $0x900] sm:$0xff]
    %v368 = vld [vmem:[#allocation5 + $0x908] sm:$0xff]
    %v369 = vld [vmem:[#allocation5 + $0x910] sm:$0xff]
    %v370 = vld [vmem:[#allocation5 + $0x918] sm:$0xff]
    %v371 = vld [vmem:[#allocation5 + $0x920] sm:$0xff]
    %v372 = vld [vmem:[#allocation5 + $0x928] sm:$0xff]
    %v373 = vld [vmem:[#allocation5 + $0x930] sm:$0xff]
    %v374 = vld [vmem:[#allocation5 + $0x938] sm:$0xff]
    %v375 = vld [vmem:[#allocation5 + $0x940] sm:$0xff]
    %v376 = vld [vmem:[#allocation5 + $0x948] sm:$0xff]
    %v377 = vld [vmem:[#allocation5 + $0x950] sm:$0xff]
    %v378 = vld [vmem:[#allocation5 + $0x958] sm:$0xff]
    %v379 = vld [vmem:[#allocation5 + $0x960] sm:$0xff]
    %v380 = vld [vmem:[#allocation5 + $0x968] sm:$0xff]
    %v381 = vld [vmem:[#allocation5 + $0x970] sm:$0xff]
    %v382 = vld [vmem:[#allocation5 + $0x978] sm:$0xff]
    %v383 = vld [vmem:[#allocation5 + $0x980] sm:$0xff]
    %v384 = vld [vmem:[#allocation5 + $0x988] sm:$0xff]
    %v385 = vld [vmem:[#allocation5 + $0x990] sm:$0xff]
    %v386 = vld [vmem:[#allocation5 + $0x998] sm:$0xff]
    %v387 = vld [vmem:[#allocation5 + $0x9a0] sm:$0xff]
    %v388 = vld [vmem:[#allocation5 + $0x9a8] sm:$0xff]
    %v389 = vld [vmem:[#allocation5 + $0x9b0] sm:$0xff]
    %v390 = vld [vmem:[#allocation5 + $0x9b8] sm:$0xff]
    %v391 = vld [vmem:[#allocation5 + $0x9c0] sm:$0xff]
    %v392 = vld [vmem:[#allocation5 + $0x9c8] sm:$0xff]
    %v393 = vld [vmem:[#allocation5 + $0x9d0] sm:$0xff]
    %v394 = vld [vmem:[#allocation5 + $0x9d8] sm:$0xff]
    %v395 = vld [vmem:[#allocation5 + $0x9e0] sm:$0xff]
    %v396 = vld [vmem:[#allocation5 + $0x9e8] sm:$0xff]
    %v397 = vld [vmem:[#allocation5 + $0x9f0] sm:$0xff]
    %v398 = vld [vmem:[#allocation5 + $0x9f8] sm:$0xff]
    %v399 = vld [vmem:[#allocation5 + $0xa00] sm:$0xff]
    %v400 = vld [vmem:[#allocation5 + $0xa08] sm:$0xff]
    %v401 = vld [vmem:[#allocation5 + $0xa10] sm:$0xff]
    %v402 = vld [vmem:[#allocation5 + $0xa18] sm:$0xff]
    %v403 = vld [vmem:[#allocation5 + $0xa20] sm:$0xff]
    %v404 = vld [vmem:[#allocation5 + $0xa28] sm:$0xff]
    %v405 = vld [vmem:[#allocation5 + $0xa30] sm:$0xff]
    %v406 = vld [vmem:[#allocation5 + $0xa38] sm:$0xff]
    %v407 = vld [vmem:[#allocation5 + $0xa40] sm:$0xff]
    %v408 = vld [vmem:[#allocation5 + $0xa48] sm:$0xff]
    %v409 = vld [vmem:[#allocation5 + $0xa50] sm:$0xff]
    %v410 = vld [vmem:[#allocation5 + $0xa58] sm:$0xff]
    %v411 = vld [vmem:[#allocation5 + $0xa60] sm:$0xff]
    %v412 = vld [vmem:[#allocation5 + $0xa68] sm:$0xff]
    %v413 = vld [vmem:[#allocation5 + $0xa70] sm:$0xff]
    %v414 = vld [vmem:[#allocation5 + $0xa78] sm:$0xff]
    %v415 = vld [vmem:[#allocation5 + $0xa80] sm:$0xff]
    %v416 = vld [vmem:[#allocation5 + $0xa88] sm:$0xff]
    %v417 = vld [vmem:[#allocation5 + $0xa90] sm:$0xff]
    %v418 = vld [vmem:[#allocation5 + $0xa98] sm:$0xff]
    %v419 = vld [vmem:[#allocation5 + $0xaa0] sm:$0xff]
    %v420 = vld [vmem:[#allocation5 + $0xaa8] sm:$0xff]
    %v421 = vld [vmem:[#allocation5 + $0xab0] sm:$0xff]
    %v422 = vld [vmem:[#allocation5 + $0xab8] sm:$0xff]
    %v423 = vld [vmem:[#allocation5 + $0xac0] sm:$0xff]
    %v424 = vld [vmem:[#allocation5 + $0xac8] sm:$0xff]
    %v425 = vld [vmem:[#allocation5 + $0xad0] sm:$0xff]
    %v426 = vld [vmem:[#allocation5 + $0xad8] sm:$0xff]
    %v427 = vld [vmem:[#allocation5 + $0xae0] sm:$0xff]
    %v428 = vld [vmem:[#allocation5 + $0xae8] sm:$0xff]
    %v429 = vld [vmem:[#allocation5 + $0xaf0] sm:$0xff]
    %v430 = vld [vmem:[#allocation5 + $0xaf8] sm:$0xff]
    %v431 = vld [vmem:[#allocation5 + $0xb00] sm:$0xff]
    %v432 = vld [vmem:[#allocation5 + $0xb08] sm:$0xff]
    %v433 = vld [vmem:[#allocation5 + $0xb10] sm:$0xff]
    %v434 = vld [vmem:[#allocation5 + $0xb18] sm:$0xff]
    %v435 = vld [vmem:[#allocation5 + $0xb20] sm:$0xff]
    %v436 = vld [vmem:[#allocation5 + $0xb28] sm:$0xff]
    %v437 = vld [vmem:[#allocation5 + $0xb30] sm:$0xff]
    %v438 = vld [vmem:[#allocation5 + $0xb38] sm:$0xff]
    %v439 = vld [vmem:[#allocation5 + $0xb40] sm:$0xff]
    %v440 = vld [vmem:[#allocation5 + $0xb48] sm:$0xff]
    %v441 = vld [vmem:[#allocation5 + $0xb50] sm:$0xff]
    %v442 = vld [vmem:[#allocation5 + $0xb58] sm:$0xff]
    %v443 = vld [vmem:[#allocation5 + $0xb60] sm:$0xff]
    %v444 = vld [vmem:[#allocation5 + $0xb68] sm:$0xff]
    %v445 = vld [vmem:[#allocation5 + $0xb70] sm:$0xff]
    %v446 = vld [vmem:[#allocation5 + $0xb78] sm:$0xff]
    %v447 = vld [vmem:[#allocation5 + $0xb80] sm:$0xff]
    %v448 = vld [vmem:[#allocation5 + $0xb88] sm:$0xff]
    %v449 = vld [vmem:[#allocation5 + $0xb90] sm:$0xff]
    %v450 = vld [vmem:[#allocation5 + $0xb98] sm:$0xff]
    %v451 = vld [vmem:[#allocation5 + $0xba0] sm:$0xff]
    %v452 = vld [vmem:[#allocation5 + $0xba8] sm:$0xff]
    %v453 = vld [vmem:[#allocation5 + $0xbb0] sm:$0xff]
    %v454 = vld [vmem:[#allocation5 + $0xbb8] sm:$0xff]
    %v455 = vld [vmem:[#allocation5 + $0xbc0] sm:$0xff]
    %v456 = vld [vmem:[#allocation5 + $0xbc8] sm:$0xff]
    %v457 = vld [vmem:[#allocation5 + $0xbd0] sm:$0xff]
    %v458 = vld [vmem:[#allocation5 + $0xbd8] sm:$0xff]
    %v459 = vld [vmem:[#allocation5 + $0xbe0] sm:$0xff]
    %v460 = vld [vmem:[#allocation5 + $0xbe8] sm:$0xff]
    %v461 = vld [vmem:[#allocation5 + $0xbf0] sm:$0xff]
    %v462 = vld [vmem:[#allocation5 + $0xbf8] sm:$0xff]
    %v463 = vld [vmem:[#allocation5 + $0xc00] sm:$0xff]
    %v464 = vld [vmem:[#allocation5 + $0xc08] sm:$0xff]
    %v465 = vld [vmem:[#allocation5 + $0xc10] sm:$0xff]
    %v466 = vld [vmem:[#allocation5 + $0xc18] sm:$0xff]
    %v467 = vld [vmem:[#allocation5 + $0xc20] sm:$0xff]
    %v468 = vld [vmem:[#allocation5 + $0xc28] sm:$0xff]
    %v469 = vld [vmem:[#allocation5 + $0xc30] sm:$0xff]
    %v470 = vld [vmem:[#allocation5 + $0xc38] sm:$0xff]
    %v471 = vld [vmem:[#allocation5 + $0xc40] sm:$0xff]
    %v472 = vld [vmem:[#allocation5 + $0xc48] sm:$0xff]
    %v473 = vld [vmem:[#allocation5 + $0xc50] sm:$0xff]
    %v474 = vld [vmem:[#allocation5 + $0xc58] sm:$0xff]
    %v475 = vld [vmem:[#allocation5 + $0xc60] sm:$0xff]
    %v476 = vld [vmem:[#allocation5 + $0xc68] sm:$0xff]
    %v477 = vld [vmem:[#allocation5 + $0xc70] sm:$0xff]
    %v478 = vld [vmem:[#allocation5 + $0xc78] sm:$0xff]
    %v479 = vld [vmem:[#allocation5 + $0xc80] sm:$0xff]
    %v480 = vld [vmem:[#allocation5 + $0xc88] sm:$0xff]
    %v481 = vld [vmem:[#allocation5 + $0xc90] sm:$0xff]
    %v482 = vld [vmem:[#allocation5 + $0xc98] sm:$0xff]
    %v483 = vld [vmem:[#allocation5 + $0xca0] sm:$0xff]
    %v484 = vld [vmem:[#allocation5 + $0xca8] sm:$0xff]
    %v485 = vld [vmem:[#allocation5 + $0xcb0] sm:$0xff]
    %v486 = vld [vmem:[#allocation5 + $0xcb8] sm:$0xff]
    %v487 = vld [vmem:[#allocation5 + $0xcc0] sm:$0xff]
    %v488 = vld [vmem:[#allocation5 + $0xcc8] sm:$0xff]
    %v489 = vld [vmem:[#allocation5 + $0xcd0] sm:$0xff]
    %v490 = vld [vmem:[#allocation5 + $0xcd8] sm:$0xff]
    %v491 = vld [vmem:[#allocation5 + $0xce0] sm:$0xff]
    %v492 = vld [vmem:[#allocation5 + $0xce8] sm:$0xff]
    %v493 = vld [vmem:[#allocation5 + $0xcf0] sm:$0xff]
    %v494 = vld [vmem:[#allocation5 + $0xcf8] sm:$0xff]
    %v495 = vld [vmem:[#allocation5 + $0xd00] sm:$0xff]
    %v496 = vld [vmem:[#allocation5 + $0xd08] sm:$0xff]
    %v497 = vld [vmem:[#allocation5 + $0xd10] sm:$0xff]
    %v498 = vld [vmem:[#allocation5 + $0xd18] sm:$0xff]
    %v499 = vld [vmem:[#allocation5 + $0xd20] sm:$0xff]
    %v500 = vld [vmem:[#allocation5 + $0xd28] sm:$0xff]
    %v501 = vld [vmem:[#allocation5 + $0xd30] sm:$0xff]
    %v502 = vld [vmem:[#allocation5 + $0xd38] sm:$0xff]
    %v503 = vld [vmem:[#allocation5 + $0xd40] sm:$0xff]
    %v504 = vld [vmem:[#allocation5 + $0xd48] sm:$0xff]
    %v505 = vld [vmem:[#allocation5 + $0xd50] sm:$0xff]
    %v506 = vld [vmem:[#allocation5 + $0xd58] sm:$0xff]
    %v507 = vld [vmem:[#allocation5 + $0xd60] sm:$0xff]
    %v508 = vld [vmem:[#allocation5 + $0xd68] sm:$0xff]
    %v509 = vld [vmem:[#allocation5 + $0xd70] sm:$0xff]
    %v510 = vld [vmem:[#allocation5 + $0xd78] sm:$0xff]
    %v511 = vld [vmem:[#allocation5 + $0xd80] sm:$0xff]
    %v512 = vld [vmem:[#allocation5 + $0xd88] sm:$0xff]
    %v513 = vld [vmem:[#allocation5 + $0xd90] sm:$0xff]
    %v514 = vld [vmem:[#allocation5 + $0xd98] sm:$0xff]
    %v515 = vld [vmem:[#allocation5 + $0xda0] sm:$0xff]
    %v516 = vld [vmem:[#allocation5 + $0xda8] sm:$0xff]
    %v517 = vld [vmem:[#allocation5 + $0xdb0] sm:$0xff]
    %v518 = vld [vmem:[#allocation5 + $0xdb8] sm:$0xff]
    %v519 = vld [vmem:[#allocation5 + $0xdc0] sm:$0xff]
    %v520 = vld [vmem:[#allocation5 + $0xdc8] sm:$0xff]
    %v521 = vld [vmem:[#allocation5 + $0xdd0] sm:$0xff]
    %v522 = vld [vmem:[#allocation5 + $0xdd8] sm:$0xff]
    %v523 = vld [vmem:[#allocation5 + $0xde0] sm:$0xff]
    %v524 = vld [vmem:[#allocation5 + $0xde8] sm:$0xff]
    %v525 = vld [vmem:[#allocation5 + $0xdf0] sm:$0xff]
    %v526 = vld [vmem:[#allocation5 + $0xdf8] sm:$0xff]
    %v527 = vld [vmem:[#allocation5 + $0xe00] sm:$0xff]
    %v528 = vld [vmem:[#allocation5 + $0xe08] sm:$0xff]
    %v529 = vld [vmem:[#allocation5 + $0xe10] sm:$0xff]
    %v530 = vld [vmem:[#allocation5 + $0xe18] sm:$0xff]
    %v531 = vld [vmem:[#allocation5 + $0xe20] sm:$0xff]
    %v532 = vld [vmem:[#allocation5 + $0xe28] sm:$0xff]
    %v533 = vld [vmem:[#allocation5 + $0xe30] sm:$0xff]
    %v534 = vld [vmem:[#allocation5 + $0xe38] sm:$0xff]
    %v535 = vld [vmem:[#allocation5 + $0xe40] sm:$0xff]
    %v536 = vld [vmem:[#allocation5 + $0xe48] sm:$0xff]
    %v537 = vld [vmem:[#allocation5 + $0xe50] sm:$0xff]
    %v538 = vld [vmem:[#allocation5 + $0xe58] sm:$0xff]
    %v539 = vld [vmem:[#allocation5 + $0xe60] sm:$0xff]
    %v540 = vld [vmem:[#allocation5 + $0xe68] sm:$0xff]
    %v541 = vld [vmem:[#allocation5 + $0xe70] sm:$0xff]
    %v542 = vld [vmem:[#allocation5 + $0xe78] sm:$0xff]
    %v543 = vld [vmem:[#allocation5 + $0xe80] sm:$0xff]
    %v544 = vld [vmem:[#allocation5 + $0xe88] sm:$0xff]
    %v545 = vld [vmem:[#allocation5 + $0xe90] sm:$0xff]
    %v546 = vld [vmem:[#allocation5 + $0xe98] sm:$0xff]
    %v547 = vld [vmem:[#allocation5 + $0xea0] sm:$0xff]
    %v548 = vld [vmem:[#allocation5 + $0xea8] sm:$0xff]
    %v549 = vld [vmem:[#allocation5 + $0xeb0] sm:$0xff]
    %v550 = vld [vmem:[#allocation5 + $0xeb8] sm:$0xff]
    %v551 = vld [vmem:[#allocation5 + $0xec0] sm:$0xff]
    %v552 = vld [vmem:[#allocation5 + $0xec8] sm:$0xff]
    %v553 = vld [vmem:[#allocation5 + $0xed0] sm:$0xff]
    %v554 = vld [vmem:[#allocation5 + $0xed8] sm:$0xff]
    %v555 = vld [vmem:[#allocation5 + $0xee0] sm:$0xff]
    %v556 = vld [vmem:[#allocation5 + $0xee8] sm:$0xff]
    %v557 = vld [vmem:[#allocation5 + $0xef0] sm:$0xff]
    %v558 = vld [vmem:[#allocation5 + $0xef8] sm:$0xff]
    %v559 = vld [vmem:[#allocation5 + $0xf00] sm:$0xff]
    %v560 = vld [vmem:[#allocation5 + $0xf08] sm:$0xff]
    %v561 = vld [vmem:[#allocation5 + $0xf10] sm:$0xff]
    %v562 = vld [vmem:[#allocation5 + $0xf18] sm:$0xff]
    %v563 = vld [vmem:[#allocation5 + $0xf20] sm:$0xff]
    %v564 = vld [vmem:[#allocation5 + $0xf28] sm:$0xff]
    %v565 = vld [vmem:[#allocation5 + $0xf30] sm:$0xff]
    %v566 = vld [vmem:[#allocation5 + $0xf38] sm:$0xff]
    %v567 = vld [vmem:[#allocation5 + $0xf40] sm:$0xff]
    %v568 = vld [vmem:[#allocation5 + $0xf48] sm:$0xff]
    %v569 = vld [vmem:[#allocation5 + $0xf50] sm:$0xff]
    %v570 = vld [vmem:[#allocation5 + $0xf58] sm:$0xff]
    %v571 = vld [vmem:[#allocation5 + $0xf60] sm:$0xff]
    %v572 = vld [vmem:[#allocation5 + $0xf68] sm:$0xff]
    %v573 = vld [vmem:[#allocation5 + $0xf70] sm:$0xff]
    %v574 = vld [vmem:[#allocation5 + $0xf78] sm:$0xff]
    %v575 = vld [vmem:[#allocation5 + $0xf80] sm:$0xff]
    %v576 = vld [vmem:[#allocation5 + $0xf88] sm:$0xff]
    %v577 = vld [vmem:[#allocation5 + $0xf90] sm:$0xff]
    %v578 = vld [vmem:[#allocation5 + $0xf98] sm:$0xff]
    %v579 = vld [vmem:[#allocation5 + $0xfa0] sm:$0xff]
    %v580 = vld [vmem:[#allocation5 + $0xfa8] sm:$0xff]
    %v581 = vld [vmem:[#allocation5 + $0xfb0] sm:$0xff]
    %v582 = vld [vmem:[#allocation5 + $0xfb8] sm:$0xff]
    %v583 = vld [vmem:[#allocation5 + $0xfc0] sm:$0xff]
    %v584 = vld [vmem:[#allocation5 + $0xfc8] sm:$0xff]
    %v585 = vld [vmem:[#allocation5 + $0xfd0] sm:$0xff]
    %v586 = vld [vmem:[#allocation5 + $0xfd8] sm:$0xff]
    %v587 = vld [vmem:[#allocation5 + $0xfe0] sm:$0xff]
    %v588 = vld [vmem:[#allocation5 + $0xfe8] sm:$0xff]
    %v589 = vld [vmem:[#allocation5 + $0xff0] sm:$0xff]
    %v590 = vld [vmem:[#allocation5 + $0xff8] sm:$0xff]
    %v591 = vld [vmem:[#allocation5 + $0x1000] sm:$0xff]
    %v592 = vld [vmem:[#allocation5 + $0x1008] sm:$0xff]
    %v593 = vld [vmem:[#allocation5 + $0x1010] sm:$0xff]
    %v594 = vld [vmem:[#allocation5 + $0x1018] sm:$0xff]
    %v595 = vld [vmem:[#allocation5 + $0x1020] sm:$0xff]
    %v596 = vld [vmem:[#allocation5 + $0x1028] sm:$0xff]
    %v597 = vld [vmem:[#allocation5 + $0x1030] sm:$0xff]
    %v598 = vld [vmem:[#allocation5 + $0x1038] sm:$0xff]
    %v599 = vld [vmem:[#allocation5 + $0x1040] sm:$0xff]
    %v600 = vld [vmem:[#allocation5 + $0x1048] sm:$0xff]
    %v601 = vld [vmem:[#allocation5 + $0x1050] sm:$0xff]
    %v602 = vld [vmem:[#allocation5 + $0x1058] sm:$0xff]
    %v603 = vld [vmem:[#allocation5 + $0x1060] sm:$0xff]
    %v604 = vld [vmem:[#allocation5 + $0x1068] sm:$0xff]
    %v605 = vld [vmem:[#allocation5 + $0x1070] sm:$0xff]
    %v606 = vld [vmem:[#allocation5 + $0x1078] sm:$0xff]
    %v607 = vld [vmem:[#allocation5 + $0x1080] sm:$0xff]
    %v608 = vld [vmem:[#allocation5 + $0x1088] sm:$0xff]
    %v609 = vld [vmem:[#allocation5 + $0x1090] sm:$0xff]
    %v610 = vld [vmem:[#allocation5 + $0x1098] sm:$0xff]
    %v611 = vld [vmem:[#allocation5 + $0x10a0] sm:$0xff]
    %v612 = vld [vmem:[#allocation5 + $0x10a8] sm:$0xff]
    %v613 = vld [vmem:[#allocation5 + $0x10b0] sm:$0xff]
    %v614 = vld [vmem:[#allocation5 + $0x10b8] sm:$0xff]
    %v615 = vld [vmem:[#allocation5 + $0x10c0] sm:$0xff]
    %v616 = vld [vmem:[#allocation5 + $0x10c8] sm:$0xff]
    %v617 = vld [vmem:[#allocation5 + $0x10d0] sm:$0xff]
    %v618 = vld [vmem:[#allocation5 + $0x10d8] sm:$0xff]
    %v619 = vld [vmem:[#allocation5 + $0x10e0] sm:$0xff]
    %v620 = vld [vmem:[#allocation5 + $0x10e8] sm:$0xff]
    %v621 = vld [vmem:[#allocation5 + $0x10f0] sm:$0xff]
    %v622 = vld [vmem:[#allocation5 + $0x10f8] sm:$0xff]
    %v623 = vld [vmem:[#allocation5 + $0x1100] sm:$0xff]
    %v624 = vld [vmem:[#allocation5 + $0x1108] sm:$0xff]
    %v625 = vld [vmem:[#allocation5 + $0x1110] sm:$0xff]
    %v626 = vld [vmem:[#allocation5 + $0x1118] sm:$0xff]
    %v627 = vld [vmem:[#allocation5 + $0x1120] sm:$0xff]
    %v628 = vld [vmem:[#allocation5 + $0x1128] sm:$0xff]
    %v629 = vld [vmem:[#allocation5 + $0x1130] sm:$0xff]
    %v630 = vld [vmem:[#allocation5 + $0x1138] sm:$0xff]
    %v631 = vld [vmem:[#allocation5 + $0x1140] sm:$0xff]
    %v632 = vld [vmem:[#allocation5 + $0x1148] sm:$0xff]
    %v633 = vld [vmem:[#allocation5 + $0x1150] sm:$0xff]
    %v634 = vld [vmem:[#allocation5 + $0x1158] sm:$0xff]
    %v635 = vld [vmem:[#allocation5 + $0x1160] sm:$0xff]
    %v636 = vld [vmem:[#allocation5 + $0x1168] sm:$0xff]
    %v637 = vld [vmem:[#allocation5 + $0x1170] sm:$0xff]
    %v638 = vld [vmem:[#allocation5 + $0x1178] sm:$0xff]
    %v639 = vld [vmem:[#allocation5 + $0x1180] sm:$0xff]
    %v640 = vld [vmem:[#allocation5 + $0x1188] sm:$0xff]
    %v641 = vld [vmem:[#allocation5 + $0x1190] sm:$0xff]
    %v642 = vld [vmem:[#allocation5 + $0x1198] sm:$0xff]
    %v643 = vld [vmem:[#allocation5 + $0x11a0] sm:$0xff]
    %v644 = vld [vmem:[#allocation5 + $0x11a8] sm:$0xff]
    %v645 = vld [vmem:[#allocation5 + $0x11b0] sm:$0xff]
    %v646 = vld [vmem:[#allocation5 + $0x11b8] sm:$0xff]
    %v647 = vld [vmem:[#allocation5 + $0x11c0] sm:$0xff]
    %v648 = vld [vmem:[#allocation5 + $0x11c8] sm:$0xff]
    %v649 = vld [vmem:[#allocation5 + $0x11d0] sm:$0xff]
    %v650 = vld [vmem:[#allocation5 + $0x11d8] sm:$0xff]
    %v651 = vld [vmem:[#allocation5 + $0x11e0] sm:$0xff]
    %v652 = vld [vmem:[#allocation5 + $0x11e8] sm:$0xff]
    %v653 = vld [vmem:[#allocation5 + $0x11f0] sm:$0xff]
    %v654 = vld [vmem:[#allocation5 + $0x11f8] sm:$0xff]
    %v655 = vld [vmem:[#allocation5 + $0x1200] sm:$0xff]
    %v656 = vld [vmem:[#allocation5 + $0x1208] sm:$0xff]
    %v657 = vld [vmem:[#allocation5 + $0x1210] sm:$0xff]
    %v658 = vld [vmem:[#allocation5 + $0x1218] sm:$0xff]
    %v659 = vld [vmem:[#allocation5 + $0x1220] sm:$0xff]
    %v660 = vld [vmem:[#allocation5 + $0x1228] sm:$0xff]
    %v661 = vld [vmem:[#allocation5 + $0x1230] sm:$0xff]
    %v662 = vld [vmem:[#allocation5 + $0x1238] sm:$0xff]
    %v663 = vld [vmem:[#allocation5 + $0x1240] sm:$0xff]
    %v664 = vld [vmem:[#allocation5 + $0x1248] sm:$0xff]
    %v665 = vld [vmem:[#allocation5 + $0x1250] sm:$0xff]
    %v666 = vld [vmem:[#allocation5 + $0x1258] sm:$0xff]
    %v667 = vld [vmem:[#allocation5 + $0x1260] sm:$0xff]
    %v668 = vld [vmem:[#allocation5 + $0x1268] sm:$0xff]
    %v669 = vld [vmem:[#allocation5 + $0x1270] sm:$0xff]
    %v670 = vld [vmem:[#allocation5 + $0x1278] sm:$0xff]
    %v671 = vld [vmem:[#allocation5 + $0x1280] sm:$0xff]
    %v672 = vld [vmem:[#allocation5 + $0x1288] sm:$0xff]
    %v673 = vld [vmem:[#allocation5 + $0x1290] sm:$0xff]
    %v674 = vld [vmem:[#allocation5 + $0x1298] sm:$0xff]
    %v675 = vld [vmem:[#allocation5 + $0x12a0] sm:$0xff]
    %v676 = vld [vmem:[#allocation5 + $0x12a8] sm:$0xff]
    %v677 = vld [vmem:[#allocation5 + $0x12b0] sm:$0xff]
    %v678 = vld [vmem:[#allocation5 + $0x12b8] sm:$0xff]
    %v679 = vld [vmem:[#allocation5 + $0x12c0] sm:$0xff]
    %v680 = vld [vmem:[#allocation5 + $0x12c8] sm:$0xff]
    %v681 = vld [vmem:[#allocation5 + $0x12d0] sm:$0xff]
    %v682 = vld [vmem:[#allocation5 + $0x12d8] sm:$0xff]
    %v683 = vld [vmem:[#allocation5 + $0x12e0] sm:$0xff]
    %v684 = vld [vmem:[#allocation5 + $0x12e8] sm:$0xff]
    %v685 = vld [vmem:[#allocation5 + $0x12f0] sm:$0xff]
    %v686 = vld [vmem:[#allocation5 + $0x12f8] sm:$0xff]
    %v687 = vld [vmem:[#allocation5 + $0x1300] sm:$0xff]
    %v688 = vld [vmem:[#allocation5 + $0x1308] sm:$0xff]
    %v689 = vld [vmem:[#allocation5 + $0x1310] sm:$0xff]
    %v690 = vld [vmem:[#allocation5 + $0x1318] sm:$0xff]
    %v691 = vld [vmem:[#allocation5 + $0x1320] sm:$0xff]
    %v692 = vld [vmem:[#allocation5 + $0x1328] sm:$0xff]
    %v693 = vld [vmem:[#allocation5 + $0x1330] sm:$0xff]
    %v694 = vld [vmem:[#allocation5 + $0x1338] sm:$0xff]
    %v695 = vld [vmem:[#allocation5 + $0x1340] sm:$0xff]
    %v696 = vld [vmem:[#allocation5 + $0x1348] sm:$0xff]
    %v697 = vld [vmem:[#allocation5 + $0x1350] sm:$0xff]
    %v698 = vld [vmem:[#allocation5 + $0x1358] sm:$0xff]
    %v699 = vld [vmem:[#allocation5 + $0x1360] sm:$0xff]
    %v700 = vld [vmem:[#allocation5 + $0x1368] sm:$0xff]
    %v701 = vld [vmem:[#allocation5 + $0x1370] sm:$0xff]
    %v702 = vld [vmem:[#allocation5 + $0x1378] sm:$0xff]
    %v703 = vld [vmem:[#allocation5 + $0x1380] sm:$0xff]
    %v704 = vld [vmem:[#allocation5 + $0x1388] sm:$0xff]
    %v705 = vld [vmem:[#allocation5 + $0x1390] sm:$0xff]
    %v706 = vld [vmem:[#allocation5 + $0x1398] sm:$0xff]
    %v707 = vld [vmem:[#allocation5 + $0x13a0] sm:$0xff]
    %v708 = vld [vmem:[#allocation5 + $0x13a8] sm:$0xff]
    %v709 = vld [vmem:[#allocation5 + $0x13b0] sm:$0xff]
    %v710 = vld [vmem:[#allocation5 + $0x13b8] sm:$0xff]
    %v711 = vld [vmem:[#allocation5 + $0x13c0] sm:$0xff]
    %v712 = vld [vmem:[#allocation5 + $0x13c8] sm:$0xff]
    %v713 = vld [vmem:[#allocation5 + $0x13d0] sm:$0xff]
    %v714 = vld [vmem:[#allocation5 + $0x13d8] sm:$0xff]
    %v715 = vld [vmem:[#allocation5 + $0x13e0] sm:$0xff]
    %v716 = vld [vmem:[#allocation5 + $0x13e8] sm:$0xff]
    %v717 = vld [vmem:[#allocation5 + $0x13f0] sm:$0xff]
    %v718 = vld [vmem:[#allocation5 + $0x13f8] sm:$0xff]
    %v719 = vld [vmem:[#allocation5 + $0x1400] sm:$0xff]
    %v720 = vld [vmem:[#allocation5 + $0x1408] sm:$0xff]
    %v721 = vld [vmem:[#allocation5 + $0x1410] sm:$0xff]
    %v722 = vld [vmem:[#allocation5 + $0x1418] sm:$0xff]
    %v723 = vld [vmem:[#allocation5 + $0x1420] sm:$0xff]
    %v724 = vld [vmem:[#allocation5 + $0x1428] sm:$0xff]
    %v725 = vld [vmem:[#allocation5 + $0x1430] sm:$0xff]
    %v726 = vld [vmem:[#allocation5 + $0x1438] sm:$0xff]
    %v727 = vld [vmem:[#allocation5 + $0x1440] sm:$0xff]
    %v728 = vld [vmem:[#allocation5 + $0x1448] sm:$0xff]
    %v729 = vld [vmem:[#allocation5 + $0x1450] sm:$0xff]
    %v730 = vld [vmem:[#allocation5 + $0x1458] sm:$0xff]
    %v731 = vld [vmem:[#allocation5 + $0x1460] sm:$0xff]
    %v732 = vld [vmem:[#allocation5 + $0x1468] sm:$0xff]
    %v733 = vld [vmem:[#allocation5 + $0x1470] sm:$0xff]
    %v734 = vld [vmem:[#allocation5 + $0x1478] sm:$0xff]
    %v735 = vld [vmem:[#allocation5 + $0x1480] sm:$0xff]
    %v736 = vld [vmem:[#allocation5 + $0x1488] sm:$0xff]
    %v737 = vld [vmem:[#allocation5 + $0x1490] sm:$0xff]
    %v738 = vld [vmem:[#allocation5 + $0x1498] sm:$0xff]
    %v739 = vld [vmem:[#allocation5 + $0x14a0] sm:$0xff]
    %v740 = vld [vmem:[#allocation5 + $0x14a8] sm:$0xff]
    %v741 = vld [vmem:[#allocation5 + $0x14b0] sm:$0xff]
    %v742 = vld [vmem:[#allocation5 + $0x14b8] sm:$0xff]
    %v743 = vld [vmem:[#allocation5 + $0x14c0] sm:$0xff]
    %v744 = vld [vmem:[#allocation5 + $0x14c8] sm:$0xff]
    %v745 = vld [vmem:[#allocation5 + $0x14d0] sm:$0xff]
    %v746 = vld [vmem:[#allocation5 + $0x14d8] sm:$0xff]
    %v747 = vld [vmem:[#allocation5 + $0x14e0] sm:$0xff]
    %v748 = vld [vmem:[#allocation5 + $0x14e8] sm:$0xff]
    %v749 = vld [vmem:[#allocation5 + $0x14f0] sm:$0xff]
    %v750 = vld [vmem:[#allocation5 + $0x14f8] sm:$0xff]
    %v751 = vld [vmem:[#allocation5 + $0x1500] sm:$0xff]
    %v752 = vld [vmem:[#allocation5 + $0x1508] sm:$0xff]
    %v753 = vld [vmem:[#allocation5 + $0x1510] sm:$0xff]
    %v754 = vld [vmem:[#allocation5 + $0x1518] sm:$0xff]
    %v755 = vld [vmem:[#allocation5 + $0x1520] sm:$0xff]
    %v756 = vld [vmem:[#allocation5 + $0x1528] sm:$0xff]
    %v757 = vld [vmem:[#allocation5 + $0x1530] sm:$0xff]
    %v758 = vld [vmem:[#allocation5 + $0x1538] sm:$0xff]
    %v759 = vld [vmem:[#allocation5 + $0x1540] sm:$0xff]
    %v760 = vld [vmem:[#allocation5 + $0x1548] sm:$0xff]
    %v761 = vld [vmem:[#allocation5 + $0x1550] sm:$0xff]
    %v762 = vld [vmem:[#allocation5 + $0x1558] sm:$0xff]
    %v763 = vld [vmem:[#allocation5 + $0x1560] sm:$0xff]
    %v764 = vld [vmem:[#allocation5 + $0x1568] sm:$0xff]
    %v765 = vld [vmem:[#allocation5 + $0x1570] sm:$0xff]
    %v766 = vld [vmem:[#allocation5 + $0x1578] sm:$0xff]
    %v767 = vld [vmem:[#allocation5 + $0x1580] sm:$0xff]
    %v768 = vld [vmem:[#allocation5 + $0x1588] sm:$0xff]
    %v769 = vld [vmem:[#allocation5 + $0x1590] sm:$0xff]
    %v770 = vld [vmem:[#allocation5 + $0x1598] sm:$0xff]
    %v771 = vld [vmem:[#allocation5 + $0x15a0] sm:$0xff]
    %v772 = vld [vmem:[#allocation5 + $0x15a8] sm:$0xff]
    %v773 = vld [vmem:[#allocation5 + $0x15b0] sm:$0xff]
    %v774 = vld [vmem:[#allocation5 + $0x15b8] sm:$0xff]
    %v775 = vld [vmem:[#allocation5 + $0x15c0] sm:$0xff]
    %v776 = vld [vmem:[#allocation5 + $0x15c8] sm:$0xff]
    %v777 = vld [vmem:[#allocation5 + $0x15d0] sm:$0xff]
    %v778 = vld [vmem:[#allocation5 + $0x15d8] sm:$0xff]
    %v779 = vld [vmem:[#allocation5 + $0x15e0] sm:$0xff]
    %v780 = vld [vmem:[#allocation5 + $0x15e8] sm:$0xff]
    %v781 = vld [vmem:[#allocation5 + $0x15f0] sm:$0xff]
    %v782 = vld [vmem:[#allocation5 + $0x15f8] sm:$0xff]
    %v783 = vld [vmem:[#allocation5 + $0x1600] sm:$0xff]
    %v784 = vld [vmem:[#allocation5 + $0x1608] sm:$0xff]
    %v785 = vld [vmem:[#allocation5 + $0x1610] sm:$0xff]
    %v786 = vld [vmem:[#allocation5 + $0x1618] sm:$0xff]
    %v787 = vld [vmem:[#allocation5 + $0x1620] sm:$0xff]
    %v788 = vld [vmem:[#allocation5 + $0x1628] sm:$0xff]
    %v789 = vld [vmem:[#allocation5 + $0x1630] sm:$0xff]
    %v790 = vld [vmem:[#allocation5 + $0x1638] sm:$0xff]
    %v791 = vld [vmem:[#allocation5 + $0x1640] sm:$0xff]
    %v792 = vld [vmem:[#allocation5 + $0x1648] sm:$0xff]
    %v793 = vld [vmem:[#allocation5 + $0x1650] sm:$0xff]
    %v794 = vld [vmem:[#allocation5 + $0x1658] sm:$0xff]
    %v795 = vld [vmem:[#allocation5 + $0x1660] sm:$0xff]
    %v796 = vld [vmem:[#allocation5 + $0x1668] sm:$0xff]
    %v797 = vld [vmem:[#allocation5 + $0x1670] sm:$0xff]
    %v798 = vld [vmem:[#allocation5 + $0x1678] sm:$0xff]
    %v799 = vld [vmem:[#allocation5 + $0x1680] sm:$0xff]
    %v800 = vld [vmem:[#allocation5 + $0x1688] sm:$0xff]
    %v801 = vld [vmem:[#allocation5 + $0x1690] sm:$0xff]
    %v802 = vld [vmem:[#allocation5 + $0x1698] sm:$0xff]
    %v803 = vld [vmem:[#allocation5 + $0x16a0] sm:$0xff]
    %v804 = vld [vmem:[#allocation5 + $0x16a8] sm:$0xff]
    %v805 = vld [vmem:[#allocation5 + $0x16b0] sm:$0xff]
    %v806 = vld [vmem:[#allocation5 + $0x16b8] sm:$0xff]
    %v807 = vld [vmem:[#allocation5 + $0x16c0] sm:$0xff]
    %v808 = vld [vmem:[#allocation5 + $0x16c8] sm:$0xff]
    %v809 = vld [vmem:[#allocation5 + $0x16d0] sm:$0xff]
    %v810 = vld [vmem:[#allocation5 + $0x16d8] sm:$0xff]
    %v811 = vld [vmem:[#allocation5 + $0x16e0] sm:$0xff]
    %v812 = vld [vmem:[#allocation5 + $0x16e8] sm:$0xff]
    %v813 = vld [vmem:[#allocation5 + $0x16f0] sm:$0xff]
    %v814 = vld [vmem:[#allocation5 + $0x16f8] sm:$0xff]
    %v815 = vld [vmem:[#allocation5 + $0x1700] sm:$0xff]
    %v816 = vld [vmem:[#allocation5 + $0x1708] sm:$0xff]
    %v817 = vld [vmem:[#allocation5 + $0x1710] sm:$0xff]
    %v818 = vld [vmem:[#allocation5 + $0x1718] sm:$0xff]
    %v819 = vld [vmem:[#allocation5 + $0x1720] sm:$0xff]
    %v820 = vld [vmem:[#allocation5 + $0x1728] sm:$0xff]
    %v821 = vld [vmem:[#allocation5 + $0x1730] sm:$0xff]
    %v822 = vld [vmem:[#allocation5 + $0x1738] sm:$0xff]
    %v823 = vld [vmem:[#allocation5 + $0x1740] sm:$0xff]
    %v824 = vld [vmem:[#allocation5 + $0x1748] sm:$0xff]
    %v825 = vld [vmem:[#allocation5 + $0x1750] sm:$0xff]
    %v826 = vld [vmem:[#allocation5 + $0x1758] sm:$0xff]
    %v827 = vld [vmem:[#allocation5 + $0x1760] sm:$0xff]
    %v828 = vld [vmem:[#allocation5 + $0x1768] sm:$0xff]
    %v829 = vld [vmem:[#allocation5 + $0x1770] sm:$0xff]
    %v830 = vld [vmem:[#allocation5 + $0x1778] sm:$0xff]
    %v831 = vld [vmem:[#allocation5 + $0x1780] sm:$0xff]
    %v832 = vld [vmem:[#allocation5 + $0x1788] sm:$0xff]
    %v833 = vld [vmem:[#allocation5 + $0x1790] sm:$0xff]
    %v834 = vld [vmem:[#allocation5 + $0x1798] sm:$0xff]
    %v835 = vld [vmem:[#allocation5 + $0x17a0] sm:$0xff]
    %v836 = vld [vmem:[#allocation5 + $0x17a8] sm:$0xff]
    %v837 = vld [vmem:[#allocation5 + $0x17b0] sm:$0xff]
    %v838 = vld [vmem:[#allocation5 + $0x17b8] sm:$0xff]
    %v839 = vld [vmem:[#allocation5 + $0x17c0] sm:$0xff]
    %v840 = vld [vmem:[#allocation5 + $0x17c8] sm:$0xff]
    %v841 = vld [vmem:[#allocation5 + $0x17d0] sm:$0xff]
    %v842 = vld [vmem:[#allocation5 + $0x17d8] sm:$0xff]
    %v843 = vld [vmem:[#allocation5 + $0x17e0] sm:$0xff]
    %v844 = vld [vmem:[#allocation5 + $0x17e8] sm:$0xff]
    %v845 = vld [vmem:[#allocation5 + $0x17f0] sm:$0xff]
    %v846 = vld [vmem:[#allocation5 + $0x17f8] sm:$0xff]
    %v847 = vld [vmem:[#allocation5 + $0x1800] sm:$0xff]
    %v848 = vld [vmem:[#allocation5 + $0x1808] sm:$0xff]
    %v849 = vld [vmem:[#allocation5 + $0x1810] sm:$0xff]
    %v850 = vld [vmem:[#allocation5 + $0x1818] sm:$0xff]
    %v851 = vld [vmem:[#allocation5 + $0x1820] sm:$0xff]
    %v852 = vld [vmem:[#allocation5 + $0x1828] sm:$0xff]
    %v853 = vld [vmem:[#allocation5 + $0x1830] sm:$0xff]
    %v854 = vld [vmem:[#allocation5 + $0x1838] sm:$0xff]
    %v855 = vld [vmem:[#allocation5 + $0x1840] sm:$0xff]
    %v856 = vld [vmem:[#allocation5 + $0x1848] sm:$0xff]
    %v857 = vld [vmem:[#allocation5 + $0x1850] sm:$0xff]
    %v858 = vld [vmem:[#allocation5 + $0x1858] sm:$0xff]
    %v859 = vld [vmem:[#allocation5 + $0x1860] sm:$0xff]
    %v860 = vld [vmem:[#allocation5 + $0x1868] sm:$0xff]
    %v861 = vld [vmem:[#allocation5 + $0x1870] sm:$0xff]
    %v862 = vld [vmem:[#allocation5 + $0x1878] sm:$0xff]
    %v863 = vld [vmem:[#allocation5 + $0x1880] sm:$0xff]
    %v864 = vld [vmem:[#allocation5 + $0x1888] sm:$0xff]
    %v865 = vld [vmem:[#allocation5 + $0x1890] sm:$0xff]
    %v866 = vld [vmem:[#allocation5 + $0x1898] sm:$0xff]
    %v867 = vld [vmem:[#allocation5 + $0x18a0] sm:$0xff]
    %v868 = vld [vmem:[#allocation5 + $0x18a8] sm:$0xff]
    %v869 = vld [vmem:[#allocation5 + $0x18b0] sm:$0xff]
    %v870 = vld [vmem:[#allocation5 + $0x18b8] sm:$0xff]
    %v871 = vld [vmem:[#allocation5 + $0x18c0] sm:$0xff]
    %v872 = vld [vmem:[#allocation5 + $0x18c8] sm:$0xff]
    %v873 = vld [vmem:[#allocation5 + $0x18d0] sm:$0xff]
    %v874 = vld [vmem:[#allocation5 + $0x18d8] sm:$0xff]
    %v875 = vld [vmem:[#allocation5 + $0x18e0] sm:$0xff]
    %v876 = vld [vmem:[#allocation5 + $0x18e8] sm:$0xff]
    %v877 = vld [vmem:[#allocation5 + $0x18f0] sm:$0xff]
    %v878 = vld [vmem:[#allocation5 + $0x18f8] sm:$0xff]
    %v879 = vld [vmem:[#allocation5 + $0x1900] sm:$0xff]
    %v880 = vld [vmem:[#allocation5 + $0x1908] sm:$0xff]
    %v881 = vld [vmem:[#allocation5 + $0x1910] sm:$0xff]
    %v882 = vld [vmem:[#allocation5 + $0x1918] sm:$0xff]
    %v883 = vld [vmem:[#allocation5 + $0x1920] sm:$0xff]
    %v884 = vld [vmem:[#allocation5 + $0x1928] sm:$0xff]
    %v885 = vld [vmem:[#allocation5 + $0x1930] sm:$0xff]
    %v886 = vld [vmem:[#allocation5 + $0x1938] sm:$0xff]
    %v887 = vld [vmem:[#allocation5 + $0x1940] sm:$0xff]
    %v888 = vld [vmem:[#allocation5 + $0x1948] sm:$0xff]
    %v889 = vld [vmem:[#allocation5 + $0x1950] sm:$0xff]
    %v890 = vld [vmem:[#allocation5 + $0x1958] sm:$0xff]
    %v891 = vld [vmem:[#allocation5 + $0x1960] sm:$0xff]
    %v892 = vld [vmem:[#allocation5 + $0x1968] sm:$0xff]
    %v893 = vld [vmem:[#allocation5 + $0x1970] sm:$0xff]
    %v894 = vld [vmem:[#allocation5 + $0x1978] sm:$0xff]
    %v895 = vld [vmem:[#allocation5 + $0x1980] sm:$0xff]
    %v896 = vld [vmem:[#allocation5 + $0x1988] sm:$0xff]
    %v897 = vld [vmem:[#allocation5 + $0x1990] sm:$0xff]
    %v898 = vld [vmem:[#allocation5 + $0x1998] sm:$0xff]
    %v899 = vld [vmem:[#allocation5 + $0x19a0] sm:$0xff]
    %v900 = vld [vmem:[#allocation5 + $0x19a8] sm:$0xff]
    %v901 = vld [vmem:[#allocation5 + $0x19b0] sm:$0xff]
    %v902 = vld [vmem:[#allocation5 + $0x19b8] sm:$0xff]
    %v903 = vld [vmem:[#allocation5 + $0x19c0] sm:$0xff]
    %v904 = vld [vmem:[#allocation5 + $0x19c8] sm:$0xff]
    %v905 = vld [vmem:[#allocation5 + $0x19d0] sm:$0xff]
    %v906 = vld [vmem:[#allocation5 + $0x19d8] sm:$0xff]
    %v907 = vld [vmem:[#allocation5 + $0x19e0] sm:$0xff]
    %v908 = vld [vmem:[#allocation5 + $0x19e8] sm:$0xff]
    %v909 = vld [vmem:[#allocation5 + $0x19f0] sm:$0xff]
    %v910 = vld [vmem:[#allocation5 + $0x19f8] sm:$0xff]
    %v911 = vld [vmem:[#allocation5 + $0x1a00] sm:$0xff]
    %v912 = vld [vmem:[#allocation5 + $0x1a08] sm:$0xff]
    %v913 = vld [vmem:[#allocation5 + $0x1a10] sm:$0xff]
    %v914 = vld [vmem:[#allocation5 + $0x1a18] sm:$0xff]
    %v915 = vld [vmem:[#allocation5 + $0x1a20] sm:$0xff]
    %v916 = vld [vmem:[#allocation5 + $0x1a28] sm:$0xff]
    %v917 = vld [vmem:[#allocation5 + $0x1a30] sm:$0xff]
    %v918 = vld [vmem:[#allocation5 + $0x1a38] sm:$0xff]
    %v919 = vld [vmem:[#allocation5 + $0x1a40] sm:$0xff]
    %v920 = vld [vmem:[#allocation5 + $0x1a48] sm:$0xff]
    %v921 = vld [vmem:[#allocation5 + $0x1a50] sm:$0xff]
    %v922 = vld [vmem:[#allocation5 + $0x1a58] sm:$0xff]
    %v923 = vld [vmem:[#allocation5 + $0x1a60] sm:$0xff]
    %v924 = vld [vmem:[#allocation5 + $0x1a68] sm:$0xff]
    %v925 = vld [vmem:[#allocation5 + $0x1a70] sm:$0xff]
    %v926 = vld [vmem:[#allocation5 + $0x1a78] sm:$0xff]
    %v927 = vld [vmem:[#allocation5 + $0x1a80] sm:$0xff]
    %v928 = vld [vmem:[#allocation5 + $0x1a88] sm:$0xff]
    %v929 = vld [vmem:[#allocation5 + $0x1a90] sm:$0xff]
    %v930 = vld [vmem:[#allocation5 + $0x1a98] sm:$0xff]
    %v931 = vld [vmem:[#allocation5 + $0x1aa0] sm:$0xff]
    %v932 = vld [vmem:[#allocation5 + $0x1aa8] sm:$0xff]
    %v933 = vld [vmem:[#allocation5 + $0x1ab0] sm:$0xff]
    %v934 = vld [vmem:[#allocation5 + $0x1ab8] sm:$0xff]
    %v935 = vld [vmem:[#allocation5 + $0x1ac0] sm:$0xff]
    %v936 = vld [vmem:[#allocation5 + $0x1ac8] sm:$0xff]
    %v937 = vld [vmem:[#allocation5 + $0x1ad0] sm:$0xff]
    %v938 = vld [vmem:[#allocation5 + $0x1ad8] sm:$0xff]
    %v939 = vld [vmem:[#allocation5 + $0x1ae0] sm:$0xff]
    %v940 = vld [vmem:[#allocation5 + $0x1ae8] sm:$0xff]
    %v941 = vld [vmem:[#allocation5 + $0x1af0] sm:$0xff]
    %v942 = vld [vmem:[#allocation5 + $0x1af8] sm:$0xff]
    %v943 = vld [vmem:[#allocation5 + $0x1b00] sm:$0xff]
    %v944 = vld [vmem:[#allocation5 + $0x1b08] sm:$0xff]
    %v945 = vld [vmem:[#allocation5 + $0x1b10] sm:$0xff]
    %v946 = vld [vmem:[#allocation5 + $0x1b18] sm:$0xff]
    %v947 = vld [vmem:[#allocation5 + $0x1b20] sm:$0xff]
    %v948 = vld [vmem:[#allocation5 + $0x1b28] sm:$0xff]
    %v949 = vld [vmem:[#allocation5 + $0x1b30] sm:$0xff]
    %v950 = vld [vmem:[#allocation5 + $0x1b38] sm:$0xff]
    %v951 = vld [vmem:[#allocation5 + $0x1b40] sm:$0xff]
    %v952 = vld [vmem:[#allocation5 + $0x1b48] sm:$0xff]
    %v953 = vld [vmem:[#allocation5 + $0x1b50] sm:$0xff]
    %v954 = vld [vmem:[#allocation5 + $0x1b58] sm:$0xff]
    %v955 = vld [vmem:[#allocation5 + $0x1b60] sm:$0xff]
    %v956 = vld [vmem:[#allocation5 + $0x1b68] sm:$0xff]
    %v957 = vld [vmem:[#allocation5 + $0x1b70] sm:$0xff]
    %v958 = vld [vmem:[#allocation5 + $0x1b78] sm:$0xff]
    %v959 = vld [vmem:[#allocation5 + $0x1b80] sm:$0xff]
    %v960 = vld [vmem:[#allocation5 + $0x1b88] sm:$0xff]
    %v961 = vld [vmem:[#allocation5 + $0x1b90] sm:$0xff]
    %v962 = vld [vmem:[#allocation5 + $0x1b98] sm:$0xff]
    %v963 = vld [vmem:[#allocation5 + $0x1ba0] sm:$0xff]
    %v964 = vld [vmem:[#allocation5 + $0x1ba8] sm:$0xff]
    %v965 = vld [vmem:[#allocation5 + $0x1bb0] sm:$0xff]
    %v966 = vld [vmem:[#allocation5 + $0x1bb8] sm:$0xff]
    %v967 = vld [vmem:[#allocation5 + $0x1bc0] sm:$0xff]
    %v968 = vld [vmem:[#allocation5 + $0x1bc8] sm:$0xff]
    %v969 = vld [vmem:[#allocation5 + $0x1bd0] sm:$0xff]
    %v970 = vld [vmem:[#allocation5 + $0x1bd8] sm:$0xff]
    %v971 = vld [vmem:[#allocation5 + $0x1be0] sm:$0xff]
    %v972 = vld [vmem:[#allocation5 + $0x1be8] sm:$0xff]
    %v973 = vld [vmem:[#allocation5 + $0x1bf0] sm:$0xff]
    %v974 = vld [vmem:[#allocation5 + $0x1bf8] sm:$0xff]
    %v975 = vld [vmem:[#allocation5 + $0x1c00] sm:$0xff]
    %v976 = vld [vmem:[#allocation5 + $0x1c08] sm:$0xff]
    %v977 = vld [vmem:[#allocation5 + $0x1c10] sm:$0xff]
    %v978 = vld [vmem:[#allocation5 + $0x1c18] sm:$0xff]
    %v979 = vld [vmem:[#allocation5 + $0x1c20] sm:$0xff]
    %v980 = vld [vmem:[#allocation5 + $0x1c28] sm:$0xff]
    %v981 = vld [vmem:[#allocation5 + $0x1c30] sm:$0xff]
    %v982 = vld [vmem:[#allocation5 + $0x1c38] sm:$0xff]
    %v983 = vld [vmem:[#allocation5 + $0x1c40] sm:$0xff]
    %v984 = vld [vmem:[#allocation5 + $0x1c48] sm:$0xff]
    %v985 = vld [vmem:[#allocation5 + $0x1c50] sm:$0xff]
    %v986 = vld [vmem:[#allocation5 + $0x1c58] sm:$0xff]
    %v987 = vld [vmem:[#allocation5 + $0x1c60] sm:$0xff]
    %v988 = vld [vmem:[#allocation5 + $0x1c68] sm:$0xff]
    %v989 = vld [vmem:[#allocation5 + $0x1c70] sm:$0xff]
    %v990 = vld [vmem:[#allocation5 + $0x1c78] sm:$0xff]
    %v991 = vld [vmem:[#allocation5 + $0x1c80] sm:$0xff]
    %v992 = vld [vmem:[#allocation5 + $0x1c88] sm:$0xff]
    %v993 = vld [vmem:[#allocation5 + $0x1c90] sm:$0xff]
    %v994 = vld [vmem:[#allocation5 + $0x1c98] sm:$0xff]
    %v995 = vld [vmem:[#allocation5 + $0x1ca0] sm:$0xff]
    %v996 = vld [vmem:[#allocation5 + $0x1ca8] sm:$0xff]
    %v997 = vld [vmem:[#allocation5 + $0x1cb0] sm:$0xff]
    %v998 = vld [vmem:[#allocation5 + $0x1cb8] sm:$0xff]
    %v999 = vld [vmem:[#allocation5 + $0x1cc0] sm:$0xff]
    %v1000 = vld [vmem:[#allocation5 + $0x1cc8] sm:$0xff]
    %v1001 = vld [vmem:[#allocation5 + $0x1cd0] sm:$0xff]
    %v1002 = vld [vmem:[#allocation5 + $0x1cd8] sm:$0xff]
    %v1003 = vld [vmem:[#allocation5 + $0x1ce0] sm:$0xff]
    %v1004 = vld [vmem:[#allocation5 + $0x1ce8] sm:$0xff]
    %v1005 = vld [vmem:[#allocation5 + $0x1cf0] sm:$0xff]
    %v1006 = vld [vmem:[#allocation5 + $0x1cf8] sm:$0xff]
    %v1007 = vld [vmem:[#allocation5 + $0x1d00] sm:$0xff]
    %v1008 = vld [vmem:[#allocation5 + $0x1d08] sm:$0xff]
    %v1009 = vld [vmem:[#allocation5 + $0x1d10] sm:$0xff]
    %v1010 = vld [vmem:[#allocation5 + $0x1d18] sm:$0xff]
    %v1011 = vld [vmem:[#allocation5 + $0x1d20] sm:$0xff]
    %v1012 = vld [vmem:[#allocation5 + $0x1d28] sm:$0xff]
    %v1013 = vld [vmem:[#allocation5 + $0x1d30] sm:$0xff]
    %v1014 = vld [vmem:[#allocation5 + $0x1d38] sm:$0xff]
    %v1015 = vld [vmem:[#allocation5 + $0x1d40] sm:$0xff]
    %v1016 = vld [vmem:[#allocation5 + $0x1d48] sm:$0xff]
    %v1017 = vld [vmem:[#allocation5 + $0x1d50] sm:$0xff]
    %v1018 = vld [vmem:[#allocation5 + $0x1d58] sm:$0xff]
    %v1019 = vld [vmem:[#allocation5 + $0x1d60] sm:$0xff]
    %v1020 = vld [vmem:[#allocation5 + $0x1d68] sm:$0xff]
    %v1021 = vld [vmem:[#allocation5 + $0x1d70] sm:$0xff]
    %v1022 = vld [vmem:[#allocation5 + $0x1d78] sm:$0xff]
    %v1023 = vld [vmem:[#allocation5 + $0x1d80] sm:$0xff]
    %v1024 = vld [vmem:[#allocation5 + $0x1d88] sm:$0xff]
    %v1025 = vld [vmem:[#allocation5 + $0x1d90] sm:$0xff]
    %v1026 = vld [vmem:[#allocation5 + $0x1d98] sm:$0xff]
    %v1027 = vld [vmem:[#allocation5 + $0x1da0] sm:$0xff]
    %v1028 = vld [vmem:[#allocation5 + $0x1da8] sm:$0xff]
    %v1029 = vld [vmem:[#allocation5 + $0x1db0] sm:$0xff]
    %v1030 = vld [vmem:[#allocation5 + $0x1db8] sm:$0xff]
    %v1031 = vld [vmem:[#allocation5 + $0x1dc0] sm:$0xff]
    %v1032 = vld [vmem:[#allocation5 + $0x1dc8] sm:$0xff]
    %v1033 = vld [vmem:[#allocation5 + $0x1dd0] sm:$0xff]
    %v1034 = vld [vmem:[#allocation5 + $0x1dd8] sm:$0xff]
    %v1035 = vld [vmem:[#allocation5 + $0x1de0] sm:$0xff]
    %v1036 = vld [vmem:[#allocation5 + $0x1de8] sm:$0xff]
    %v1037 = vld [vmem:[#allocation5 + $0x1df0] sm:$0xff]
    %v1038 = vld [vmem:[#allocation5 + $0x1df8] sm:$0xff]
    %v1039 = vld [vmem:[#allocation5 + $0x1e00] sm:$0xff]
    %v1040 = vld [vmem:[#allocation5 + $0x1e08] sm:$0xff]
    %v1041 = vld [vmem:[#allocation5 + $0x1e10] sm:$0xff]
    %v1042 = vld [vmem:[#allocation5 + $0x1e18] sm:$0xff]
    %v1043 = vld [vmem:[#allocation5 + $0x1e20] sm:$0xff]
    %v1044 = vld [vmem:[#allocation5 + $0x1e28] sm:$0xff]
    %v1045 = vld [vmem:[#allocation5 + $0x1e30] sm:$0xff]
    %v1046 = vld [vmem:[#allocation5 + $0x1e38] sm:$0xff]
    %v1047 = vld [vmem:[#allocation5 + $0x1e40] sm:$0xff]
    %v1048 = vld [vmem:[#allocation5 + $0x1e48] sm:$0xff]
    %v1049 = vld [vmem:[#allocation5 + $0x1e50] sm:$0xff]
    %v1050 = vld [vmem:[#allocation5 + $0x1e58] sm:$0xff]
    %v1051 = vld [vmem:[#allocation5 + $0x1e60] sm:$0xff]
    %v1052 = vld [vmem:[#allocation5 + $0x1e68] sm:$0xff]
    %v1053 = vld [vmem:[#allocation5 + $0x1e70] sm:$0xff]
    %v1054 = vld [vmem:[#allocation5 + $0x1e78] sm:$0xff]
    %v1055 = vld [vmem:[#allocation5 + $0x1e80] sm:$0xff]
    %v1056 = vld [vmem:[#allocation5 + $0x1e88] sm:$0xff]
    %v1057 = vld [vmem:[#allocation5 + $0x1e90] sm:$0xff]
    %v1058 = vld [vmem:[#allocation5 + $0x1e98] sm:$0xff]
    %v1059 = vld [vmem:[#allocation5 + $0x1ea0] sm:$0xff]
    %v1060 = vld [vmem:[#allocation5 + $0x1ea8] sm:$0xff]
    %v1061 = vld [vmem:[#allocation5 + $0x1eb0] sm:$0xff]
    %v1062 = vld [vmem:[#allocation5 + $0x1eb8] sm:$0xff]
    %v1063 = vld [vmem:[#allocation5 + $0x1ec0] sm:$0xff]
    %v1064 = vld [vmem:[#allocation5 + $0x1ec8] sm:$0xff]
    %v1065 = vld [vmem:[#allocation5 + $0x1ed0] sm:$0xff]
    %v1066 = vld [vmem:[#allocation5 + $0x1ed8] sm:$0xff]
    %v1067 = vld [vmem:[#allocation5 + $0x1ee0] sm:$0xff]
    %v1068 = vld [vmem:[#allocation5 + $0x1ee8] sm:$0xff]
    %v1069 = vld [vmem:[#allocation5 + $0x1ef0] sm:$0xff]
    %v1070 = vld [vmem:[#allocation5 + $0x1ef8] sm:$0xff]
    %v1071 = vld [vmem:[#allocation5 + $0x1f00] sm:$0xff]
    %v1072 = vld [vmem:[#allocation5 + $0x1f08] sm:$0xff]
    %v1073 = vld [vmem:[#allocation5 + $0x1f10] sm:$0xff]
    %v1074 = vld [vmem:[#allocation5 + $0x1f18] sm:$0xff]
    %v1075 = vld [vmem:[#allocation5 + $0x1f20] sm:$0xff]
    %v1076 = vld [vmem:[#allocation5 + $0x1f28] sm:$0xff]
    %v1077 = vld [vmem:[#allocation5 + $0x1f30] sm:$0xff]
    %v1078 = vld [vmem:[#allocation5 + $0x1f38] sm:$0xff]
    %v1079 = vld [vmem:[#allocation5 + $0x1f40] sm:$0xff]
    %v1080 = vld [vmem:[#allocation5 + $0x1f48] sm:$0xff]
    %v1081 = vld [vmem:[#allocation5 + $0x1f50] sm:$0xff]
    %v1082 = vld [vmem:[#allocation5 + $0x1f58] sm:$0xff]
    %v1083 = vld [vmem:[#allocation5 + $0x1f60] sm:$0xff]
    %v1084 = vld [vmem:[#allocation5 + $0x1f68] sm:$0xff]
    %v1085 = vld [vmem:[#allocation5 + $0x1f70] sm:$0xff]
    %v1086 = vld [vmem:[#allocation5 + $0x1f78] sm:$0xff]
    %v1087 = vld [vmem:[#allocation5 + $0x1f80] sm:$0xff]
    %v1088 = vld [vmem:[#allocation5 + $0x1f88] sm:$0xff]
    %v1089 = vld [vmem:[#allocation5 + $0x1f90] sm:$0xff]
    %v1090 = vld [vmem:[#allocation5 + $0x1f98] sm:$0xff]
    %v1091 = vld [vmem:[#allocation5 + $0x1fa0] sm:$0xff]
    %v1092 = vld [vmem:[#allocation5 + $0x1fa8] sm:$0xff]
    %v1093 = vld [vmem:[#allocation5 + $0x1fb0] sm:$0xff]
    %v1094 = vld [vmem:[#allocation5 + $0x1fb8] sm:$0xff]
    %v1095 = vld [vmem:[#allocation5 + $0x1fc0] sm:$0xff]
    %v1096 = vld [vmem:[#allocation5 + $0x1fc8] sm:$0xff]
    %v1097 = vld [vmem:[#allocation5 + $0x1fd0] sm:$0xff]
    %v1098 = vld [vmem:[#allocation5 + $0x1fd8] sm:$0xff]
    %v1099 = vld [vmem:[#allocation5 + $0x1fe0] sm:$0xff]
    %v1100 = vld [vmem:[#allocation5 + $0x1fe8] sm:$0xff]
    %v1101 = vld [vmem:[#allocation5 + $0x1ff0] sm:$0xff]
    %v1102 = vld [vmem:[#allocation5 + $0x1ff8] sm:$0xff]
    %v1103 = vld [vmem:[#allocation7] sm:$0xff]
    %v1105 = vlaneseq
    %v1106 = vshrl.u32 %v1105, 7
    %v1107 = vsub.s32 0, %v1106
    %v1108 = vrot.slane %v1103, %v1107
    %v1109 = vlaneseq
    %v1110 = vshrl.u32 %v1109, 7
    %v1111 = vsub.s32 1, %v1110
    %v1112 = vrot.slane %v1103, %v1111
    %v1113 = vlaneseq
    %v1114 = vshrl.u32 %v1113, 7
    %v1115 = vsub.s32 2, %v1114
    %v1116 = vrot.slane %v1103, %v1115
    %v1117 = vlaneseq
    %v1118 = vshrl.u32 %v1117, 7
    %v1119 = vsub.s32 3, %v1118
    %v1120 = vrot.slane %v1103, %v1119
    %v1121 = vlaneseq
    %v1122 = vshrl.u32 %v1121, 7
    %v1123 = vsub.s32 4, %v1122
    %v1124 = vrot.slane %v1103, %v1123
    %v1125 = vlaneseq
    %v1126 = vshrl.u32 %v1125, 7
    %v1127 = vsub.s32 5, %v1126
    %v1128 = vrot.slane %v1103, %v1127
    %v1129 = vlaneseq
    %v1130 = vshrl.u32 %v1129, 7
    %v1131 = vsub.s32 6, %v1130
    %v1132 = vrot.slane %v1103, %v1131
    %v1133 = vlaneseq
    %v1134 = vshrl.u32 %v1133, 7
    %v1135 = vsub.s32 7, %v1134
    %v1136 = vrot.slane %v1103, %v1135
    %v1153 = vunpack.c.l.b16 %v71
    %v1154 = vunpack.c.h.b16 %v71
    %v1155 = vunpack.c.l.b16 %v72
    %v1156 = vunpack.c.h.b16 %v72
    %v1157 = vunpack.c.l.b16 %v73
    %v1158 = vunpack.c.h.b16 %v73
    %v1159 = vunpack.c.l.b16 %v74
    %v1160 = vunpack.c.h.b16 %v74
    %v1161 = vunpack.c.l.b16 %v75
    %v1162 = vunpack.c.h.b16 %v75
    %v1163 = vunpack.c.l.b16 %v76
    %v1164 = vunpack.c.h.b16 %v76
    %v1165 = vunpack.c.l.b16 %v77
    %v1166 = vunpack.c.h.b16 %v77
    %v1167 = vunpack.c.l.b16 %v78
    %v1168 = vunpack.c.h.b16 %v78
    %v1169 = vpack.c.b16 %v1153, %v1153
    %v1170 = vpack.c.b16 %v1154, %v1154
    %v1171 = vpack.c.b16 %v1155, %v1155
    %v1172 = vpack.c.b16 %v1156, %v1156
    %v1173 = vpack.c.b16 %v1157, %v1157
    %v1174 = vpack.c.b16 %v1158, %v1158
    %v1175 = vpack.c.b16 %v1159, %v1159
    %v1176 = vpack.c.b16 %v1160, %v1160
    %v1177 = vpack.c.b16 %v1161, %v1161
    %v1178 = vpack.c.b16 %v1162, %v1162
    %v1179 = vpack.c.b16 %v1163, %v1163
    %v1180 = vpack.c.b16 %v1164, %v1164
    %v1181 = vpack.c.b16 %v1165, %v1165
    %v1182 = vpack.c.b16 %v1166, %v1166
    %v1183 = vpack.c.b16 %v1167, %v1167
    %v1184 = vpack.c.b16 %v1168, %v1168
    %v2225 = vunpack.c.l.b16 %v79
    %v2226 = vunpack.c.h.b16 %v79
    %v2227 = vunpack.c.l.b16 %v80
    %v2228 = vunpack.c.h.b16 %v80
    %v2229 = vunpack.c.l.b16 %v81
    %v2230 = vunpack.c.h.b16 %v81
    %v2231 = vunpack.c.l.b16 %v82
    %v2232 = vunpack.c.h.b16 %v82
    %v2233 = vunpack.c.l.b16 %v83
    %v2234 = vunpack.c.h.b16 %v83
    %v2235 = vunpack.c.l.b16 %v84
    %v2236 = vunpack.c.h.b16 %v84
    %v2237 = vunpack.c.l.b16 %v85
    %v2238 = vunpack.c.h.b16 %v85
    %v2239 = vunpack.c.l.b16 %v86
    %v2240 = vunpack.c.h.b16 %v86
    %v2241 = vunpack.c.l.b16 %v87
    %v2242 = vunpack.c.h.b16 %v87
    %v2243 = vunpack.c.l.b16 %v88
    %v2244 = vunpack.c.h.b16 %v88
    %v2245 = vunpack.c.l.b16 %v89
    %v2246 = vunpack.c.h.b16 %v89
    %v2247 = vunpack.c.l.b16 %v90
    %v2248 = vunpack.c.h.b16 %v90
    %v2249 = vunpack.c.l.b16 %v91
    %v2250 = vunpack.c.h.b16 %v91
    %v2251 = vunpack.c.l.b16 %v92
    %v2252 = vunpack.c.h.b16 %v92
    %v2253 = vunpack.c.l.b16 %v93
    %v2254 = vunpack.c.h.b16 %v93
    %v2255 = vunpack.c.l.b16 %v94
    %v2256 = vunpack.c.h.b16 %v94
    %v2257 = vunpack.c.l.b16 %v95
    %v2258 = vunpack.c.h.b16 %v95
    %v2259 = vunpack.c.l.b16 %v96
    %v2260 = vunpack.c.h.b16 %v96
    %v2261 = vunpack.c.l.b16 %v97
    %v2262 = vunpack.c.h.b16 %v97
    %v2263 = vunpack.c.l.b16 %v98
    %v2264 = vunpack.c.h.b16 %v98
    %v2265 = vunpack.c.l.b16 %v99
    %v2266 = vunpack.c.h.b16 %v99
    %v2267 = vunpack.c.l.b16 %v100
    %v2268 = vunpack.c.h.b16 %v100
    %v2269 = vunpack.c.l.b16 %v101
    %v2270 = vunpack.c.h.b16 %v101
    %v2271 = vunpack.c.l.b16 %v102
    %v2272 = vunpack.c.h.b16 %v102
    %v2273 = vunpack.c.l.b16 %v103
    %v2274 = vunpack.c.h.b16 %v103
    %v2275 = vunpack.c.l.b16 %v104
    %v2276 = vunpack.c.h.b16 %v104
    %v2277 = vunpack.c.l.b16 %v105
    %v2278 = vunpack.c.h.b16 %v105
    %v2279 = vunpack.c.l.b16 %v106
    %v2280 = vunpack.c.h.b16 %v106
    %v2281 = vunpack.c.l.b16 %v107
    %v2282 = vunpack.c.h.b16 %v107
    %v2283 = vunpack.c.l.b16 %v108
    %v2284 = vunpack.c.h.b16 %v108
    %v2285 = vunpack.c.l.b16 %v109
    %v2286 = vunpack.c.h.b16 %v109
    %v2287 = vunpack.c.l.b16 %v110
    %v2288 = vunpack.c.h.b16 %v110
    %v2289 = vunpack.c.l.b16 %v111
    %v2290 = vunpack.c.h.b16 %v111
    %v2291 = vunpack.c.l.b16 %v112
    %v2292 = vunpack.c.h.b16 %v112
    %v2293 = vunpack.c.l.b16 %v113
    %v2294 = vunpack.c.h.b16 %v113
    %v2295 = vunpack.c.l.b16 %v114
    %v2296 = vunpack.c.h.b16 %v114
    %v2297 = vunpack.c.l.b16 %v115
    %v2298 = vunpack.c.h.b16 %v115
    %v2299 = vunpack.c.l.b16 %v116
    %v2300 = vunpack.c.h.b16 %v116
    %v2301 = vunpack.c.l.b16 %v117
    %v2302 = vunpack.c.h.b16 %v117
    %v2303 = vunpack.c.l.b16 %v118
    %v2304 = vunpack.c.h.b16 %v118
    %v2305 = vunpack.c.l.b16 %v119
    %v2306 = vunpack.c.h.b16 %v119
    %v2307 = vunpack.c.l.b16 %v120
    %v2308 = vunpack.c.h.b16 %v120
    %v2309 = vunpack.c.l.b16 %v121
    %v2310 = vunpack.c.h.b16 %v121
    %v2311 = vunpack.c.l.b16 %v122
    %v2312 = vunpack.c.h.b16 %v122
    %v2313 = vunpack.c.l.b16 %v123
    %v2314 = vunpack.c.h.b16 %v123
    %v2315 = vunpack.c.l.b16 %v124
    %v2316 = vunpack.c.h.b16 %v124
    %v2317 = vunpack.c.l.b16 %v125
    %v2318 = vunpack.c.h.b16 %v125
    %v2319 = vunpack.c.l.b16 %v126
    %v2320 = vunpack.c.h.b16 %v126
    %v2321 = vunpack.c.l.b16 %v127
    %v2322 = vunpack.c.h.b16 %v127
    %v2323 = vunpack.c.l.b16 %v128
    %v2324 = vunpack.c.h.b16 %v128
    %v2325 = vunpack.c.l.b16 %v129
    %v2326 = vunpack.c.h.b16 %v129
    %v2327 = vunpack.c.l.b16 %v130
    %v2328 = vunpack.c.h.b16 %v130
    %v2329 = vunpack.c.l.b16 %v131
    %v2330 = vunpack.c.h.b16 %v131
    %v2331 = vunpack.c.l.b16 %v132
    %v2332 = vunpack.c.h.b16 %v132
    %v2333 = vunpack.c.l.b16 %v133
    %v2334 = vunpack.c.h.b16 %v133
    %v2335 = vunpack.c.l.b16 %v134
    %v2336 = vunpack.c.h.b16 %v134
    %v2337 = vunpack.c.l.b16 %v135
    %v2338 = vunpack.c.h.b16 %v135
    %v2339 = vunpack.c.l.b16 %v136
    %v2340 = vunpack.c.h.b16 %v136
    %v2341 = vunpack.c.l.b16 %v137
    %v2342 = vunpack.c.h.b16 %v137
    %v2343 = vunpack.c.l.b16 %v138
    %v2344 = vunpack.c.h.b16 %v138
    %v2345 = vunpack.c.l.b16 %v139
    %v2346 = vunpack.c.h.b16 %v139
    %v2347 = vunpack.c.l.b16 %v140
    %v2348 = vunpack.c.h.b16 %v140
    %v2349 = vunpack.c.l.b16 %v141
    %v2350 = vunpack.c.h.b16 %v141
    %v2351 = vunpack.c.l.b16 %v142
    %v2352 = vunpack.c.h.b16 %v142
    %v2353 = vunpack.c.l.b16 %v143
    %v2354 = vunpack.c.h.b16 %v143
    %v2355 = vunpack.c.l.b16 %v144
    %v2356 = vunpack.c.h.b16 %v144
    %v2357 = vunpack.c.l.b16 %v145
    %v2358 = vunpack.c.h.b16 %v145
    %v2359 = vunpack.c.l.b16 %v146
    %v2360 = vunpack.c.h.b16 %v146
    %v2361 = vunpack.c.l.b16 %v147
    %v2362 = vunpack.c.h.b16 %v147
    %v2363 = vunpack.c.l.b16 %v148
    %v2364 = vunpack.c.h.b16 %v148
    %v2365 = vunpack.c.l.b16 %v149
    %v2366 = vunpack.c.h.b16 %v149
    %v2367 = vunpack.c.l.b16 %v150
    %v2368 = vunpack.c.h.b16 %v150
    %v2369 = vunpack.c.l.b16 %v151
    %v2370 = vunpack.c.h.b16 %v151
    %v2371 = vunpack.c.l.b16 %v152
    %v2372 = vunpack.c.h.b16 %v152
    %v2373 = vunpack.c.l.b16 %v153
    %v2374 = vunpack.c.h.b16 %v153
    %v2375 = vunpack.c.l.b16 %v154
    %v2376 = vunpack.c.h.b16 %v154
    %v2377 = vunpack.c.l.b16 %v155
    %v2378 = vunpack.c.h.b16 %v155
    %v2379 = vunpack.c.l.b16 %v156
    %v2380 = vunpack.c.h.b16 %v156
    %v2381 = vunpack.c.l.b16 %v157
    %v2382 = vunpack.c.h.b16 %v157
    %v2383 = vunpack.c.l.b16 %v158
    %v2384 = vunpack.c.h.b16 %v158
    %v2385 = vunpack.c.l.b16 %v159
    %v2386 = vunpack.c.h.b16 %v159
    %v2387 = vunpack.c.l.b16 %v160
    %v2388 = vunpack.c.h.b16 %v160
    %v2389 = vunpack.c.l.b16 %v161
    %v2390 = vunpack.c.h.b16 %v161
    %v2391 = vunpack.c.l.b16 %v162
    %v2392 = vunpack.c.h.b16 %v162
    %v2393 = vunpack.c.l.b16 %v163
    %v2394 = vunpack.c.h.b16 %v163
    %v2395 = vunpack.c.l.b16 %v164
    %v2396 = vunpack.c.h.b16 %v164
    %v2397 = vunpack.c.l.b16 %v165
    %v2398 = vunpack.c.h.b16 %v165
    %v2399 = vunpack.c.l.b16 %v166
    %v2400 = vunpack.c.h.b16 %v166
    %v2401 = vunpack.c.l.b16 %v167
    %v2402 = vunpack.c.h.b16 %v167
    %v2403 = vunpack.c.l.b16 %v168
    %v2404 = vunpack.c.h.b16 %v168
    %v2405 = vunpack.c.l.b16 %v169
    %v2406 = vunpack.c.h.b16 %v169
    %v2407 = vunpack.c.l.b16 %v170
    %v2408 = vunpack.c.h.b16 %v170
    %v2409 = vunpack.c.l.b16 %v171
    %v2410 = vunpack.c.h.b16 %v171
    %v2411 = vunpack.c.l.b16 %v172
    %v2412 = vunpack.c.h.b16 %v172
    %v2413 = vunpack.c.l.b16 %v173
    %v2414 = vunpack.c.h.b16 %v173
    %v2415 = vunpack.c.l.b16 %v174
    %v2416 = vunpack.c.h.b16 %v174
    %v2417 = vunpack.c.l.b16 %v175
    %v2418 = vunpack.c.h.b16 %v175
    %v2419 = vunpack.c.l.b16 %v176
    %v2420 = vunpack.c.h.b16 %v176
    %v2421 = vunpack.c.l.b16 %v177
    %v2422 = vunpack.c.h.b16 %v177
    %v2423 = vunpack.c.l.b16 %v178
    %v2424 = vunpack.c.h.b16 %v178
    %v2425 = vunpack.c.l.b16 %v179
    %v2426 = vunpack.c.h.b16 %v179
    %v2427 = vunpack.c.l.b16 %v180
    %v2428 = vunpack.c.h.b16 %v180
    %v2429 = vunpack.c.l.b16 %v181
    %v2430 = vunpack.c.h.b16 %v181
    %v2431 = vunpack.c.l.b16 %v182
    %v2432 = vunpack.c.h.b16 %v182
    %v2433 = vunpack.c.l.b16 %v183
    %v2434 = vunpack.c.h.b16 %v183
    %v2435 = vunpack.c.l.b16 %v184
    %v2436 = vunpack.c.h.b16 %v184
    %v2437 = vunpack.c.l.b16 %v185
    %v2438 = vunpack.c.h.b16 %v185
    %v2439 = vunpack.c.l.b16 %v186
    %v2440 = vunpack.c.h.b16 %v186
    %v2441 = vunpack.c.l.b16 %v187
    %v2442 = vunpack.c.h.b16 %v187
    %v2443 = vunpack.c.l.b16 %v188
    %v2444 = vunpack.c.h.b16 %v188
    %v2445 = vunpack.c.l.b16 %v189
    %v2446 = vunpack.c.h.b16 %v189
    %v2447 = vunpack.c.l.b16 %v190
    %v2448 = vunpack.c.h.b16 %v190
    %v2449 = vunpack.c.l.b16 %v191
    %v2450 = vunpack.c.h.b16 %v191
    %v2451 = vunpack.c.l.b16 %v192
    %v2452 = vunpack.c.h.b16 %v192
    %v2453 = vunpack.c.l.b16 %v193
    %v2454 = vunpack.c.h.b16 %v193
    %v2455 = vunpack.c.l.b16 %v194
    %v2456 = vunpack.c.h.b16 %v194
    %v2457 = vunpack.c.l.b16 %v195
    %v2458 = vunpack.c.h.b16 %v195
    %v2459 = vunpack.c.l.b16 %v196
    %v2460 = vunpack.c.h.b16 %v196
    %v2461 = vunpack.c.l.b16 %v197
    %v2462 = vunpack.c.h.b16 %v197
    %v2463 = vunpack.c.l.b16 %v198
    %v2464 = vunpack.c.h.b16 %v198
    %v2465 = vunpack.c.l.b16 %v199
    %v2466 = vunpack.c.h.b16 %v199
    %v2467 = vunpack.c.l.b16 %v200
    %v2468 = vunpack.c.h.b16 %v200
    %v2469 = vunpack.c.l.b16 %v201
    %v2470 = vunpack.c.h.b16 %v201
    %v2471 = vunpack.c.l.b16 %v202
    %v2472 = vunpack.c.h.b16 %v202
    %v2473 = vunpack.c.l.b16 %v203
    %v2474 = vunpack.c.h.b16 %v203
    %v2475 = vunpack.c.l.b16 %v204
    %v2476 = vunpack.c.h.b16 %v204
    %v2477 = vunpack.c.l.b16 %v205
    %v2478 = vunpack.c.h.b16 %v205
    %v2479 = vunpack.c.l.b16 %v206
    %v2480 = vunpack.c.h.b16 %v206
    %v2481 = vunpack.c.l.b16 %v207
    %v2482 = vunpack.c.h.b16 %v207
    %v2483 = vunpack.c.l.b16 %v208
    %v2484 = vunpack.c.h.b16 %v208
    %v2485 = vunpack.c.l.b16 %v209
    %v2486 = vunpack.c.h.b16 %v209
    %v2487 = vunpack.c.l.b16 %v210
    %v2488 = vunpack.c.h.b16 %v210
    %v2489 = vunpack.c.l.b16 %v211
    %v2490 = vunpack.c.h.b16 %v211
    %v2491 = vunpack.c.l.b16 %v212
    %v2492 = vunpack.c.h.b16 %v212
    %v2493 = vunpack.c.l.b16 %v213
    %v2494 = vunpack.c.h.b16 %v213
    %v2495 = vunpack.c.l.b16 %v214
    %v2496 = vunpack.c.h.b16 %v214
    %v2497 = vunpack.c.l.b16 %v215
    %v2498 = vunpack.c.h.b16 %v215
    %v2499 = vunpack.c.l.b16 %v216
    %v2500 = vunpack.c.h.b16 %v216
    %v2501 = vunpack.c.l.b16 %v217
    %v2502 = vunpack.c.h.b16 %v217
    %v2503 = vunpack.c.l.b16 %v218
    %v2504 = vunpack.c.h.b16 %v218
    %v2505 = vunpack.c.l.b16 %v219
    %v2506 = vunpack.c.h.b16 %v219
    %v2507 = vunpack.c.l.b16 %v220
    %v2508 = vunpack.c.h.b16 %v220
    %v2509 = vunpack.c.l.b16 %v221
    %v2510 = vunpack.c.h.b16 %v221
    %v2511 = vunpack.c.l.b16 %v222
    %v2512 = vunpack.c.h.b16 %v222
    %v2513 = vunpack.c.l.b16 %v223
    %v2514 = vunpack.c.h.b16 %v223
    %v2515 = vunpack.c.l.b16 %v224
    %v2516 = vunpack.c.h.b16 %v224
    %v2517 = vunpack.c.l.b16 %v225
    %v2518 = vunpack.c.h.b16 %v225
    %v2519 = vunpack.c.l.b16 %v226
    %v2520 = vunpack.c.h.b16 %v226
    %v2521 = vunpack.c.l.b16 %v227
    %v2522 = vunpack.c.h.b16 %v227
    %v2523 = vunpack.c.l.b16 %v228
    %v2524 = vunpack.c.h.b16 %v228
    %v2525 = vunpack.c.l.b16 %v229
    %v2526 = vunpack.c.h.b16 %v229
    %v2527 = vunpack.c.l.b16 %v230
    %v2528 = vunpack.c.h.b16 %v230
    %v2529 = vunpack.c.l.b16 %v231
    %v2530 = vunpack.c.h.b16 %v231
    %v2531 = vunpack.c.l.b16 %v232
    %v2532 = vunpack.c.h.b16 %v232
    %v2533 = vunpack.c.l.b16 %v233
    %v2534 = vunpack.c.h.b16 %v233
    %v2535 = vunpack.c.l.b16 %v234
    %v2536 = vunpack.c.h.b16 %v234
    %v2537 = vunpack.c.l.b16 %v235
    %v2538 = vunpack.c.h.b16 %v235
    %v2539 = vunpack.c.l.b16 %v236
    %v2540 = vunpack.c.h.b16 %v236
    %v2541 = vunpack.c.l.b16 %v237
    %v2542 = vunpack.c.h.b16 %v237
    %v2543 = vunpack.c.l.b16 %v238
    %v2544 = vunpack.c.h.b16 %v238
    %v2545 = vunpack.c.l.b16 %v239
    %v2546 = vunpack.c.h.b16 %v239
    %v2547 = vunpack.c.l.b16 %v240
    %v2548 = vunpack.c.h.b16 %v240
    %v2549 = vunpack.c.l.b16 %v241
    %v2550 = vunpack.c.h.b16 %v241
    %v2551 = vunpack.c.l.b16 %v242
    %v2552 = vunpack.c.h.b16 %v242
    %v2553 = vunpack.c.l.b16 %v243
    %v2554 = vunpack.c.h.b16 %v243
    %v2555 = vunpack.c.l.b16 %v244
    %v2556 = vunpack.c.h.b16 %v244
    %v2557 = vunpack.c.l.b16 %v245
    %v2558 = vunpack.c.h.b16 %v245
    %v2559 = vunpack.c.l.b16 %v246
    %v2560 = vunpack.c.h.b16 %v246
    %v2561 = vunpack.c.l.b16 %v247
    %v2562 = vunpack.c.h.b16 %v247
    %v2563 = vunpack.c.l.b16 %v248
    %v2564 = vunpack.c.h.b16 %v248
    %v2565 = vunpack.c.l.b16 %v249
    %v2566 = vunpack.c.h.b16 %v249
    %v2567 = vunpack.c.l.b16 %v250
    %v2568 = vunpack.c.h.b16 %v250
    %v2569 = vunpack.c.l.b16 %v251
    %v2570 = vunpack.c.h.b16 %v251
    %v2571 = vunpack.c.l.b16 %v252
    %v2572 = vunpack.c.h.b16 %v252
    %v2573 = vunpack.c.l.b16 %v253
    %v2574 = vunpack.c.h.b16 %v253
    %v2575 = vunpack.c.l.b16 %v254
    %v2576 = vunpack.c.h.b16 %v254
    %v2577 = vunpack.c.l.b16 %v255
    %v2578 = vunpack.c.h.b16 %v255
    %v2579 = vunpack.c.l.b16 %v256
    %v2580 = vunpack.c.h.b16 %v256
    %v2581 = vunpack.c.l.b16 %v257
    %v2582 = vunpack.c.h.b16 %v257
    %v2583 = vunpack.c.l.b16 %v258
    %v2584 = vunpack.c.h.b16 %v258
    %v2585 = vunpack.c.l.b16 %v259
    %v2586 = vunpack.c.h.b16 %v259
    %v2587 = vunpack.c.l.b16 %v260
    %v2588 = vunpack.c.h.b16 %v260
    %v2589 = vunpack.c.l.b16 %v261
    %v2590 = vunpack.c.h.b16 %v261
    %v2591 = vunpack.c.l.b16 %v262
    %v2592 = vunpack.c.h.b16 %v262
    %v2593 = vunpack.c.l.b16 %v263
    %v2594 = vunpack.c.h.b16 %v263
    %v2595 = vunpack.c.l.b16 %v264
    %v2596 = vunpack.c.h.b16 %v264
    %v2597 = vunpack.c.l.b16 %v265
    %v2598 = vunpack.c.h.b16 %v265
    %v2599 = vunpack.c.l.b16 %v266
    %v2600 = vunpack.c.h.b16 %v266
    %v2601 = vunpack.c.l.b16 %v267
    %v2602 = vunpack.c.h.b16 %v267
    %v2603 = vunpack.c.l.b16 %v268
    %v2604 = vunpack.c.h.b16 %v268
    %v2605 = vunpack.c.l.b16 %v269
    %v2606 = vunpack.c.h.b16 %v269
    %v2607 = vunpack.c.l.b16 %v270
    %v2608 = vunpack.c.h.b16 %v270
    %v2609 = vunpack.c.l.b16 %v271
    %v2610 = vunpack.c.h.b16 %v271
    %v2611 = vunpack.c.l.b16 %v272
    %v2612 = vunpack.c.h.b16 %v272
    %v2613 = vunpack.c.l.b16 %v273
    %v2614 = vunpack.c.h.b16 %v273
    %v2615 = vunpack.c.l.b16 %v274
    %v2616 = vunpack.c.h.b16 %v274
    %v2617 = vunpack.c.l.b16 %v275
    %v2618 = vunpack.c.h.b16 %v275
    %v2619 = vunpack.c.l.b16 %v276
    %v2620 = vunpack.c.h.b16 %v276
    %v2621 = vunpack.c.l.b16 %v277
    %v2622 = vunpack.c.h.b16 %v277
    %v2623 = vunpack.c.l.b16 %v278
    %v2624 = vunpack.c.h.b16 %v278
    %v2625 = vunpack.c.l.b16 %v279
    %v2626 = vunpack.c.h.b16 %v279
    %v2627 = vunpack.c.l.b16 %v280
    %v2628 = vunpack.c.h.b16 %v280
    %v2629 = vunpack.c.l.b16 %v281
    %v2630 = vunpack.c.h.b16 %v281
    %v2631 = vunpack.c.l.b16 %v282
    %v2632 = vunpack.c.h.b16 %v282
    %v2633 = vunpack.c.l.b16 %v283
    %v2634 = vunpack.c.h.b16 %v283
    %v2635 = vunpack.c.l.b16 %v284
    %v2636 = vunpack.c.h.b16 %v284
    %v2637 = vunpack.c.l.b16 %v285
    %v2638 = vunpack.c.h.b16 %v285
    %v2639 = vunpack.c.l.b16 %v286
    %v2640 = vunpack.c.h.b16 %v286
    %v2641 = vunpack.c.l.b16 %v287
    %v2642 = vunpack.c.h.b16 %v287
    %v2643 = vunpack.c.l.b16 %v288
    %v2644 = vunpack.c.h.b16 %v288
    %v2645 = vunpack.c.l.b16 %v289
    %v2646 = vunpack.c.h.b16 %v289
    %v2647 = vunpack.c.l.b16 %v290
    %v2648 = vunpack.c.h.b16 %v290
    %v2649 = vunpack.c.l.b16 %v291
    %v2650 = vunpack.c.h.b16 %v291
    %v2651 = vunpack.c.l.b16 %v292
    %v2652 = vunpack.c.h.b16 %v292
    %v2653 = vunpack.c.l.b16 %v293
    %v2654 = vunpack.c.h.b16 %v293
    %v2655 = vunpack.c.l.b16 %v294
    %v2656 = vunpack.c.h.b16 %v294
    %v2657 = vunpack.c.l.b16 %v295
    %v2658 = vunpack.c.h.b16 %v295
    %v2659 = vunpack.c.l.b16 %v296
    %v2660 = vunpack.c.h.b16 %v296
    %v2661 = vunpack.c.l.b16 %v297
    %v2662 = vunpack.c.h.b16 %v297
    %v2663 = vunpack.c.l.b16 %v298
    %v2664 = vunpack.c.h.b16 %v298
    %v2665 = vunpack.c.l.b16 %v299
    %v2666 = vunpack.c.h.b16 %v299
    %v2667 = vunpack.c.l.b16 %v300
    %v2668 = vunpack.c.h.b16 %v300
    %v2669 = vunpack.c.l.b16 %v301
    %v2670 = vunpack.c.h.b16 %v301
    %v2671 = vunpack.c.l.b16 %v302
    %v2672 = vunpack.c.h.b16 %v302
    %v2673 = vunpack.c.l.b16 %v303
    %v2674 = vunpack.c.h.b16 %v303
    %v2675 = vunpack.c.l.b16 %v304
    %v2676 = vunpack.c.h.b16 %v304
    %v2677 = vunpack.c.l.b16 %v305
    %v2678 = vunpack.c.h.b16 %v305
    %v2679 = vunpack.c.l.b16 %v306
    %v2680 = vunpack.c.h.b16 %v306
    %v2681 = vunpack.c.l.b16 %v307
    %v2682 = vunpack.c.h.b16 %v307
    %v2683 = vunpack.c.l.b16 %v308
    %v2684 = vunpack.c.h.b16 %v308
    %v2685 = vunpack.c.l.b16 %v309
    %v2686 = vunpack.c.h.b16 %v309
    %v2687 = vunpack.c.l.b16 %v310
    %v2688 = vunpack.c.h.b16 %v310
    %v2689 = vunpack.c.l.b16 %v311
    %v2690 = vunpack.c.h.b16 %v311
    %v2691 = vunpack.c.l.b16 %v312
    %v2692 = vunpack.c.h.b16 %v312
    %v2693 = vunpack.c.l.b16 %v313
    %v2694 = vunpack.c.h.b16 %v313
    %v2695 = vunpack.c.l.b16 %v314
    %v2696 = vunpack.c.h.b16 %v314
    %v2697 = vunpack.c.l.b16 %v315
    %v2698 = vunpack.c.h.b16 %v315
    %v2699 = vunpack.c.l.b16 %v316
    %v2700 = vunpack.c.h.b16 %v316
    %v2701 = vunpack.c.l.b16 %v317
    %v2702 = vunpack.c.h.b16 %v317
    %v2703 = vunpack.c.l.b16 %v318
    %v2704 = vunpack.c.h.b16 %v318
    %v2705 = vunpack.c.l.b16 %v319
    %v2706 = vunpack.c.h.b16 %v319
    %v2707 = vunpack.c.l.b16 %v320
    %v2708 = vunpack.c.h.b16 %v320
    %v2709 = vunpack.c.l.b16 %v321
    %v2710 = vunpack.c.h.b16 %v321
    %v2711 = vunpack.c.l.b16 %v322
    %v2712 = vunpack.c.h.b16 %v322
    %v2713 = vunpack.c.l.b16 %v323
    %v2714 = vunpack.c.h.b16 %v323
    %v2715 = vunpack.c.l.b16 %v324
    %v2716 = vunpack.c.h.b16 %v324
    %v2717 = vunpack.c.l.b16 %v325
    %v2718 = vunpack.c.h.b16 %v325
    %v2719 = vunpack.c.l.b16 %v326
    %v2720 = vunpack.c.h.b16 %v326
    %v2721 = vunpack.c.l.b16 %v327
    %v2722 = vunpack.c.h.b16 %v327
    %v2723 = vunpack.c.l.b16 %v328
    %v2724 = vunpack.c.h.b16 %v328
    %v2725 = vunpack.c.l.b16 %v329
    %v2726 = vunpack.c.h.b16 %v329
    %v2727 = vunpack.c.l.b16 %v330
    %v2728 = vunpack.c.h.b16 %v330
    %v2729 = vunpack.c.l.b16 %v331
    %v2730 = vunpack.c.h.b16 %v331
    %v2731 = vunpack.c.l.b16 %v332
    %v2732 = vunpack.c.h.b16 %v332
    %v2733 = vunpack.c.l.b16 %v333
    %v2734 = vunpack.c.h.b16 %v333
    %v2735 = vunpack.c.l.b16 %v334
    %v2736 = vunpack.c.h.b16 %v334
    %v2737 = vunpack.c.l.b16 %v335
    %v2738 = vunpack.c.h.b16 %v335
    %v2739 = vunpack.c.l.b16 %v336
    %v2740 = vunpack.c.h.b16 %v336
    %v2741 = vunpack.c.l.b16 %v337
    %v2742 = vunpack.c.h.b16 %v337
    %v2743 = vunpack.c.l.b16 %v338
    %v2744 = vunpack.c.h.b16 %v338
    %v2745 = vunpack.c.l.b16 %v339
    %v2746 = vunpack.c.h.b16 %v339
    %v2747 = vunpack.c.l.b16 %v340
    %v2748 = vunpack.c.h.b16 %v340
    %v2749 = vunpack.c.l.b16 %v341
    %v2750 = vunpack.c.h.b16 %v341
    %v2751 = vunpack.c.l.b16 %v342
    %v2752 = vunpack.c.h.b16 %v342
    %v2753 = vunpack.c.l.b16 %v343
    %v2754 = vunpack.c.h.b16 %v343
    %v2755 = vunpack.c.l.b16 %v344
    %v2756 = vunpack.c.h.b16 %v344
    %v2757 = vunpack.c.l.b16 %v345
    %v2758 = vunpack.c.h.b16 %v345
    %v2759 = vunpack.c.l.b16 %v346
    %v2760 = vunpack.c.h.b16 %v346
    %v2761 = vunpack.c.l.b16 %v347
    %v2762 = vunpack.c.h.b16 %v347
    %v2763 = vunpack.c.l.b16 %v348
    %v2764 = vunpack.c.h.b16 %v348
    %v2765 = vunpack.c.l.b16 %v349
    %v2766 = vunpack.c.h.b16 %v349
    %v2767 = vunpack.c.l.b16 %v350
    %v2768 = vunpack.c.h.b16 %v350
    %v2769 = vunpack.c.l.b16 %v351
    %v2770 = vunpack.c.h.b16 %v351
    %v2771 = vunpack.c.l.b16 %v352
    %v2772 = vunpack.c.h.b16 %v352
    %v2773 = vunpack.c.l.b16 %v353
    %v2774 = vunpack.c.h.b16 %v353
    %v2775 = vunpack.c.l.b16 %v354
    %v2776 = vunpack.c.h.b16 %v354
    %v2777 = vunpack.c.l.b16 %v355
    %v2778 = vunpack.c.h.b16 %v355
    %v2779 = vunpack.c.l.b16 %v356
    %v2780 = vunpack.c.h.b16 %v356
    %v2781 = vunpack.c.l.b16 %v357
    %v2782 = vunpack.c.h.b16 %v357
    %v2783 = vunpack.c.l.b16 %v358
    %v2784 = vunpack.c.h.b16 %v358
    %v2785 = vunpack.c.l.b16 %v359
    %v2786 = vunpack.c.h.b16 %v359
    %v2787 = vunpack.c.l.b16 %v360
    %v2788 = vunpack.c.h.b16 %v360
    %v2789 = vunpack.c.l.b16 %v361
    %v2790 = vunpack.c.h.b16 %v361
    %v2791 = vunpack.c.l.b16 %v362
    %v2792 = vunpack.c.h.b16 %v362
    %v2793 = vunpack.c.l.b16 %v363
    %v2794 = vunpack.c.h.b16 %v363
    %v2795 = vunpack.c.l.b16 %v364
    %v2796 = vunpack.c.h.b16 %v364
    %v2797 = vunpack.c.l.b16 %v365
    %v2798 = vunpack.c.h.b16 %v365
    %v2799 = vunpack.c.l.b16 %v366
    %v2800 = vunpack.c.h.b16 %v366
    %v2801 = vunpack.c.l.b16 %v367
    %v2802 = vunpack.c.h.b16 %v367
    %v2803 = vunpack.c.l.b16 %v368
    %v2804 = vunpack.c.h.b16 %v368
    %v2805 = vunpack.c.l.b16 %v369
    %v2806 = vunpack.c.h.b16 %v369
    %v2807 = vunpack.c.l.b16 %v370
    %v2808 = vunpack.c.h.b16 %v370
    %v2809 = vunpack.c.l.b16 %v371
    %v2810 = vunpack.c.h.b16 %v371
    %v2811 = vunpack.c.l.b16 %v372
    %v2812 = vunpack.c.h.b16 %v372
    %v2813 = vunpack.c.l.b16 %v373
    %v2814 = vunpack.c.h.b16 %v373
    %v2815 = vunpack.c.l.b16 %v374
    %v2816 = vunpack.c.h.b16 %v374
    %v2817 = vunpack.c.l.b16 %v375
    %v2818 = vunpack.c.h.b16 %v375
    %v2819 = vunpack.c.l.b16 %v376
    %v2820 = vunpack.c.h.b16 %v376
    %v2821 = vunpack.c.l.b16 %v377
    %v2822 = vunpack.c.h.b16 %v377
    %v2823 = vunpack.c.l.b16 %v378
    %v2824 = vunpack.c.h.b16 %v378
    %v2825 = vunpack.c.l.b16 %v379
    %v2826 = vunpack.c.h.b16 %v379
    %v2827 = vunpack.c.l.b16 %v380
    %v2828 = vunpack.c.h.b16 %v380
    %v2829 = vunpack.c.l.b16 %v381
    %v2830 = vunpack.c.h.b16 %v381
    %v2831 = vunpack.c.l.b16 %v382
    %v2832 = vunpack.c.h.b16 %v382
    %v2833 = vunpack.c.l.b16 %v383
    %v2834 = vunpack.c.h.b16 %v383
    %v2835 = vunpack.c.l.b16 %v384
    %v2836 = vunpack.c.h.b16 %v384
    %v2837 = vunpack.c.l.b16 %v385
    %v2838 = vunpack.c.h.b16 %v385
    %v2839 = vunpack.c.l.b16 %v386
    %v2840 = vunpack.c.h.b16 %v386
    %v2841 = vunpack.c.l.b16 %v387
    %v2842 = vunpack.c.h.b16 %v387
    %v2843 = vunpack.c.l.b16 %v388
    %v2844 = vunpack.c.h.b16 %v388
    %v2845 = vunpack.c.l.b16 %v389
    %v2846 = vunpack.c.h.b16 %v389
    %v2847 = vunpack.c.l.b16 %v390
    %v2848 = vunpack.c.h.b16 %v390
    %v2849 = vunpack.c.l.b16 %v391
    %v2850 = vunpack.c.h.b16 %v391
    %v2851 = vunpack.c.l.b16 %v392
    %v2852 = vunpack.c.h.b16 %v392
    %v2853 = vunpack.c.l.b16 %v393
    %v2854 = vunpack.c.h.b16 %v393
    %v2855 = vunpack.c.l.b16 %v394
    %v2856 = vunpack.c.h.b16 %v394
    %v2857 = vunpack.c.l.b16 %v395
    %v2858 = vunpack.c.h.b16 %v395
    %v2859 = vunpack.c.l.b16 %v396
    %v2860 = vunpack.c.h.b16 %v396
    %v2861 = vunpack.c.l.b16 %v397
    %v2862 = vunpack.c.h.b16 %v397
    %v2863 = vunpack.c.l.b16 %v398
    %v2864 = vunpack.c.h.b16 %v398
    %v2865 = vunpack.c.l.b16 %v399
    %v2866 = vunpack.c.h.b16 %v399
    %v2867 = vunpack.c.l.b16 %v400
    %v2868 = vunpack.c.h.b16 %v400
    %v2869 = vunpack.c.l.b16 %v401
    %v2870 = vunpack.c.h.b16 %v401
    %v2871 = vunpack.c.l.b16 %v402
    %v2872 = vunpack.c.h.b16 %v402
    %v2873 = vunpack.c.l.b16 %v403
    %v2874 = vunpack.c.h.b16 %v403
    %v2875 = vunpack.c.l.b16 %v404
    %v2876 = vunpack.c.h.b16 %v404
    %v2877 = vunpack.c.l.b16 %v405
    %v2878 = vunpack.c.h.b16 %v405
    %v2879 = vunpack.c.l.b16 %v406
    %v2880 = vunpack.c.h.b16 %v406
    %v2881 = vunpack.c.l.b16 %v407
    %v2882 = vunpack.c.h.b16 %v407
    %v2883 = vunpack.c.l.b16 %v408
    %v2884 = vunpack.c.h.b16 %v408
    %v2885 = vunpack.c.l.b16 %v409
    %v2886 = vunpack.c.h.b16 %v409
    %v2887 = vunpack.c.l.b16 %v410
    %v2888 = vunpack.c.h.b16 %v410
    %v2889 = vunpack.c.l.b16 %v411
    %v2890 = vunpack.c.h.b16 %v411
    %v2891 = vunpack.c.l.b16 %v412
    %v2892 = vunpack.c.h.b16 %v412
    %v2893 = vunpack.c.l.b16 %v413
    %v2894 = vunpack.c.h.b16 %v413
    %v2895 = vunpack.c.l.b16 %v414
    %v2896 = vunpack.c.h.b16 %v414
    %v2897 = vunpack.c.l.b16 %v415
    %v2898 = vunpack.c.h.b16 %v415
    %v2899 = vunpack.c.l.b16 %v416
    %v2900 = vunpack.c.h.b16 %v416
    %v2901 = vunpack.c.l.b16 %v417
    %v2902 = vunpack.c.h.b16 %v417
    %v2903 = vunpack.c.l.b16 %v418
    %v2904 = vunpack.c.h.b16 %v418
    %v2905 = vunpack.c.l.b16 %v419
    %v2906 = vunpack.c.h.b16 %v419
    %v2907 = vunpack.c.l.b16 %v420
    %v2908 = vunpack.c.h.b16 %v420
    %v2909 = vunpack.c.l.b16 %v421
    %v2910 = vunpack.c.h.b16 %v421
    %v2911 = vunpack.c.l.b16 %v422
    %v2912 = vunpack.c.h.b16 %v422
    %v2913 = vunpack.c.l.b16 %v423
    %v2914 = vunpack.c.h.b16 %v423
    %v2915 = vunpack.c.l.b16 %v424
    %v2916 = vunpack.c.h.b16 %v424
    %v2917 = vunpack.c.l.b16 %v425
    %v2918 = vunpack.c.h.b16 %v425
    %v2919 = vunpack.c.l.b16 %v426
    %v2920 = vunpack.c.h.b16 %v426
    %v2921 = vunpack.c.l.b16 %v427
    %v2922 = vunpack.c.h.b16 %v427
    %v2923 = vunpack.c.l.b16 %v428
    %v2924 = vunpack.c.h.b16 %v428
    %v2925 = vunpack.c.l.b16 %v429
    %v2926 = vunpack.c.h.b16 %v429
    %v2927 = vunpack.c.l.b16 %v430
    %v2928 = vunpack.c.h.b16 %v430
    %v2929 = vunpack.c.l.b16 %v431
    %v2930 = vunpack.c.h.b16 %v431
    %v2931 = vunpack.c.l.b16 %v432
    %v2932 = vunpack.c.h.b16 %v432
    %v2933 = vunpack.c.l.b16 %v433
    %v2934 = vunpack.c.h.b16 %v433
    %v2935 = vunpack.c.l.b16 %v434
    %v2936 = vunpack.c.h.b16 %v434
    %v2937 = vunpack.c.l.b16 %v435
    %v2938 = vunpack.c.h.b16 %v435
    %v2939 = vunpack.c.l.b16 %v436
    %v2940 = vunpack.c.h.b16 %v436
    %v2941 = vunpack.c.l.b16 %v437
    %v2942 = vunpack.c.h.b16 %v437
    %v2943 = vunpack.c.l.b16 %v438
    %v2944 = vunpack.c.h.b16 %v438
    %v2945 = vunpack.c.l.b16 %v439
    %v2946 = vunpack.c.h.b16 %v439
    %v2947 = vunpack.c.l.b16 %v440
    %v2948 = vunpack.c.h.b16 %v440
    %v2949 = vunpack.c.l.b16 %v441
    %v2950 = vunpack.c.h.b16 %v441
    %v2951 = vunpack.c.l.b16 %v442
    %v2952 = vunpack.c.h.b16 %v442
    %v2953 = vunpack.c.l.b16 %v443
    %v2954 = vunpack.c.h.b16 %v443
    %v2955 = vunpack.c.l.b16 %v444
    %v2956 = vunpack.c.h.b16 %v444
    %v2957 = vunpack.c.l.b16 %v445
    %v2958 = vunpack.c.h.b16 %v445
    %v2959 = vunpack.c.l.b16 %v446
    %v2960 = vunpack.c.h.b16 %v446
    %v2961 = vunpack.c.l.b16 %v447
    %v2962 = vunpack.c.h.b16 %v447
    %v2963 = vunpack.c.l.b16 %v448
    %v2964 = vunpack.c.h.b16 %v448
    %v2965 = vunpack.c.l.b16 %v449
    %v2966 = vunpack.c.h.b16 %v449
    %v2967 = vunpack.c.l.b16 %v450
    %v2968 = vunpack.c.h.b16 %v450
    %v2969 = vunpack.c.l.b16 %v451
    %v2970 = vunpack.c.h.b16 %v451
    %v2971 = vunpack.c.l.b16 %v452
    %v2972 = vunpack.c.h.b16 %v452
    %v2973 = vunpack.c.l.b16 %v453
    %v2974 = vunpack.c.h.b16 %v453
    %v2975 = vunpack.c.l.b16 %v454
    %v2976 = vunpack.c.h.b16 %v454
    %v2977 = vunpack.c.l.b16 %v455
    %v2978 = vunpack.c.h.b16 %v455
    %v2979 = vunpack.c.l.b16 %v456
    %v2980 = vunpack.c.h.b16 %v456
    %v2981 = vunpack.c.l.b16 %v457
    %v2982 = vunpack.c.h.b16 %v457
    %v2983 = vunpack.c.l.b16 %v458
    %v2984 = vunpack.c.h.b16 %v458
    %v2985 = vunpack.c.l.b16 %v459
    %v2986 = vunpack.c.h.b16 %v459
    %v2987 = vunpack.c.l.b16 %v460
    %v2988 = vunpack.c.h.b16 %v460
    %v2989 = vunpack.c.l.b16 %v461
    %v2990 = vunpack.c.h.b16 %v461
    %v2991 = vunpack.c.l.b16 %v462
    %v2992 = vunpack.c.h.b16 %v462
    %v2993 = vunpack.c.l.b16 %v463
    %v2994 = vunpack.c.h.b16 %v463
    %v2995 = vunpack.c.l.b16 %v464
    %v2996 = vunpack.c.h.b16 %v464
    %v2997 = vunpack.c.l.b16 %v465
    %v2998 = vunpack.c.h.b16 %v465
    %v2999 = vunpack.c.l.b16 %v466
    %v3000 = vunpack.c.h.b16 %v466
    %v3001 = vunpack.c.l.b16 %v467
    %v3002 = vunpack.c.h.b16 %v467
    %v3003 = vunpack.c.l.b16 %v468
    %v3004 = vunpack.c.h.b16 %v468
    %v3005 = vunpack.c.l.b16 %v469
    %v3006 = vunpack.c.h.b16 %v469
    %v3007 = vunpack.c.l.b16 %v470
    %v3008 = vunpack.c.h.b16 %v470
    %v3009 = vunpack.c.l.b16 %v471
    %v3010 = vunpack.c.h.b16 %v471
    %v3011 = vunpack.c.l.b16 %v472
    %v3012 = vunpack.c.h.b16 %v472
    %v3013 = vunpack.c.l.b16 %v473
    %v3014 = vunpack.c.h.b16 %v473
    %v3015 = vunpack.c.l.b16 %v474
    %v3016 = vunpack.c.h.b16 %v474
    %v3017 = vunpack.c.l.b16 %v475
    %v3018 = vunpack.c.h.b16 %v475
    %v3019 = vunpack.c.l.b16 %v476
    %v3020 = vunpack.c.h.b16 %v476
    %v3021 = vunpack.c.l.b16 %v477
    %v3022 = vunpack.c.h.b16 %v477
    %v3023 = vunpack.c.l.b16 %v478
    %v3024 = vunpack.c.h.b16 %v478
    %v3025 = vunpack.c.l.b16 %v479
    %v3026 = vunpack.c.h.b16 %v479
    %v3027 = vunpack.c.l.b16 %v480
    %v3028 = vunpack.c.h.b16 %v480
    %v3029 = vunpack.c.l.b16 %v481
    %v3030 = vunpack.c.h.b16 %v481
    %v3031 = vunpack.c.l.b16 %v482
    %v3032 = vunpack.c.h.b16 %v482
    %v3033 = vunpack.c.l.b16 %v483
    %v3034 = vunpack.c.h.b16 %v483
    %v3035 = vunpack.c.l.b16 %v484
    %v3036 = vunpack.c.h.b16 %v484
    %v3037 = vunpack.c.l.b16 %v485
    %v3038 = vunpack.c.h.b16 %v485
    %v3039 = vunpack.c.l.b16 %v486
    %v3040 = vunpack.c.h.b16 %v486
    %v3041 = vunpack.c.l.b16 %v487
    %v3042 = vunpack.c.h.b16 %v487
    %v3043 = vunpack.c.l.b16 %v488
    %v3044 = vunpack.c.h.b16 %v488
    %v3045 = vunpack.c.l.b16 %v489
    %v3046 = vunpack.c.h.b16 %v489
    %v3047 = vunpack.c.l.b16 %v490
    %v3048 = vunpack.c.h.b16 %v490
    %v3049 = vunpack.c.l.b16 %v491
    %v3050 = vunpack.c.h.b16 %v491
    %v3051 = vunpack.c.l.b16 %v492
    %v3052 = vunpack.c.h.b16 %v492
    %v3053 = vunpack.c.l.b16 %v493
    %v3054 = vunpack.c.h.b16 %v493
    %v3055 = vunpack.c.l.b16 %v494
    %v3056 = vunpack.c.h.b16 %v494
    %v3057 = vunpack.c.l.b16 %v495
    %v3058 = vunpack.c.h.b16 %v495
    %v3059 = vunpack.c.l.b16 %v496
    %v3060 = vunpack.c.h.b16 %v496
    %v3061 = vunpack.c.l.b16 %v497
    %v3062 = vunpack.c.h.b16 %v497
    %v3063 = vunpack.c.l.b16 %v498
    %v3064 = vunpack.c.h.b16 %v498
    %v3065 = vunpack.c.l.b16 %v499
    %v3066 = vunpack.c.h.b16 %v499
    %v3067 = vunpack.c.l.b16 %v500
    %v3068 = vunpack.c.h.b16 %v500
    %v3069 = vunpack.c.l.b16 %v501
    %v3070 = vunpack.c.h.b16 %v501
    %v3071 = vunpack.c.l.b16 %v502
    %v3072 = vunpack.c.h.b16 %v502
    %v3073 = vunpack.c.l.b16 %v503
    %v3074 = vunpack.c.h.b16 %v503
    %v3075 = vunpack.c.l.b16 %v504
    %v3076 = vunpack.c.h.b16 %v504
    %v3077 = vunpack.c.l.b16 %v505
    %v3078 = vunpack.c.h.b16 %v505
    %v3079 = vunpack.c.l.b16 %v506
    %v3080 = vunpack.c.h.b16 %v506
    %v3081 = vunpack.c.l.b16 %v507
    %v3082 = vunpack.c.h.b16 %v507
    %v3083 = vunpack.c.l.b16 %v508
    %v3084 = vunpack.c.h.b16 %v508
    %v3085 = vunpack.c.l.b16 %v509
    %v3086 = vunpack.c.h.b16 %v509
    %v3087 = vunpack.c.l.b16 %v510
    %v3088 = vunpack.c.h.b16 %v510
    %v3089 = vunpack.c.l.b16 %v511
    %v3090 = vunpack.c.h.b16 %v511
    %v3091 = vunpack.c.l.b16 %v512
    %v3092 = vunpack.c.h.b16 %v512
    %v3093 = vunpack.c.l.b16 %v513
    %v3094 = vunpack.c.h.b16 %v513
    %v3095 = vunpack.c.l.b16 %v514
    %v3096 = vunpack.c.h.b16 %v514
    %v3097 = vunpack.c.l.b16 %v515
    %v3098 = vunpack.c.h.b16 %v515
    %v3099 = vunpack.c.l.b16 %v516
    %v3100 = vunpack.c.h.b16 %v516
    %v3101 = vunpack.c.l.b16 %v517
    %v3102 = vunpack.c.h.b16 %v517
    %v3103 = vunpack.c.l.b16 %v518
    %v3104 = vunpack.c.h.b16 %v518
    %v3105 = vunpack.c.l.b16 %v519
    %v3106 = vunpack.c.h.b16 %v519
    %v3107 = vunpack.c.l.b16 %v520
    %v3108 = vunpack.c.h.b16 %v520
    %v3109 = vunpack.c.l.b16 %v521
    %v3110 = vunpack.c.h.b16 %v521
    %v3111 = vunpack.c.l.b16 %v522
    %v3112 = vunpack.c.h.b16 %v522
    %v3113 = vunpack.c.l.b16 %v523
    %v3114 = vunpack.c.h.b16 %v523
    %v3115 = vunpack.c.l.b16 %v524
    %v3116 = vunpack.c.h.b16 %v524
    %v3117 = vunpack.c.l.b16 %v525
    %v3118 = vunpack.c.h.b16 %v525
    %v3119 = vunpack.c.l.b16 %v526
    %v3120 = vunpack.c.h.b16 %v526
    %v3121 = vunpack.c.l.b16 %v527
    %v3122 = vunpack.c.h.b16 %v527
    %v3123 = vunpack.c.l.b16 %v528
    %v3124 = vunpack.c.h.b16 %v528
    %v3125 = vunpack.c.l.b16 %v529
    %v3126 = vunpack.c.h.b16 %v529
    %v3127 = vunpack.c.l.b16 %v530
    %v3128 = vunpack.c.h.b16 %v530
    %v3129 = vunpack.c.l.b16 %v531
    %v3130 = vunpack.c.h.b16 %v531
    %v3131 = vunpack.c.l.b16 %v532
    %v3132 = vunpack.c.h.b16 %v532
    %v3133 = vunpack.c.l.b16 %v533
    %v3134 = vunpack.c.h.b16 %v533
    %v3135 = vunpack.c.l.b16 %v534
    %v3136 = vunpack.c.h.b16 %v534
    %v3137 = vunpack.c.l.b16 %v535
    %v3138 = vunpack.c.h.b16 %v535
    %v3139 = vunpack.c.l.b16 %v536
    %v3140 = vunpack.c.h.b16 %v536
    %v3141 = vunpack.c.l.b16 %v537
    %v3142 = vunpack.c.h.b16 %v537
    %v3143 = vunpack.c.l.b16 %v538
    %v3144 = vunpack.c.h.b16 %v538
    %v3145 = vunpack.c.l.b16 %v539
    %v3146 = vunpack.c.h.b16 %v539
    %v3147 = vunpack.c.l.b16 %v540
    %v3148 = vunpack.c.h.b16 %v540
    %v3149 = vunpack.c.l.b16 %v541
    %v3150 = vunpack.c.h.b16 %v541
    %v3151 = vunpack.c.l.b16 %v542
    %v3152 = vunpack.c.h.b16 %v542
    %v3153 = vunpack.c.l.b16 %v543
    %v3154 = vunpack.c.h.b16 %v543
    %v3155 = vunpack.c.l.b16 %v544
    %v3156 = vunpack.c.h.b16 %v544
    %v3157 = vunpack.c.l.b16 %v545
    %v3158 = vunpack.c.h.b16 %v545
    %v3159 = vunpack.c.l.b16 %v546
    %v3160 = vunpack.c.h.b16 %v546
    %v3161 = vunpack.c.l.b16 %v547
    %v3162 = vunpack.c.h.b16 %v547
    %v3163 = vunpack.c.l.b16 %v548
    %v3164 = vunpack.c.h.b16 %v548
    %v3165 = vunpack.c.l.b16 %v549
    %v3166 = vunpack.c.h.b16 %v549
    %v3167 = vunpack.c.l.b16 %v550
    %v3168 = vunpack.c.h.b16 %v550
    %v3169 = vunpack.c.l.b16 %v551
    %v3170 = vunpack.c.h.b16 %v551
    %v3171 = vunpack.c.l.b16 %v552
    %v3172 = vunpack.c.h.b16 %v552
    %v3173 = vunpack.c.l.b16 %v553
    %v3174 = vunpack.c.h.b16 %v553
    %v3175 = vunpack.c.l.b16 %v554
    %v3176 = vunpack.c.h.b16 %v554
    %v3177 = vunpack.c.l.b16 %v555
    %v3178 = vunpack.c.h.b16 %v555
    %v3179 = vunpack.c.l.b16 %v556
    %v3180 = vunpack.c.h.b16 %v556
    %v3181 = vunpack.c.l.b16 %v557
    %v3182 = vunpack.c.h.b16 %v557
    %v3183 = vunpack.c.l.b16 %v558
    %v3184 = vunpack.c.h.b16 %v558
    %v3185 = vunpack.c.l.b16 %v559
    %v3186 = vunpack.c.h.b16 %v559
    %v3187 = vunpack.c.l.b16 %v560
    %v3188 = vunpack.c.h.b16 %v560
    %v3189 = vunpack.c.l.b16 %v561
    %v3190 = vunpack.c.h.b16 %v561
    %v3191 = vunpack.c.l.b16 %v562
    %v3192 = vunpack.c.h.b16 %v562
    %v3193 = vunpack.c.l.b16 %v563
    %v3194 = vunpack.c.h.b16 %v563
    %v3195 = vunpack.c.l.b16 %v564
    %v3196 = vunpack.c.h.b16 %v564
    %v3197 = vunpack.c.l.b16 %v565
    %v3198 = vunpack.c.h.b16 %v565
    %v3199 = vunpack.c.l.b16 %v566
    %v3200 = vunpack.c.h.b16 %v566
    %v3201 = vunpack.c.l.b16 %v567
    %v3202 = vunpack.c.h.b16 %v567
    %v3203 = vunpack.c.l.b16 %v568
    %v3204 = vunpack.c.h.b16 %v568
    %v3205 = vunpack.c.l.b16 %v569
    %v3206 = vunpack.c.h.b16 %v569
    %v3207 = vunpack.c.l.b16 %v570
    %v3208 = vunpack.c.h.b16 %v570
    %v3209 = vunpack.c.l.b16 %v571
    %v3210 = vunpack.c.h.b16 %v571
    %v3211 = vunpack.c.l.b16 %v572
    %v3212 = vunpack.c.h.b16 %v572
    %v3213 = vunpack.c.l.b16 %v573
    %v3214 = vunpack.c.h.b16 %v573
    %v3215 = vunpack.c.l.b16 %v574
    %v3216 = vunpack.c.h.b16 %v574
    %v3217 = vunpack.c.l.b16 %v575
    %v3218 = vunpack.c.h.b16 %v575
    %v3219 = vunpack.c.l.b16 %v576
    %v3220 = vunpack.c.h.b16 %v576
    %v3221 = vunpack.c.l.b16 %v577
    %v3222 = vunpack.c.h.b16 %v577
    %v3223 = vunpack.c.l.b16 %v578
    %v3224 = vunpack.c.h.b16 %v578
    %v3225 = vunpack.c.l.b16 %v579
    %v3226 = vunpack.c.h.b16 %v579
    %v3227 = vunpack.c.l.b16 %v580
    %v3228 = vunpack.c.h.b16 %v580
    %v3229 = vunpack.c.l.b16 %v581
    %v3230 = vunpack.c.h.b16 %v581
    %v3231 = vunpack.c.l.b16 %v582
    %v3232 = vunpack.c.h.b16 %v582
    %v3233 = vunpack.c.l.b16 %v583
    %v3234 = vunpack.c.h.b16 %v583
    %v3235 = vunpack.c.l.b16 %v584
    %v3236 = vunpack.c.h.b16 %v584
    %v3237 = vunpack.c.l.b16 %v585
    %v3238 = vunpack.c.h.b16 %v585
    %v3239 = vunpack.c.l.b16 %v586
    %v3240 = vunpack.c.h.b16 %v586
    %v3241 = vunpack.c.l.b16 %v587
    %v3242 = vunpack.c.h.b16 %v587
    %v3243 = vunpack.c.l.b16 %v588
    %v3244 = vunpack.c.h.b16 %v588
    %v3245 = vunpack.c.l.b16 %v589
    %v3246 = vunpack.c.h.b16 %v589
    %v3247 = vunpack.c.l.b16 %v590
    %v3248 = vunpack.c.h.b16 %v590
    %v3249 = vunpack.c.l.b16 %v591
    %v3250 = vunpack.c.h.b16 %v591
    %v3251 = vunpack.c.l.b16 %v592
    %v3252 = vunpack.c.h.b16 %v592
    %v3253 = vunpack.c.l.b16 %v593
    %v3254 = vunpack.c.h.b16 %v593
    %v3255 = vunpack.c.l.b16 %v594
    %v3256 = vunpack.c.h.b16 %v594
    %v3257 = vunpack.c.l.b16 %v595
    %v3258 = vunpack.c.h.b16 %v595
    %v3259 = vunpack.c.l.b16 %v596
    %v3260 = vunpack.c.h.b16 %v596
    %v3261 = vunpack.c.l.b16 %v597
    %v3262 = vunpack.c.h.b16 %v597
    %v3263 = vunpack.c.l.b16 %v598
    %v3264 = vunpack.c.h.b16 %v598
    %v3265 = vunpack.c.l.b16 %v599
    %v3266 = vunpack.c.h.b16 %v599
    %v3267 = vunpack.c.l.b16 %v600
    %v3268 = vunpack.c.h.b16 %v600
    %v3269 = vunpack.c.l.b16 %v601
    %v3270 = vunpack.c.h.b16 %v601
    %v3271 = vunpack.c.l.b16 %v602
    %v3272 = vunpack.c.h.b16 %v602
    %v3273 = vunpack.c.l.b16 %v603
    %v3274 = vunpack.c.h.b16 %v603
    %v3275 = vunpack.c.l.b16 %v604
    %v3276 = vunpack.c.h.b16 %v604
    %v3277 = vunpack.c.l.b16 %v605
    %v3278 = vunpack.c.h.b16 %v605
    %v3279 = vunpack.c.l.b16 %v606
    %v3280 = vunpack.c.h.b16 %v606
    %v3281 = vunpack.c.l.b16 %v607
    %v3282 = vunpack.c.h.b16 %v607
    %v3283 = vunpack.c.l.b16 %v608
    %v3284 = vunpack.c.h.b16 %v608
    %v3285 = vunpack.c.l.b16 %v609
    %v3286 = vunpack.c.h.b16 %v609
    %v3287 = vunpack.c.l.b16 %v610
    %v3288 = vunpack.c.h.b16 %v610
    %v3289 = vunpack.c.l.b16 %v611
    %v3290 = vunpack.c.h.b16 %v611
    %v3291 = vunpack.c.l.b16 %v612
    %v3292 = vunpack.c.h.b16 %v612
    %v3293 = vunpack.c.l.b16 %v613
    %v3294 = vunpack.c.h.b16 %v613
    %v3295 = vunpack.c.l.b16 %v614
    %v3296 = vunpack.c.h.b16 %v614
    %v3297 = vunpack.c.l.b16 %v615
    %v3298 = vunpack.c.h.b16 %v615
    %v3299 = vunpack.c.l.b16 %v616
    %v3300 = vunpack.c.h.b16 %v616
    %v3301 = vunpack.c.l.b16 %v617
    %v3302 = vunpack.c.h.b16 %v617
    %v3303 = vunpack.c.l.b16 %v618
    %v3304 = vunpack.c.h.b16 %v618
    %v3305 = vunpack.c.l.b16 %v619
    %v3306 = vunpack.c.h.b16 %v619
    %v3307 = vunpack.c.l.b16 %v620
    %v3308 = vunpack.c.h.b16 %v620
    %v3309 = vunpack.c.l.b16 %v621
    %v3310 = vunpack.c.h.b16 %v621
    %v3311 = vunpack.c.l.b16 %v622
    %v3312 = vunpack.c.h.b16 %v622
    %v3313 = vunpack.c.l.b16 %v623
    %v3314 = vunpack.c.h.b16 %v623
    %v3315 = vunpack.c.l.b16 %v624
    %v3316 = vunpack.c.h.b16 %v624
    %v3317 = vunpack.c.l.b16 %v625
    %v3318 = vunpack.c.h.b16 %v625
    %v3319 = vunpack.c.l.b16 %v626
    %v3320 = vunpack.c.h.b16 %v626
    %v3321 = vunpack.c.l.b16 %v627
    %v3322 = vunpack.c.h.b16 %v627
    %v3323 = vunpack.c.l.b16 %v628
    %v3324 = vunpack.c.h.b16 %v628
    %v3325 = vunpack.c.l.b16 %v629
    %v3326 = vunpack.c.h.b16 %v629
    %v3327 = vunpack.c.l.b16 %v630
    %v3328 = vunpack.c.h.b16 %v630
    %v3329 = vunpack.c.l.b16 %v631
    %v3330 = vunpack.c.h.b16 %v631
    %v3331 = vunpack.c.l.b16 %v632
    %v3332 = vunpack.c.h.b16 %v632
    %v3333 = vunpack.c.l.b16 %v633
    %v3334 = vunpack.c.h.b16 %v633
    %v3335 = vunpack.c.l.b16 %v634
    %v3336 = vunpack.c.h.b16 %v634
    %v3337 = vunpack.c.l.b16 %v635
    %v3338 = vunpack.c.h.b16 %v635
    %v3339 = vunpack.c.l.b16 %v636
    %v3340 = vunpack.c.h.b16 %v636
    %v3341 = vunpack.c.l.b16 %v637
    %v3342 = vunpack.c.h.b16 %v637
    %v3343 = vunpack.c.l.b16 %v638
    %v3344 = vunpack.c.h.b16 %v638
    %v3345 = vunpack.c.l.b16 %v639
    %v3346 = vunpack.c.h.b16 %v639
    %v3347 = vunpack.c.l.b16 %v640
    %v3348 = vunpack.c.h.b16 %v640
    %v3349 = vunpack.c.l.b16 %v641
    %v3350 = vunpack.c.h.b16 %v641
    %v3351 = vunpack.c.l.b16 %v642
    %v3352 = vunpack.c.h.b16 %v642
    %v3353 = vunpack.c.l.b16 %v643
    %v3354 = vunpack.c.h.b16 %v643
    %v3355 = vunpack.c.l.b16 %v644
    %v3356 = vunpack.c.h.b16 %v644
    %v3357 = vunpack.c.l.b16 %v645
    %v3358 = vunpack.c.h.b16 %v645
    %v3359 = vunpack.c.l.b16 %v646
    %v3360 = vunpack.c.h.b16 %v646
    %v3361 = vunpack.c.l.b16 %v647
    %v3362 = vunpack.c.h.b16 %v647
    %v3363 = vunpack.c.l.b16 %v648
    %v3364 = vunpack.c.h.b16 %v648
    %v3365 = vunpack.c.l.b16 %v649
    %v3366 = vunpack.c.h.b16 %v649
    %v3367 = vunpack.c.l.b16 %v650
    %v3368 = vunpack.c.h.b16 %v650
    %v3369 = vunpack.c.l.b16 %v651
    %v3370 = vunpack.c.h.b16 %v651
    %v3371 = vunpack.c.l.b16 %v652
    %v3372 = vunpack.c.h.b16 %v652
    %v3373 = vunpack.c.l.b16 %v653
    %v3374 = vunpack.c.h.b16 %v653
    %v3375 = vunpack.c.l.b16 %v654
    %v3376 = vunpack.c.h.b16 %v654
    %v3377 = vunpack.c.l.b16 %v655
    %v3378 = vunpack.c.h.b16 %v655
    %v3379 = vunpack.c.l.b16 %v656
    %v3380 = vunpack.c.h.b16 %v656
    %v3381 = vunpack.c.l.b16 %v657
    %v3382 = vunpack.c.h.b16 %v657
    %v3383 = vunpack.c.l.b16 %v658
    %v3384 = vunpack.c.h.b16 %v658
    %v3385 = vunpack.c.l.b16 %v659
    %v3386 = vunpack.c.h.b16 %v659
    %v3387 = vunpack.c.l.b16 %v660
    %v3388 = vunpack.c.h.b16 %v660
    %v3389 = vunpack.c.l.b16 %v661
    %v3390 = vunpack.c.h.b16 %v661
    %v3391 = vunpack.c.l.b16 %v662
    %v3392 = vunpack.c.h.b16 %v662
    %v3393 = vunpack.c.l.b16 %v663
    %v3394 = vunpack.c.h.b16 %v663
    %v3395 = vunpack.c.l.b16 %v664
    %v3396 = vunpack.c.h.b16 %v664
    %v3397 = vunpack.c.l.b16 %v665
    %v3398 = vunpack.c.h.b16 %v665
    %v3399 = vunpack.c.l.b16 %v666
    %v3400 = vunpack.c.h.b16 %v666
    %v3401 = vunpack.c.l.b16 %v667
    %v3402 = vunpack.c.h.b16 %v667
    %v3403 = vunpack.c.l.b16 %v668
    %v3404 = vunpack.c.h.b16 %v668
    %v3405 = vunpack.c.l.b16 %v669
    %v3406 = vunpack.c.h.b16 %v669
    %v3407 = vunpack.c.l.b16 %v670
    %v3408 = vunpack.c.h.b16 %v670
    %v3409 = vunpack.c.l.b16 %v671
    %v3410 = vunpack.c.h.b16 %v671
    %v3411 = vunpack.c.l.b16 %v672
    %v3412 = vunpack.c.h.b16 %v672
    %v3413 = vunpack.c.l.b16 %v673
    %v3414 = vunpack.c.h.b16 %v673
    %v3415 = vunpack.c.l.b16 %v674
    %v3416 = vunpack.c.h.b16 %v674
    %v3417 = vunpack.c.l.b16 %v675
    %v3418 = vunpack.c.h.b16 %v675
    %v3419 = vunpack.c.l.b16 %v676
    %v3420 = vunpack.c.h.b16 %v676
    %v3421 = vunpack.c.l.b16 %v677
    %v3422 = vunpack.c.h.b16 %v677
    %v3423 = vunpack.c.l.b16 %v678
    %v3424 = vunpack.c.h.b16 %v678
    %v3425 = vunpack.c.l.b16 %v679
    %v3426 = vunpack.c.h.b16 %v679
    %v3427 = vunpack.c.l.b16 %v680
    %v3428 = vunpack.c.h.b16 %v680
    %v3429 = vunpack.c.l.b16 %v681
    %v3430 = vunpack.c.h.b16 %v681
    %v3431 = vunpack.c.l.b16 %v682
    %v3432 = vunpack.c.h.b16 %v682
    %v3433 = vunpack.c.l.b16 %v683
    %v3434 = vunpack.c.h.b16 %v683
    %v3435 = vunpack.c.l.b16 %v684
    %v3436 = vunpack.c.h.b16 %v684
    %v3437 = vunpack.c.l.b16 %v685
    %v3438 = vunpack.c.h.b16 %v685
    %v3439 = vunpack.c.l.b16 %v686
    %v3440 = vunpack.c.h.b16 %v686
    %v3441 = vunpack.c.l.b16 %v687
    %v3442 = vunpack.c.h.b16 %v687
    %v3443 = vunpack.c.l.b16 %v688
    %v3444 = vunpack.c.h.b16 %v688
    %v3445 = vunpack.c.l.b16 %v689
    %v3446 = vunpack.c.h.b16 %v689
    %v3447 = vunpack.c.l.b16 %v690
    %v3448 = vunpack.c.h.b16 %v690
    %v3449 = vunpack.c.l.b16 %v691
    %v3450 = vunpack.c.h.b16 %v691
    %v3451 = vunpack.c.l.b16 %v692
    %v3452 = vunpack.c.h.b16 %v692
    %v3453 = vunpack.c.l.b16 %v693
    %v3454 = vunpack.c.h.b16 %v693
    %v3455 = vunpack.c.l.b16 %v694
    %v3456 = vunpack.c.h.b16 %v694
    %v3457 = vunpack.c.l.b16 %v695
    %v3458 = vunpack.c.h.b16 %v695
    %v3459 = vunpack.c.l.b16 %v696
    %v3460 = vunpack.c.h.b16 %v696
    %v3461 = vunpack.c.l.b16 %v697
    %v3462 = vunpack.c.h.b16 %v697
    %v3463 = vunpack.c.l.b16 %v698
    %v3464 = vunpack.c.h.b16 %v698
    %v3465 = vunpack.c.l.b16 %v699
    %v3466 = vunpack.c.h.b16 %v699
    %v3467 = vunpack.c.l.b16 %v700
    %v3468 = vunpack.c.h.b16 %v700
    %v3469 = vunpack.c.l.b16 %v701
    %v3470 = vunpack.c.h.b16 %v701
    %v3471 = vunpack.c.l.b16 %v702
    %v3472 = vunpack.c.h.b16 %v702
    %v3473 = vunpack.c.l.b16 %v703
    %v3474 = vunpack.c.h.b16 %v703
    %v3475 = vunpack.c.l.b16 %v704
    %v3476 = vunpack.c.h.b16 %v704
    %v3477 = vunpack.c.l.b16 %v705
    %v3478 = vunpack.c.h.b16 %v705
    %v3479 = vunpack.c.l.b16 %v706
    %v3480 = vunpack.c.h.b16 %v706
    %v3481 = vunpack.c.l.b16 %v707
    %v3482 = vunpack.c.h.b16 %v707
    %v3483 = vunpack.c.l.b16 %v708
    %v3484 = vunpack.c.h.b16 %v708
    %v3485 = vunpack.c.l.b16 %v709
    %v3486 = vunpack.c.h.b16 %v709
    %v3487 = vunpack.c.l.b16 %v710
    %v3488 = vunpack.c.h.b16 %v710
    %v3489 = vunpack.c.l.b16 %v711
    %v3490 = vunpack.c.h.b16 %v711
    %v3491 = vunpack.c.l.b16 %v712
    %v3492 = vunpack.c.h.b16 %v712
    %v3493 = vunpack.c.l.b16 %v713
    %v3494 = vunpack.c.h.b16 %v713
    %v3495 = vunpack.c.l.b16 %v714
    %v3496 = vunpack.c.h.b16 %v714
    %v3497 = vunpack.c.l.b16 %v715
    %v3498 = vunpack.c.h.b16 %v715
    %v3499 = vunpack.c.l.b16 %v716
    %v3500 = vunpack.c.h.b16 %v716
    %v3501 = vunpack.c.l.b16 %v717
    %v3502 = vunpack.c.h.b16 %v717
    %v3503 = vunpack.c.l.b16 %v718
    %v3504 = vunpack.c.h.b16 %v718
    %v3505 = vunpack.c.l.b16 %v719
    %v3506 = vunpack.c.h.b16 %v719
    %v3507 = vunpack.c.l.b16 %v720
    %v3508 = vunpack.c.h.b16 %v720
    %v3509 = vunpack.c.l.b16 %v721
    %v3510 = vunpack.c.h.b16 %v721
    %v3511 = vunpack.c.l.b16 %v722
    %v3512 = vunpack.c.h.b16 %v722
    %v3513 = vunpack.c.l.b16 %v723
    %v3514 = vunpack.c.h.b16 %v723
    %v3515 = vunpack.c.l.b16 %v724
    %v3516 = vunpack.c.h.b16 %v724
    %v3517 = vunpack.c.l.b16 %v725
    %v3518 = vunpack.c.h.b16 %v725
    %v3519 = vunpack.c.l.b16 %v726
    %v3520 = vunpack.c.h.b16 %v726
    %v3521 = vunpack.c.l.b16 %v727
    %v3522 = vunpack.c.h.b16 %v727
    %v3523 = vunpack.c.l.b16 %v728
    %v3524 = vunpack.c.h.b16 %v728
    %v3525 = vunpack.c.l.b16 %v729
    %v3526 = vunpack.c.h.b16 %v729
    %v3527 = vunpack.c.l.b16 %v730
    %v3528 = vunpack.c.h.b16 %v730
    %v3529 = vunpack.c.l.b16 %v731
    %v3530 = vunpack.c.h.b16 %v731
    %v3531 = vunpack.c.l.b16 %v732
    %v3532 = vunpack.c.h.b16 %v732
    %v3533 = vunpack.c.l.b16 %v733
    %v3534 = vunpack.c.h.b16 %v733
    %v3535 = vunpack.c.l.b16 %v734
    %v3536 = vunpack.c.h.b16 %v734
    %v3537 = vunpack.c.l.b16 %v735
    %v3538 = vunpack.c.h.b16 %v735
    %v3539 = vunpack.c.l.b16 %v736
    %v3540 = vunpack.c.h.b16 %v736
    %v3541 = vunpack.c.l.b16 %v737
    %v3542 = vunpack.c.h.b16 %v737
    %v3543 = vunpack.c.l.b16 %v738
    %v3544 = vunpack.c.h.b16 %v738
    %v3545 = vunpack.c.l.b16 %v739
    %v3546 = vunpack.c.h.b16 %v739
    %v3547 = vunpack.c.l.b16 %v740
    %v3548 = vunpack.c.h.b16 %v740
    %v3549 = vunpack.c.l.b16 %v741
    %v3550 = vunpack.c.h.b16 %v741
    %v3551 = vunpack.c.l.b16 %v742
    %v3552 = vunpack.c.h.b16 %v742
    %v3553 = vunpack.c.l.b16 %v743
    %v3554 = vunpack.c.h.b16 %v743
    %v3555 = vunpack.c.l.b16 %v744
    %v3556 = vunpack.c.h.b16 %v744
    %v3557 = vunpack.c.l.b16 %v745
    %v3558 = vunpack.c.h.b16 %v745
    %v3559 = vunpack.c.l.b16 %v746
    %v3560 = vunpack.c.h.b16 %v746
    %v3561 = vunpack.c.l.b16 %v747
    %v3562 = vunpack.c.h.b16 %v747
    %v3563 = vunpack.c.l.b16 %v748
    %v3564 = vunpack.c.h.b16 %v748
    %v3565 = vunpack.c.l.b16 %v749
    %v3566 = vunpack.c.h.b16 %v749
    %v3567 = vunpack.c.l.b16 %v750
    %v3568 = vunpack.c.h.b16 %v750
    %v3569 = vunpack.c.l.b16 %v751
    %v3570 = vunpack.c.h.b16 %v751
    %v3571 = vunpack.c.l.b16 %v752
    %v3572 = vunpack.c.h.b16 %v752
    %v3573 = vunpack.c.l.b16 %v753
    %v3574 = vunpack.c.h.b16 %v753
    %v3575 = vunpack.c.l.b16 %v754
    %v3576 = vunpack.c.h.b16 %v754
    %v3577 = vunpack.c.l.b16 %v755
    %v3578 = vunpack.c.h.b16 %v755
    %v3579 = vunpack.c.l.b16 %v756
    %v3580 = vunpack.c.h.b16 %v756
    %v3581 = vunpack.c.l.b16 %v757
    %v3582 = vunpack.c.h.b16 %v757
    %v3583 = vunpack.c.l.b16 %v758
    %v3584 = vunpack.c.h.b16 %v758
    %v3585 = vunpack.c.l.b16 %v759
    %v3586 = vunpack.c.h.b16 %v759
    %v3587 = vunpack.c.l.b16 %v760
    %v3588 = vunpack.c.h.b16 %v760
    %v3589 = vunpack.c.l.b16 %v761
    %v3590 = vunpack.c.h.b16 %v761
    %v3591 = vunpack.c.l.b16 %v762
    %v3592 = vunpack.c.h.b16 %v762
    %v3593 = vunpack.c.l.b16 %v763
    %v3594 = vunpack.c.h.b16 %v763
    %v3595 = vunpack.c.l.b16 %v764
    %v3596 = vunpack.c.h.b16 %v764
    %v3597 = vunpack.c.l.b16 %v765
    %v3598 = vunpack.c.h.b16 %v765
    %v3599 = vunpack.c.l.b16 %v766
    %v3600 = vunpack.c.h.b16 %v766
    %v3601 = vunpack.c.l.b16 %v767
    %v3602 = vunpack.c.h.b16 %v767
    %v3603 = vunpack.c.l.b16 %v768
    %v3604 = vunpack.c.h.b16 %v768
    %v3605 = vunpack.c.l.b16 %v769
    %v3606 = vunpack.c.h.b16 %v769
    %v3607 = vunpack.c.l.b16 %v770
    %v3608 = vunpack.c.h.b16 %v770
    %v3609 = vunpack.c.l.b16 %v771
    %v3610 = vunpack.c.h.b16 %v771
    %v3611 = vunpack.c.l.b16 %v772
    %v3612 = vunpack.c.h.b16 %v772
    %v3613 = vunpack.c.l.b16 %v773
    %v3614 = vunpack.c.h.b16 %v773
    %v3615 = vunpack.c.l.b16 %v774
    %v3616 = vunpack.c.h.b16 %v774
    %v3617 = vunpack.c.l.b16 %v775
    %v3618 = vunpack.c.h.b16 %v775
    %v3619 = vunpack.c.l.b16 %v776
    %v3620 = vunpack.c.h.b16 %v776
    %v3621 = vunpack.c.l.b16 %v777
    %v3622 = vunpack.c.h.b16 %v777
    %v3623 = vunpack.c.l.b16 %v778
    %v3624 = vunpack.c.h.b16 %v778
    %v3625 = vunpack.c.l.b16 %v779
    %v3626 = vunpack.c.h.b16 %v779
    %v3627 = vunpack.c.l.b16 %v780
    %v3628 = vunpack.c.h.b16 %v780
    %v3629 = vunpack.c.l.b16 %v781
    %v3630 = vunpack.c.h.b16 %v781
    %v3631 = vunpack.c.l.b16 %v782
    %v3632 = vunpack.c.h.b16 %v782
    %v3633 = vunpack.c.l.b16 %v783
    %v3634 = vunpack.c.h.b16 %v783
    %v3635 = vunpack.c.l.b16 %v784
    %v3636 = vunpack.c.h.b16 %v784
    %v3637 = vunpack.c.l.b16 %v785
    %v3638 = vunpack.c.h.b16 %v785
    %v3639 = vunpack.c.l.b16 %v786
    %v3640 = vunpack.c.h.b16 %v786
    %v3641 = vunpack.c.l.b16 %v787
    %v3642 = vunpack.c.h.b16 %v787
    %v3643 = vunpack.c.l.b16 %v788
    %v3644 = vunpack.c.h.b16 %v788
    %v3645 = vunpack.c.l.b16 %v789
    %v3646 = vunpack.c.h.b16 %v789
    %v3647 = vunpack.c.l.b16 %v790
    %v3648 = vunpack.c.h.b16 %v790
    %v3649 = vunpack.c.l.b16 %v791
    %v3650 = vunpack.c.h.b16 %v791
    %v3651 = vunpack.c.l.b16 %v792
    %v3652 = vunpack.c.h.b16 %v792
    %v3653 = vunpack.c.l.b16 %v793
    %v3654 = vunpack.c.h.b16 %v793
    %v3655 = vunpack.c.l.b16 %v794
    %v3656 = vunpack.c.h.b16 %v794
    %v3657 = vunpack.c.l.b16 %v795
    %v3658 = vunpack.c.h.b16 %v795
    %v3659 = vunpack.c.l.b16 %v796
    %v3660 = vunpack.c.h.b16 %v796
    %v3661 = vunpack.c.l.b16 %v797
    %v3662 = vunpack.c.h.b16 %v797
    %v3663 = vunpack.c.l.b16 %v798
    %v3664 = vunpack.c.h.b16 %v798
    %v3665 = vunpack.c.l.b16 %v799
    %v3666 = vunpack.c.h.b16 %v799
    %v3667 = vunpack.c.l.b16 %v800
    %v3668 = vunpack.c.h.b16 %v800
    %v3669 = vunpack.c.l.b16 %v801
    %v3670 = vunpack.c.h.b16 %v801
    %v3671 = vunpack.c.l.b16 %v802
    %v3672 = vunpack.c.h.b16 %v802
    %v3673 = vunpack.c.l.b16 %v803
    %v3674 = vunpack.c.h.b16 %v803
    %v3675 = vunpack.c.l.b16 %v804
    %v3676 = vunpack.c.h.b16 %v804
    %v3677 = vunpack.c.l.b16 %v805
    %v3678 = vunpack.c.h.b16 %v805
    %v3679 = vunpack.c.l.b16 %v806
    %v3680 = vunpack.c.h.b16 %v806
    %v3681 = vunpack.c.l.b16 %v807
    %v3682 = vunpack.c.h.b16 %v807
    %v3683 = vunpack.c.l.b16 %v808
    %v3684 = vunpack.c.h.b16 %v808
    %v3685 = vunpack.c.l.b16 %v809
    %v3686 = vunpack.c.h.b16 %v809
    %v3687 = vunpack.c.l.b16 %v810
    %v3688 = vunpack.c.h.b16 %v810
    %v3689 = vunpack.c.l.b16 %v811
    %v3690 = vunpack.c.h.b16 %v811
    %v3691 = vunpack.c.l.b16 %v812
    %v3692 = vunpack.c.h.b16 %v812
    %v3693 = vunpack.c.l.b16 %v813
    %v3694 = vunpack.c.h.b16 %v813
    %v3695 = vunpack.c.l.b16 %v814
    %v3696 = vunpack.c.h.b16 %v814
    %v3697 = vunpack.c.l.b16 %v815
    %v3698 = vunpack.c.h.b16 %v815
    %v3699 = vunpack.c.l.b16 %v816
    %v3700 = vunpack.c.h.b16 %v816
    %v3701 = vunpack.c.l.b16 %v817
    %v3702 = vunpack.c.h.b16 %v817
    %v3703 = vunpack.c.l.b16 %v818
    %v3704 = vunpack.c.h.b16 %v818
    %v3705 = vunpack.c.l.b16 %v819
    %v3706 = vunpack.c.h.b16 %v819
    %v3707 = vunpack.c.l.b16 %v820
    %v3708 = vunpack.c.h.b16 %v820
    %v3709 = vunpack.c.l.b16 %v821
    %v3710 = vunpack.c.h.b16 %v821
    %v3711 = vunpack.c.l.b16 %v822
    %v3712 = vunpack.c.h.b16 %v822
    %v3713 = vunpack.c.l.b16 %v823
    %v3714 = vunpack.c.h.b16 %v823
    %v3715 = vunpack.c.l.b16 %v824
    %v3716 = vunpack.c.h.b16 %v824
    %v3717 = vunpack.c.l.b16 %v825
    %v3718 = vunpack.c.h.b16 %v825
    %v3719 = vunpack.c.l.b16 %v826
    %v3720 = vunpack.c.h.b16 %v826
    %v3721 = vunpack.c.l.b16 %v827
    %v3722 = vunpack.c.h.b16 %v827
    %v3723 = vunpack.c.l.b16 %v828
    %v3724 = vunpack.c.h.b16 %v828
    %v3725 = vunpack.c.l.b16 %v829
    %v3726 = vunpack.c.h.b16 %v829
    %v3727 = vunpack.c.l.b16 %v830
    %v3728 = vunpack.c.h.b16 %v830
    %v3729 = vunpack.c.l.b16 %v831
    %v3730 = vunpack.c.h.b16 %v831
    %v3731 = vunpack.c.l.b16 %v832
    %v3732 = vunpack.c.h.b16 %v832
    %v3733 = vunpack.c.l.b16 %v833
    %v3734 = vunpack.c.h.b16 %v833
    %v3735 = vunpack.c.l.b16 %v834
    %v3736 = vunpack.c.h.b16 %v834
    %v3737 = vunpack.c.l.b16 %v835
    %v3738 = vunpack.c.h.b16 %v835
    %v3739 = vunpack.c.l.b16 %v836
    %v3740 = vunpack.c.h.b16 %v836
    %v3741 = vunpack.c.l.b16 %v837
    %v3742 = vunpack.c.h.b16 %v837
    %v3743 = vunpack.c.l.b16 %v838
    %v3744 = vunpack.c.h.b16 %v838
    %v3745 = vunpack.c.l.b16 %v839
    %v3746 = vunpack.c.h.b16 %v839
    %v3747 = vunpack.c.l.b16 %v840
    %v3748 = vunpack.c.h.b16 %v840
    %v3749 = vunpack.c.l.b16 %v841
    %v3750 = vunpack.c.h.b16 %v841
    %v3751 = vunpack.c.l.b16 %v842
    %v3752 = vunpack.c.h.b16 %v842
    %v3753 = vunpack.c.l.b16 %v843
    %v3754 = vunpack.c.h.b16 %v843
    %v3755 = vunpack.c.l.b16 %v844
    %v3756 = vunpack.c.h.b16 %v844
    %v3757 = vunpack.c.l.b16 %v845
    %v3758 = vunpack.c.h.b16 %v845
    %v3759 = vunpack.c.l.b16 %v846
    %v3760 = vunpack.c.h.b16 %v846
    %v3761 = vunpack.c.l.b16 %v847
    %v3762 = vunpack.c.h.b16 %v847
    %v3763 = vunpack.c.l.b16 %v848
    %v3764 = vunpack.c.h.b16 %v848
    %v3765 = vunpack.c.l.b16 %v849
    %v3766 = vunpack.c.h.b16 %v849
    %v3767 = vunpack.c.l.b16 %v850
    %v3768 = vunpack.c.h.b16 %v850
    %v3769 = vunpack.c.l.b16 %v851
    %v3770 = vunpack.c.h.b16 %v851
    %v3771 = vunpack.c.l.b16 %v852
    %v3772 = vunpack.c.h.b16 %v852
    %v3773 = vunpack.c.l.b16 %v853
    %v3774 = vunpack.c.h.b16 %v853
    %v3775 = vunpack.c.l.b16 %v854
    %v3776 = vunpack.c.h.b16 %v854
    %v3777 = vunpack.c.l.b16 %v855
    %v3778 = vunpack.c.h.b16 %v855
    %v3779 = vunpack.c.l.b16 %v856
    %v3780 = vunpack.c.h.b16 %v856
    %v3781 = vunpack.c.l.b16 %v857
    %v3782 = vunpack.c.h.b16 %v857
    %v3783 = vunpack.c.l.b16 %v858
    %v3784 = vunpack.c.h.b16 %v858
    %v3785 = vunpack.c.l.b16 %v859
    %v3786 = vunpack.c.h.b16 %v859
    %v3787 = vunpack.c.l.b16 %v860
    %v3788 = vunpack.c.h.b16 %v860
    %v3789 = vunpack.c.l.b16 %v861
    %v3790 = vunpack.c.h.b16 %v861
    %v3791 = vunpack.c.l.b16 %v862
    %v3792 = vunpack.c.h.b16 %v862
    %v3793 = vunpack.c.l.b16 %v863
    %v3794 = vunpack.c.h.b16 %v863
    %v3795 = vunpack.c.l.b16 %v864
    %v3796 = vunpack.c.h.b16 %v864
    %v3797 = vunpack.c.l.b16 %v865
    %v3798 = vunpack.c.h.b16 %v865
    %v3799 = vunpack.c.l.b16 %v866
    %v3800 = vunpack.c.h.b16 %v866
    %v3801 = vunpack.c.l.b16 %v867
    %v3802 = vunpack.c.h.b16 %v867
    %v3803 = vunpack.c.l.b16 %v868
    %v3804 = vunpack.c.h.b16 %v868
    %v3805 = vunpack.c.l.b16 %v869
    %v3806 = vunpack.c.h.b16 %v869
    %v3807 = vunpack.c.l.b16 %v870
    %v3808 = vunpack.c.h.b16 %v870
    %v3809 = vunpack.c.l.b16 %v871
    %v3810 = vunpack.c.h.b16 %v871
    %v3811 = vunpack.c.l.b16 %v872
    %v3812 = vunpack.c.h.b16 %v872
    %v3813 = vunpack.c.l.b16 %v873
    %v3814 = vunpack.c.h.b16 %v873
    %v3815 = vunpack.c.l.b16 %v874
    %v3816 = vunpack.c.h.b16 %v874
    %v3817 = vunpack.c.l.b16 %v875
    %v3818 = vunpack.c.h.b16 %v875
    %v3819 = vunpack.c.l.b16 %v876
    %v3820 = vunpack.c.h.b16 %v876
    %v3821 = vunpack.c.l.b16 %v877
    %v3822 = vunpack.c.h.b16 %v877
    %v3823 = vunpack.c.l.b16 %v878
    %v3824 = vunpack.c.h.b16 %v878
    %v3825 = vunpack.c.l.b16 %v879
    %v3826 = vunpack.c.h.b16 %v879
    %v3827 = vunpack.c.l.b16 %v880
    %v3828 = vunpack.c.h.b16 %v880
    %v3829 = vunpack.c.l.b16 %v881
    %v3830 = vunpack.c.h.b16 %v881
    %v3831 = vunpack.c.l.b16 %v882
    %v3832 = vunpack.c.h.b16 %v882
    %v3833 = vunpack.c.l.b16 %v883
    %v3834 = vunpack.c.h.b16 %v883
    %v3835 = vunpack.c.l.b16 %v884
    %v3836 = vunpack.c.h.b16 %v884
    %v3837 = vunpack.c.l.b16 %v885
    %v3838 = vunpack.c.h.b16 %v885
    %v3839 = vunpack.c.l.b16 %v886
    %v3840 = vunpack.c.h.b16 %v886
    %v3841 = vunpack.c.l.b16 %v887
    %v3842 = vunpack.c.h.b16 %v887
    %v3843 = vunpack.c.l.b16 %v888
    %v3844 = vunpack.c.h.b16 %v888
    %v3845 = vunpack.c.l.b16 %v889
    %v3846 = vunpack.c.h.b16 %v889
    %v3847 = vunpack.c.l.b16 %v890
    %v3848 = vunpack.c.h.b16 %v890
    %v3849 = vunpack.c.l.b16 %v891
    %v3850 = vunpack.c.h.b16 %v891
    %v3851 = vunpack.c.l.b16 %v892
    %v3852 = vunpack.c.h.b16 %v892
    %v3853 = vunpack.c.l.b16 %v893
    %v3854 = vunpack.c.h.b16 %v893
    %v3855 = vunpack.c.l.b16 %v894
    %v3856 = vunpack.c.h.b16 %v894
    %v3857 = vunpack.c.l.b16 %v895
    %v3858 = vunpack.c.h.b16 %v895
    %v3859 = vunpack.c.l.b16 %v896
    %v3860 = vunpack.c.h.b16 %v896
    %v3861 = vunpack.c.l.b16 %v897
    %v3862 = vunpack.c.h.b16 %v897
    %v3863 = vunpack.c.l.b16 %v898
    %v3864 = vunpack.c.h.b16 %v898
    %v3865 = vunpack.c.l.b16 %v899
    %v3866 = vunpack.c.h.b16 %v899
    %v3867 = vunpack.c.l.b16 %v900
    %v3868 = vunpack.c.h.b16 %v900
    %v3869 = vunpack.c.l.b16 %v901
    %v3870 = vunpack.c.h.b16 %v901
    %v3871 = vunpack.c.l.b16 %v902
    %v3872 = vunpack.c.h.b16 %v902
    %v3873 = vunpack.c.l.b16 %v903
    %v3874 = vunpack.c.h.b16 %v903
    %v3875 = vunpack.c.l.b16 %v904
    %v3876 = vunpack.c.h.b16 %v904
    %v3877 = vunpack.c.l.b16 %v905
    %v3878 = vunpack.c.h.b16 %v905
    %v3879 = vunpack.c.l.b16 %v906
    %v3880 = vunpack.c.h.b16 %v906
    %v3881 = vunpack.c.l.b16 %v907
    %v3882 = vunpack.c.h.b16 %v907
    %v3883 = vunpack.c.l.b16 %v908
    %v3884 = vunpack.c.h.b16 %v908
    %v3885 = vunpack.c.l.b16 %v909
    %v3886 = vunpack.c.h.b16 %v909
    %v3887 = vunpack.c.l.b16 %v910
    %v3888 = vunpack.c.h.b16 %v910
    %v3889 = vunpack.c.l.b16 %v911
    %v3890 = vunpack.c.h.b16 %v911
    %v3891 = vunpack.c.l.b16 %v912
    %v3892 = vunpack.c.h.b16 %v912
    %v3893 = vunpack.c.l.b16 %v913
    %v3894 = vunpack.c.h.b16 %v913
    %v3895 = vunpack.c.l.b16 %v914
    %v3896 = vunpack.c.h.b16 %v914
    %v3897 = vunpack.c.l.b16 %v915
    %v3898 = vunpack.c.h.b16 %v915
    %v3899 = vunpack.c.l.b16 %v916
    %v3900 = vunpack.c.h.b16 %v916
    %v3901 = vunpack.c.l.b16 %v917
    %v3902 = vunpack.c.h.b16 %v917
    %v3903 = vunpack.c.l.b16 %v918
    %v3904 = vunpack.c.h.b16 %v918
    %v3905 = vunpack.c.l.b16 %v919
    %v3906 = vunpack.c.h.b16 %v919
    %v3907 = vunpack.c.l.b16 %v920
    %v3908 = vunpack.c.h.b16 %v920
    %v3909 = vunpack.c.l.b16 %v921
    %v3910 = vunpack.c.h.b16 %v921
    %v3911 = vunpack.c.l.b16 %v922
    %v3912 = vunpack.c.h.b16 %v922
    %v3913 = vunpack.c.l.b16 %v923
    %v3914 = vunpack.c.h.b16 %v923
    %v3915 = vunpack.c.l.b16 %v924
    %v3916 = vunpack.c.h.b16 %v924
    %v3917 = vunpack.c.l.b16 %v925
    %v3918 = vunpack.c.h.b16 %v925
    %v3919 = vunpack.c.l.b16 %v926
    %v3920 = vunpack.c.h.b16 %v926
    %v3921 = vunpack.c.l.b16 %v927
    %v3922 = vunpack.c.h.b16 %v927
    %v3923 = vunpack.c.l.b16 %v928
    %v3924 = vunpack.c.h.b16 %v928
    %v3925 = vunpack.c.l.b16 %v929
    %v3926 = vunpack.c.h.b16 %v929
    %v3927 = vunpack.c.l.b16 %v930
    %v3928 = vunpack.c.h.b16 %v930
    %v3929 = vunpack.c.l.b16 %v931
    %v3930 = vunpack.c.h.b16 %v931
    %v3931 = vunpack.c.l.b16 %v932
    %v3932 = vunpack.c.h.b16 %v932
    %v3933 = vunpack.c.l.b16 %v933
    %v3934 = vunpack.c.h.b16 %v933
    %v3935 = vunpack.c.l.b16 %v934
    %v3936 = vunpack.c.h.b16 %v934
    %v3937 = vunpack.c.l.b16 %v935
    %v3938 = vunpack.c.h.b16 %v935
    %v3939 = vunpack.c.l.b16 %v936
    %v3940 = vunpack.c.h.b16 %v936
    %v3941 = vunpack.c.l.b16 %v937
    %v3942 = vunpack.c.h.b16 %v937
    %v3943 = vunpack.c.l.b16 %v938
    %v3944 = vunpack.c.h.b16 %v938
    %v3945 = vunpack.c.l.b16 %v939
    %v3946 = vunpack.c.h.b16 %v939
    %v3947 = vunpack.c.l.b16 %v940
    %v3948 = vunpack.c.h.b16 %v940
    %v3949 = vunpack.c.l.b16 %v941
    %v3950 = vunpack.c.h.b16 %v941
    %v3951 = vunpack.c.l.b16 %v942
    %v3952 = vunpack.c.h.b16 %v942
    %v3953 = vunpack.c.l.b16 %v943
    %v3954 = vunpack.c.h.b16 %v943
    %v3955 = vunpack.c.l.b16 %v944
    %v3956 = vunpack.c.h.b16 %v944
    %v3957 = vunpack.c.l.b16 %v945
    %v3958 = vunpack.c.h.b16 %v945
    %v3959 = vunpack.c.l.b16 %v946
    %v3960 = vunpack.c.h.b16 %v946
    %v3961 = vunpack.c.l.b16 %v947
    %v3962 = vunpack.c.h.b16 %v947
    %v3963 = vunpack.c.l.b16 %v948
    %v3964 = vunpack.c.h.b16 %v948
    %v3965 = vunpack.c.l.b16 %v949
    %v3966 = vunpack.c.h.b16 %v949
    %v3967 = vunpack.c.l.b16 %v950
    %v3968 = vunpack.c.h.b16 %v950
    %v3969 = vunpack.c.l.b16 %v951
    %v3970 = vunpack.c.h.b16 %v951
    %v3971 = vunpack.c.l.b16 %v952
    %v3972 = vunpack.c.h.b16 %v952
    %v3973 = vunpack.c.l.b16 %v953
    %v3974 = vunpack.c.h.b16 %v953
    %v3975 = vunpack.c.l.b16 %v954
    %v3976 = vunpack.c.h.b16 %v954
    %v3977 = vunpack.c.l.b16 %v955
    %v3978 = vunpack.c.h.b16 %v955
    %v3979 = vunpack.c.l.b16 %v956
    %v3980 = vunpack.c.h.b16 %v956
    %v3981 = vunpack.c.l.b16 %v957
    %v3982 = vunpack.c.h.b16 %v957
    %v3983 = vunpack.c.l.b16 %v958
    %v3984 = vunpack.c.h.b16 %v958
    %v3985 = vunpack.c.l.b16 %v959
    %v3986 = vunpack.c.h.b16 %v959
    %v3987 = vunpack.c.l.b16 %v960
    %v3988 = vunpack.c.h.b16 %v960
    %v3989 = vunpack.c.l.b16 %v961
    %v3990 = vunpack.c.h.b16 %v961
    %v3991 = vunpack.c.l.b16 %v962
    %v3992 = vunpack.c.h.b16 %v962
    %v3993 = vunpack.c.l.b16 %v963
    %v3994 = vunpack.c.h.b16 %v963
    %v3995 = vunpack.c.l.b16 %v964
    %v3996 = vunpack.c.h.b16 %v964
    %v3997 = vunpack.c.l.b16 %v965
    %v3998 = vunpack.c.h.b16 %v965
    %v3999 = vunpack.c.l.b16 %v966
    %v4000 = vunpack.c.h.b16 %v966
    %v4001 = vunpack.c.l.b16 %v967
    %v4002 = vunpack.c.h.b16 %v967
    %v4003 = vunpack.c.l.b16 %v968
    %v4004 = vunpack.c.h.b16 %v968
    %v4005 = vunpack.c.l.b16 %v969
    %v4006 = vunpack.c.h.b16 %v969
    %v4007 = vunpack.c.l.b16 %v970
    %v4008 = vunpack.c.h.b16 %v970
    %v4009 = vunpack.c.l.b16 %v971
    %v4010 = vunpack.c.h.b16 %v971
    %v4011 = vunpack.c.l.b16 %v972
    %v4012 = vunpack.c.h.b16 %v972
    %v4013 = vunpack.c.l.b16 %v973
    %v4014 = vunpack.c.h.b16 %v973
    %v4015 = vunpack.c.l.b16 %v974
    %v4016 = vunpack.c.h.b16 %v974
    %v4017 = vunpack.c.l.b16 %v975
    %v4018 = vunpack.c.h.b16 %v975
    %v4019 = vunpack.c.l.b16 %v976
    %v4020 = vunpack.c.h.b16 %v976
    %v4021 = vunpack.c.l.b16 %v977
    %v4022 = vunpack.c.h.b16 %v977
    %v4023 = vunpack.c.l.b16 %v978
    %v4024 = vunpack.c.h.b16 %v978
    %v4025 = vunpack.c.l.b16 %v979
    %v4026 = vunpack.c.h.b16 %v979
    %v4027 = vunpack.c.l.b16 %v980
    %v4028 = vunpack.c.h.b16 %v980
    %v4029 = vunpack.c.l.b16 %v981
    %v4030 = vunpack.c.h.b16 %v981
    %v4031 = vunpack.c.l.b16 %v982
    %v4032 = vunpack.c.h.b16 %v982
    %v4033 = vunpack.c.l.b16 %v983
    %v4034 = vunpack.c.h.b16 %v983
    %v4035 = vunpack.c.l.b16 %v984
    %v4036 = vunpack.c.h.b16 %v984
    %v4037 = vunpack.c.l.b16 %v985
    %v4038 = vunpack.c.h.b16 %v985
    %v4039 = vunpack.c.l.b16 %v986
    %v4040 = vunpack.c.h.b16 %v986
    %v4041 = vunpack.c.l.b16 %v987
    %v4042 = vunpack.c.h.b16 %v987
    %v4043 = vunpack.c.l.b16 %v988
    %v4044 = vunpack.c.h.b16 %v988
    %v4045 = vunpack.c.l.b16 %v989
    %v4046 = vunpack.c.h.b16 %v989
    %v4047 = vunpack.c.l.b16 %v990
    %v4048 = vunpack.c.h.b16 %v990
    %v4049 = vunpack.c.l.b16 %v991
    %v4050 = vunpack.c.h.b16 %v991
    %v4051 = vunpack.c.l.b16 %v992
    %v4052 = vunpack.c.h.b16 %v992
    %v4053 = vunpack.c.l.b16 %v993
    %v4054 = vunpack.c.h.b16 %v993
    %v4055 = vunpack.c.l.b16 %v994
    %v4056 = vunpack.c.h.b16 %v994
    %v4057 = vunpack.c.l.b16 %v995
    %v4058 = vunpack.c.h.b16 %v995
    %v4059 = vunpack.c.l.b16 %v996
    %v4060 = vunpack.c.h.b16 %v996
    %v4061 = vunpack.c.l.b16 %v997
    %v4062 = vunpack.c.h.b16 %v997
    %v4063 = vunpack.c.l.b16 %v998
    %v4064 = vunpack.c.h.b16 %v998
    %v4065 = vunpack.c.l.b16 %v999
    %v4066 = vunpack.c.h.b16 %v999
    %v4067 = vunpack.c.l.b16 %v1000
    %v4068 = vunpack.c.h.b16 %v1000
    %v4069 = vunpack.c.l.b16 %v1001
    %v4070 = vunpack.c.h.b16 %v1001
    %v4071 = vunpack.c.l.b16 %v1002
    %v4072 = vunpack.c.h.b16 %v1002
    %v4073 = vunpack.c.l.b16 %v1003
    %v4074 = vunpack.c.h.b16 %v1003
    %v4075 = vunpack.c.l.b16 %v1004
    %v4076 = vunpack.c.h.b16 %v1004
    %v4077 = vunpack.c.l.b16 %v1005
    %v4078 = vunpack.c.h.b16 %v1005
    %v4079 = vunpack.c.l.b16 %v1006
    %v4080 = vunpack.c.h.b16 %v1006
    %v4081 = vunpack.c.l.b16 %v1007
    %v4082 = vunpack.c.h.b16 %v1007
    %v4083 = vunpack.c.l.b16 %v1008
    %v4084 = vunpack.c.h.b16 %v1008
    %v4085 = vunpack.c.l.b16 %v1009
    %v4086 = vunpack.c.h.b16 %v1009
    %v4087 = vunpack.c.l.b16 %v1010
    %v4088 = vunpack.c.h.b16 %v1010
    %v4089 = vunpack.c.l.b16 %v1011
    %v4090 = vunpack.c.h.b16 %v1011
    %v4091 = vunpack.c.l.b16 %v1012
    %v4092 = vunpack.c.h.b16 %v1012
    %v4093 = vunpack.c.l.b16 %v1013
    %v4094 = vunpack.c.h.b16 %v1013
    %v4095 = vunpack.c.l.b16 %v1014
    %v4096 = vunpack.c.h.b16 %v1014
    %v4097 = vunpack.c.l.b16 %v1015
    %v4098 = vunpack.c.h.b16 %v1015
    %v4099 = vunpack.c.l.b16 %v1016
    %v4100 = vunpack.c.h.b16 %v1016
    %v4101 = vunpack.c.l.b16 %v1017
    %v4102 = vunpack.c.h.b16 %v1017
    %v4103 = vunpack.c.l.b16 %v1018
    %v4104 = vunpack.c.h.b16 %v1018
    %v4105 = vunpack.c.l.b16 %v1019
    %v4106 = vunpack.c.h.b16 %v1019
    %v4107 = vunpack.c.l.b16 %v1020
    %v4108 = vunpack.c.h.b16 %v1020
    %v4109 = vunpack.c.l.b16 %v1021
    %v4110 = vunpack.c.h.b16 %v1021
    %v4111 = vunpack.c.l.b16 %v1022
    %v4112 = vunpack.c.h.b16 %v1022
    %v4113 = vunpack.c.l.b16 %v1023
    %v4114 = vunpack.c.h.b16 %v1023
    %v4115 = vunpack.c.l.b16 %v1024
    %v4116 = vunpack.c.h.b16 %v1024
    %v4117 = vunpack.c.l.b16 %v1025
    %v4118 = vunpack.c.h.b16 %v1025
    %v4119 = vunpack.c.l.b16 %v1026
    %v4120 = vunpack.c.h.b16 %v1026
    %v4121 = vunpack.c.l.b16 %v1027
    %v4122 = vunpack.c.h.b16 %v1027
    %v4123 = vunpack.c.l.b16 %v1028
    %v4124 = vunpack.c.h.b16 %v1028
    %v4125 = vunpack.c.l.b16 %v1029
    %v4126 = vunpack.c.h.b16 %v1029
    %v4127 = vunpack.c.l.b16 %v1030
    %v4128 = vunpack.c.h.b16 %v1030
    %v4129 = vunpack.c.l.b16 %v1031
    %v4130 = vunpack.c.h.b16 %v1031
    %v4131 = vunpack.c.l.b16 %v1032
    %v4132 = vunpack.c.h.b16 %v1032
    %v4133 = vunpack.c.l.b16 %v1033
    %v4134 = vunpack.c.h.b16 %v1033
    %v4135 = vunpack.c.l.b16 %v1034
    %v4136 = vunpack.c.h.b16 %v1034
    %v4137 = vunpack.c.l.b16 %v1035
    %v4138 = vunpack.c.h.b16 %v1035
    %v4139 = vunpack.c.l.b16 %v1036
    %v4140 = vunpack.c.h.b16 %v1036
    %v4141 = vunpack.c.l.b16 %v1037
    %v4142 = vunpack.c.h.b16 %v1037
    %v4143 = vunpack.c.l.b16 %v1038
    %v4144 = vunpack.c.h.b16 %v1038
    %v4145 = vunpack.c.l.b16 %v1039
    %v4146 = vunpack.c.h.b16 %v1039
    %v4147 = vunpack.c.l.b16 %v1040
    %v4148 = vunpack.c.h.b16 %v1040
    %v4149 = vunpack.c.l.b16 %v1041
    %v4150 = vunpack.c.h.b16 %v1041
    %v4151 = vunpack.c.l.b16 %v1042
    %v4152 = vunpack.c.h.b16 %v1042
    %v4153 = vunpack.c.l.b16 %v1043
    %v4154 = vunpack.c.h.b16 %v1043
    %v4155 = vunpack.c.l.b16 %v1044
    %v4156 = vunpack.c.h.b16 %v1044
    %v4157 = vunpack.c.l.b16 %v1045
    %v4158 = vunpack.c.h.b16 %v1045
    %v4159 = vunpack.c.l.b16 %v1046
    %v4160 = vunpack.c.h.b16 %v1046
    %v4161 = vunpack.c.l.b16 %v1047
    %v4162 = vunpack.c.h.b16 %v1047
    %v4163 = vunpack.c.l.b16 %v1048
    %v4164 = vunpack.c.h.b16 %v1048
    %v4165 = vunpack.c.l.b16 %v1049
    %v4166 = vunpack.c.h.b16 %v1049
    %v4167 = vunpack.c.l.b16 %v1050
    %v4168 = vunpack.c.h.b16 %v1050
    %v4169 = vunpack.c.l.b16 %v1051
    %v4170 = vunpack.c.h.b16 %v1051
    %v4171 = vunpack.c.l.b16 %v1052
    %v4172 = vunpack.c.h.b16 %v1052
    %v4173 = vunpack.c.l.b16 %v1053
    %v4174 = vunpack.c.h.b16 %v1053
    %v4175 = vunpack.c.l.b16 %v1054
    %v4176 = vunpack.c.h.b16 %v1054
    %v4177 = vunpack.c.l.b16 %v1055
    %v4178 = vunpack.c.h.b16 %v1055
    %v4179 = vunpack.c.l.b16 %v1056
    %v4180 = vunpack.c.h.b16 %v1056
    %v4181 = vunpack.c.l.b16 %v1057
    %v4182 = vunpack.c.h.b16 %v1057
    %v4183 = vunpack.c.l.b16 %v1058
    %v4184 = vunpack.c.h.b16 %v1058
    %v4185 = vunpack.c.l.b16 %v1059
    %v4186 = vunpack.c.h.b16 %v1059
    %v4187 = vunpack.c.l.b16 %v1060
    %v4188 = vunpack.c.h.b16 %v1060
    %v4189 = vunpack.c.l.b16 %v1061
    %v4190 = vunpack.c.h.b16 %v1061
    %v4191 = vunpack.c.l.b16 %v1062
    %v4192 = vunpack.c.h.b16 %v1062
    %v4193 = vunpack.c.l.b16 %v1063
    %v4194 = vunpack.c.h.b16 %v1063
    %v4195 = vunpack.c.l.b16 %v1064
    %v4196 = vunpack.c.h.b16 %v1064
    %v4197 = vunpack.c.l.b16 %v1065
    %v4198 = vunpack.c.h.b16 %v1065
    %v4199 = vunpack.c.l.b16 %v1066
    %v4200 = vunpack.c.h.b16 %v1066
    %v4201 = vunpack.c.l.b16 %v1067
    %v4202 = vunpack.c.h.b16 %v1067
    %v4203 = vunpack.c.l.b16 %v1068
    %v4204 = vunpack.c.h.b16 %v1068
    %v4205 = vunpack.c.l.b16 %v1069
    %v4206 = vunpack.c.h.b16 %v1069
    %v4207 = vunpack.c.l.b16 %v1070
    %v4208 = vunpack.c.h.b16 %v1070
    %v4209 = vunpack.c.l.b16 %v1071
    %v4210 = vunpack.c.h.b16 %v1071
    %v4211 = vunpack.c.l.b16 %v1072
    %v4212 = vunpack.c.h.b16 %v1072
    %v4213 = vunpack.c.l.b16 %v1073
    %v4214 = vunpack.c.h.b16 %v1073
    %v4215 = vunpack.c.l.b16 %v1074
    %v4216 = vunpack.c.h.b16 %v1074
    %v4217 = vunpack.c.l.b16 %v1075
    %v4218 = vunpack.c.h.b16 %v1075
    %v4219 = vunpack.c.l.b16 %v1076
    %v4220 = vunpack.c.h.b16 %v1076
    %v4221 = vunpack.c.l.b16 %v1077
    %v4222 = vunpack.c.h.b16 %v1077
    %v4223 = vunpack.c.l.b16 %v1078
    %v4224 = vunpack.c.h.b16 %v1078
    %v4225 = vunpack.c.l.b16 %v1079
    %v4226 = vunpack.c.h.b16 %v1079
    %v4227 = vunpack.c.l.b16 %v1080
    %v4228 = vunpack.c.h.b16 %v1080
    %v4229 = vunpack.c.l.b16 %v1081
    %v4230 = vunpack.c.h.b16 %v1081
    %v4231 = vunpack.c.l.b16 %v1082
    %v4232 = vunpack.c.h.b16 %v1082
    %v4233 = vunpack.c.l.b16 %v1083
    %v4234 = vunpack.c.h.b16 %v1083
    %v4235 = vunpack.c.l.b16 %v1084
    %v4236 = vunpack.c.h.b16 %v1084
    %v4237 = vunpack.c.l.b16 %v1085
    %v4238 = vunpack.c.h.b16 %v1085
    %v4239 = vunpack.c.l.b16 %v1086
    %v4240 = vunpack.c.h.b16 %v1086
    %v4241 = vunpack.c.l.b16 %v1087
    %v4242 = vunpack.c.h.b16 %v1087
    %v4243 = vunpack.c.l.b16 %v1088
    %v4244 = vunpack.c.h.b16 %v1088
    %v4245 = vunpack.c.l.b16 %v1089
    %v4246 = vunpack.c.h.b16 %v1089
    %v4247 = vunpack.c.l.b16 %v1090
    %v4248 = vunpack.c.h.b16 %v1090
    %v4249 = vunpack.c.l.b16 %v1091
    %v4250 = vunpack.c.h.b16 %v1091
    %v4251 = vunpack.c.l.b16 %v1092
    %v4252 = vunpack.c.h.b16 %v1092
    %v4253 = vunpack.c.l.b16 %v1093
    %v4254 = vunpack.c.h.b16 %v1093
    %v4255 = vunpack.c.l.b16 %v1094
    %v4256 = vunpack.c.h.b16 %v1094
    %v4257 = vunpack.c.l.b16 %v1095
    %v4258 = vunpack.c.h.b16 %v1095
    %v4259 = vunpack.c.l.b16 %v1096
    %v4260 = vunpack.c.h.b16 %v1096
    %v4261 = vunpack.c.l.b16 %v1097
    %v4262 = vunpack.c.h.b16 %v1097
    %v4263 = vunpack.c.l.b16 %v1098
    %v4264 = vunpack.c.h.b16 %v1098
    %v4265 = vunpack.c.l.b16 %v1099
    %v4266 = vunpack.c.h.b16 %v1099
    %v4267 = vunpack.c.l.b16 %v1100
    %v4268 = vunpack.c.h.b16 %v1100
    %v4269 = vunpack.c.l.b16 %v1101
    %v4270 = vunpack.c.h.b16 %v1101
    %v4271 = vunpack.c.l.b16 %v1102
    %v4272 = vunpack.c.h.b16 %v1102
    %v4273 = vpack.c.b16 %v2233, %v2225
    %v4274 = vpack.c.b16 %v2234, %v2226
    %v4275 = vpack.c.b16 %v2235, %v2227
    %v4276 = vpack.c.b16 %v2236, %v2228
    %v4277 = vpack.c.b16 %v2237, %v2229
    %v4278 = vpack.c.b16 %v2238, %v2230
    %v4279 = vpack.c.b16 %v2239, %v2231
    %v4280 = vpack.c.b16 %v2240, %v2232
    %v4281 = vpack.c.b16 %v2249, %v2241
    %v4282 = vpack.c.b16 %v2250, %v2242
    %v4283 = vpack.c.b16 %v2251, %v2243
    %v4284 = vpack.c.b16 %v2252, %v2244
    %v4285 = vpack.c.b16 %v2253, %v2245
    %v4286 = vpack.c.b16 %v2254, %v2246
    %v4287 = vpack.c.b16 %v2255, %v2247
    %v4288 = vpack.c.b16 %v2256, %v2248
    %v4289 = vpack.c.b16 %v2265, %v2257
    %v4290 = vpack.c.b16 %v2266, %v2258
    %v4291 = vpack.c.b16 %v2267, %v2259
    %v4292 = vpack.c.b16 %v2268, %v2260
    %v4293 = vpack.c.b16 %v2269, %v2261
    %v4294 = vpack.c.b16 %v2270, %v2262
    %v4295 = vpack.c.b16 %v2271, %v2263
    %v4296 = vpack.c.b16 %v2272, %v2264
    %v4297 = vpack.c.b16 %v2281, %v2273
    %v4298 = vpack.c.b16 %v2282, %v2274
    %v4299 = vpack.c.b16 %v2283, %v2275
    %v4300 = vpack.c.b16 %v2284, %v2276
    %v4301 = vpack.c.b16 %v2285, %v2277
    %v4302 = vpack.c.b16 %v2286, %v2278
    %v4303 = vpack.c.b16 %v2287, %v2279
    %v4304 = vpack.c.b16 %v2288, %v2280
    %v4305 = vpack.c.b16 %v2297, %v2289
    %v4306 = vpack.c.b16 %v2298, %v2290
    %v4307 = vpack.c.b16 %v2299, %v2291
    %v4308 = vpack.c.b16 %v2300, %v2292
    %v4309 = vpack.c.b16 %v2301, %v2293
    %v4310 = vpack.c.b16 %v2302, %v2294
    %v4311 = vpack.c.b16 %v2303, %v2295
    %v4312 = vpack.c.b16 %v2304, %v2296
    %v4313 = vpack.c.b16 %v2313, %v2305
    %v4314 = vpack.c.b16 %v2314, %v2306
    %v4315 = vpack.c.b16 %v2315, %v2307
    %v4316 = vpack.c.b16 %v2316, %v2308
    %v4317 = vpack.c.b16 %v2317, %v2309
    %v4318 = vpack.c.b16 %v2318, %v2310
    %v4319 = vpack.c.b16 %v2319, %v2311
    %v4320 = vpack.c.b16 %v2320, %v2312
    %v4321 = vpack.c.b16 %v2329, %v2321
    %v4322 = vpack.c.b16 %v2330, %v2322
    %v4323 = vpack.c.b16 %v2331, %v2323
    %v4324 = vpack.c.b16 %v2332, %v2324
    %v4325 = vpack.c.b16 %v2333, %v2325
    %v4326 = vpack.c.b16 %v2334, %v2326
    %v4327 = vpack.c.b16 %v2335, %v2327
    %v4328 = vpack.c.b16 %v2336, %v2328
    %v4329 = vpack.c.b16 %v2345, %v2337
    %v4330 = vpack.c.b16 %v2346, %v2338
    %v4331 = vpack.c.b16 %v2347, %v2339
    %v4332 = vpack.c.b16 %v2348, %v2340
    %v4333 = vpack.c.b16 %v2349, %v2341
    %v4334 = vpack.c.b16 %v2350, %v2342
    %v4335 = vpack.c.b16 %v2351, %v2343
    %v4336 = vpack.c.b16 %v2352, %v2344
    %v4337 = vpack.c.b16 %v2361, %v2353
    %v4338 = vpack.c.b16 %v2362, %v2354
    %v4339 = vpack.c.b16 %v2363, %v2355
    %v4340 = vpack.c.b16 %v2364, %v2356
    %v4341 = vpack.c.b16 %v2365, %v2357
    %v4342 = vpack.c.b16 %v2366, %v2358
    %v4343 = vpack.c.b16 %v2367, %v2359
    %v4344 = vpack.c.b16 %v2368, %v2360
    %v4345 = vpack.c.b16 %v2377, %v2369
    %v4346 = vpack.c.b16 %v2378, %v2370
    %v4347 = vpack.c.b16 %v2379, %v2371
    %v4348 = vpack.c.b16 %v2380, %v2372
    %v4349 = vpack.c.b16 %v2381, %v2373
    %v4350 = vpack.c.b16 %v2382, %v2374
    %v4351 = vpack.c.b16 %v2383, %v2375
    %v4352 = vpack.c.b16 %v2384, %v2376
    %v4353 = vpack.c.b16 %v2393, %v2385
    %v4354 = vpack.c.b16 %v2394, %v2386
    %v4355 = vpack.c.b16 %v2395, %v2387
    %v4356 = vpack.c.b16 %v2396, %v2388
    %v4357 = vpack.c.b16 %v2397, %v2389
    %v4358 = vpack.c.b16 %v2398, %v2390
    %v4359 = vpack.c.b16 %v2399, %v2391
    %v4360 = vpack.c.b16 %v2400, %v2392
    %v4361 = vpack.c.b16 %v2409, %v2401
    %v4362 = vpack.c.b16 %v2410, %v2402
    %v4363 = vpack.c.b16 %v2411, %v2403
    %v4364 = vpack.c.b16 %v2412, %v2404
    %v4365 = vpack.c.b16 %v2413, %v2405
    %v4366 = vpack.c.b16 %v2414, %v2406
    %v4367 = vpack.c.b16 %v2415, %v2407
    %v4368 = vpack.c.b16 %v2416, %v2408
    %v4369 = vpack.c.b16 %v2425, %v2417
    %v4370 = vpack.c.b16 %v2426, %v2418
    %v4371 = vpack.c.b16 %v2427, %v2419
    %v4372 = vpack.c.b16 %v2428, %v2420
    %v4373 = vpack.c.b16 %v2429, %v2421
    %v4374 = vpack.c.b16 %v2430, %v2422
    %v4375 = vpack.c.b16 %v2431, %v2423
    %v4376 = vpack.c.b16 %v2432, %v2424
    %v4377 = vpack.c.b16 %v2441, %v2433
    %v4378 = vpack.c.b16 %v2442, %v2434
    %v4379 = vpack.c.b16 %v2443, %v2435
    %v4380 = vpack.c.b16 %v2444, %v2436
    %v4381 = vpack.c.b16 %v2445, %v2437
    %v4382 = vpack.c.b16 %v2446, %v2438
    %v4383 = vpack.c.b16 %v2447, %v2439
    %v4384 = vpack.c.b16 %v2448, %v2440
    %v4385 = vpack.c.b16 %v2457, %v2449
    %v4386 = vpack.c.b16 %v2458, %v2450
    %v4387 = vpack.c.b16 %v2459, %v2451
    %v4388 = vpack.c.b16 %v2460, %v2452
    %v4389 = vpack.c.b16 %v2461, %v2453
    %v4390 = vpack.c.b16 %v2462, %v2454
    %v4391 = vpack.c.b16 %v2463, %v2455
    %v4392 = vpack.c.b16 %v2464, %v2456
    %v4393 = vpack.c.b16 %v2473, %v2465
    %v4394 = vpack.c.b16 %v2474, %v2466
    %v4395 = vpack.c.b16 %v2475, %v2467
    %v4396 = vpack.c.b16 %v2476, %v2468
    %v4397 = vpack.c.b16 %v2477, %v2469
    %v4398 = vpack.c.b16 %v2478, %v2470
    %v4399 = vpack.c.b16 %v2479, %v2471
    %v4400 = vpack.c.b16 %v2480, %v2472
    %v4401 = vpack.c.b16 %v2489, %v2481
    %v4402 = vpack.c.b16 %v2490, %v2482
    %v4403 = vpack.c.b16 %v2491, %v2483
    %v4404 = vpack.c.b16 %v2492, %v2484
    %v4405 = vpack.c.b16 %v2493, %v2485
    %v4406 = vpack.c.b16 %v2494, %v2486
    %v4407 = vpack.c.b16 %v2495, %v2487
    %v4408 = vpack.c.b16 %v2496, %v2488
    %v4409 = vpack.c.b16 %v2505, %v2497
    %v4410 = vpack.c.b16 %v2506, %v2498
    %v4411 = vpack.c.b16 %v2507, %v2499
    %v4412 = vpack.c.b16 %v2508, %v2500
    %v4413 = vpack.c.b16 %v2509, %v2501
    %v4414 = vpack.c.b16 %v2510, %v2502
    %v4415 = vpack.c.b16 %v2511, %v2503
    %v4416 = vpack.c.b16 %v2512, %v2504
    %v4417 = vpack.c.b16 %v2521, %v2513
    %v4418 = vpack.c.b16 %v2522, %v2514
    %v4419 = vpack.c.b16 %v2523, %v2515
    %v4420 = vpack.c.b16 %v2524, %v2516
    %v4421 = vpack.c.b16 %v2525, %v2517
    %v4422 = vpack.c.b16 %v2526, %v2518
    %v4423 = vpack.c.b16 %v2527, %v2519
    %v4424 = vpack.c.b16 %v2528, %v2520
    %v4425 = vpack.c.b16 %v2537, %v2529
    %v4426 = vpack.c.b16 %v2538, %v2530
    %v4427 = vpack.c.b16 %v2539, %v2531
    %v4428 = vpack.c.b16 %v2540, %v2532
    %v4429 = vpack.c.b16 %v2541, %v2533
    %v4430 = vpack.c.b16 %v2542, %v2534
    %v4431 = vpack.c.b16 %v2543, %v2535
    %v4432 = vpack.c.b16 %v2544, %v2536
    %v4433 = vpack.c.b16 %v2553, %v2545
    %v4434 = vpack.c.b16 %v2554, %v2546
    %v4435 = vpack.c.b16 %v2555, %v2547
    %v4436 = vpack.c.b16 %v2556, %v2548
    %v4437 = vpack.c.b16 %v2557, %v2549
    %v4438 = vpack.c.b16 %v2558, %v2550
    %v4439 = vpack.c.b16 %v2559, %v2551
    %v4440 = vpack.c.b16 %v2560, %v2552
    %v4441 = vpack.c.b16 %v2569, %v2561
    %v4442 = vpack.c.b16 %v2570, %v2562
    %v4443 = vpack.c.b16 %v2571, %v2563
    %v4444 = vpack.c.b16 %v2572, %v2564
    %v4445 = vpack.c.b16 %v2573, %v2565
    %v4446 = vpack.c.b16 %v2574, %v2566
    %v4447 = vpack.c.b16 %v2575, %v2567
    %v4448 = vpack.c.b16 %v2576, %v2568
    %v4449 = vpack.c.b16 %v2585, %v2577
    %v4450 = vpack.c.b16 %v2586, %v2578
    %v4451 = vpack.c.b16 %v2587, %v2579
    %v4452 = vpack.c.b16 %v2588, %v2580
    %v4453 = vpack.c.b16 %v2589, %v2581
    %v4454 = vpack.c.b16 %v2590, %v2582
    %v4455 = vpack.c.b16 %v2591, %v2583
    %v4456 = vpack.c.b16 %v2592, %v2584
    %v4457 = vpack.c.b16 %v2601, %v2593
    %v4458 = vpack.c.b16 %v2602, %v2594
    %v4459 = vpack.c.b16 %v2603, %v2595
    %v4460 = vpack.c.b16 %v2604, %v2596
    %v4461 = vpack.c.b16 %v2605, %v2597
    %v4462 = vpack.c.b16 %v2606, %v2598
    %v4463 = vpack.c.b16 %v2607, %v2599
    %v4464 = vpack.c.b16 %v2608, %v2600
    %v4465 = vpack.c.b16 %v2617, %v2609
    %v4466 = vpack.c.b16 %v2618, %v2610
    %v4467 = vpack.c.b16 %v2619, %v2611
    %v4468 = vpack.c.b16 %v2620, %v2612
    %v4469 = vpack.c.b16 %v2621, %v2613
    %v4470 = vpack.c.b16 %v2622, %v2614
    %v4471 = vpack.c.b16 %v2623, %v2615
    %v4472 = vpack.c.b16 %v2624, %v2616
    %v4473 = vpack.c.b16 %v2633, %v2625
    %v4474 = vpack.c.b16 %v2634, %v2626
    %v4475 = vpack.c.b16 %v2635, %v2627
    %v4476 = vpack.c.b16 %v2636, %v2628
    %v4477 = vpack.c.b16 %v2637, %v2629
    %v4478 = vpack.c.b16 %v2638, %v2630
    %v4479 = vpack.c.b16 %v2639, %v2631
    %v4480 = vpack.c.b16 %v2640, %v2632
    %v4481 = vpack.c.b16 %v2649, %v2641
    %v4482 = vpack.c.b16 %v2650, %v2642
    %v4483 = vpack.c.b16 %v2651, %v2643
    %v4484 = vpack.c.b16 %v2652, %v2644
    %v4485 = vpack.c.b16 %v2653, %v2645
    %v4486 = vpack.c.b16 %v2654, %v2646
    %v4487 = vpack.c.b16 %v2655, %v2647
    %v4488 = vpack.c.b16 %v2656, %v2648
    %v4489 = vpack.c.b16 %v2665, %v2657
    %v4490 = vpack.c.b16 %v2666, %v2658
    %v4491 = vpack.c.b16 %v2667, %v2659
    %v4492 = vpack.c.b16 %v2668, %v2660
    %v4493 = vpack.c.b16 %v2669, %v2661
    %v4494 = vpack.c.b16 %v2670, %v2662
    %v4495 = vpack.c.b16 %v2671, %v2663
    %v4496 = vpack.c.b16 %v2672, %v2664
    %v4497 = vpack.c.b16 %v2681, %v2673
    %v4498 = vpack.c.b16 %v2682, %v2674
    %v4499 = vpack.c.b16 %v2683, %v2675
    %v4500 = vpack.c.b16 %v2684, %v2676
    %v4501 = vpack.c.b16 %v2685, %v2677
    %v4502 = vpack.c.b16 %v2686, %v2678
    %v4503 = vpack.c.b16 %v2687, %v2679
    %v4504 = vpack.c.b16 %v2688, %v2680
    %v4505 = vpack.c.b16 %v2697, %v2689
    %v4506 = vpack.c.b16 %v2698, %v2690
    %v4507 = vpack.c.b16 %v2699, %v2691
    %v4508 = vpack.c.b16 %v2700, %v2692
    %v4509 = vpack.c.b16 %v2701, %v2693
    %v4510 = vpack.c.b16 %v2702, %v2694
    %v4511 = vpack.c.b16 %v2703, %v2695
    %v4512 = vpack.c.b16 %v2704, %v2696
    %v4513 = vpack.c.b16 %v2713, %v2705
    %v4514 = vpack.c.b16 %v2714, %v2706
    %v4515 = vpack.c.b16 %v2715, %v2707
    %v4516 = vpack.c.b16 %v2716, %v2708
    %v4517 = vpack.c.b16 %v2717, %v2709
    %v4518 = vpack.c.b16 %v2718, %v2710
    %v4519 = vpack.c.b16 %v2719, %v2711
    %v4520 = vpack.c.b16 %v2720, %v2712
    %v4521 = vpack.c.b16 %v2729, %v2721
    %v4522 = vpack.c.b16 %v2730, %v2722
    %v4523 = vpack.c.b16 %v2731, %v2723
    %v4524 = vpack.c.b16 %v2732, %v2724
    %v4525 = vpack.c.b16 %v2733, %v2725
    %v4526 = vpack.c.b16 %v2734, %v2726
    %v4527 = vpack.c.b16 %v2735, %v2727
    %v4528 = vpack.c.b16 %v2736, %v2728
    %v4529 = vpack.c.b16 %v2745, %v2737
    %v4530 = vpack.c.b16 %v2746, %v2738
    %v4531 = vpack.c.b16 %v2747, %v2739
    %v4532 = vpack.c.b16 %v2748, %v2740
    %v4533 = vpack.c.b16 %v2749, %v2741
    %v4534 = vpack.c.b16 %v2750, %v2742
    %v4535 = vpack.c.b16 %v2751, %v2743
    %v4536 = vpack.c.b16 %v2752, %v2744
    %v4537 = vpack.c.b16 %v2761, %v2753
    %v4538 = vpack.c.b16 %v2762, %v2754
    %v4539 = vpack.c.b16 %v2763, %v2755
    %v4540 = vpack.c.b16 %v2764, %v2756
    %v4541 = vpack.c.b16 %v2765, %v2757
    %v4542 = vpack.c.b16 %v2766, %v2758
    %v4543 = vpack.c.b16 %v2767, %v2759
    %v4544 = vpack.c.b16 %v2768, %v2760
    %v4545 = vpack.c.b16 %v2777, %v2769
    %v4546 = vpack.c.b16 %v2778, %v2770
    %v4547 = vpack.c.b16 %v2779, %v2771
    %v4548 = vpack.c.b16 %v2780, %v2772
    %v4549 = vpack.c.b16 %v2781, %v2773
    %v4550 = vpack.c.b16 %v2782, %v2774
    %v4551 = vpack.c.b16 %v2783, %v2775
    %v4552 = vpack.c.b16 %v2784, %v2776
    %v4553 = vpack.c.b16 %v2793, %v2785
    %v4554 = vpack.c.b16 %v2794, %v2786
    %v4555 = vpack.c.b16 %v2795, %v2787
    %v4556 = vpack.c.b16 %v2796, %v2788
    %v4557 = vpack.c.b16 %v2797, %v2789
    %v4558 = vpack.c.b16 %v2798, %v2790
    %v4559 = vpack.c.b16 %v2799, %v2791
    %v4560 = vpack.c.b16 %v2800, %v2792
    %v4561 = vpack.c.b16 %v2809, %v2801
    %v4562 = vpack.c.b16 %v2810, %v2802
    %v4563 = vpack.c.b16 %v2811, %v2803
    %v4564 = vpack.c.b16 %v2812, %v2804
    %v4565 = vpack.c.b16 %v2813, %v2805
    %v4566 = vpack.c.b16 %v2814, %v2806
    %v4567 = vpack.c.b16 %v2815, %v2807
    %v4568 = vpack.c.b16 %v2816, %v2808
    %v4569 = vpack.c.b16 %v2825, %v2817
    %v4570 = vpack.c.b16 %v2826, %v2818
    %v4571 = vpack.c.b16 %v2827, %v2819
    %v4572 = vpack.c.b16 %v2828, %v2820
    %v4573 = vpack.c.b16 %v2829, %v2821
    %v4574 = vpack.c.b16 %v2830, %v2822
    %v4575 = vpack.c.b16 %v2831, %v2823
    %v4576 = vpack.c.b16 %v2832, %v2824
    %v4577 = vpack.c.b16 %v2841, %v2833
    %v4578 = vpack.c.b16 %v2842, %v2834
    %v4579 = vpack.c.b16 %v2843, %v2835
    %v4580 = vpack.c.b16 %v2844, %v2836
    %v4581 = vpack.c.b16 %v2845, %v2837
    %v4582 = vpack.c.b16 %v2846, %v2838
    %v4583 = vpack.c.b16 %v2847, %v2839
    %v4584 = vpack.c.b16 %v2848, %v2840
    %v4585 = vpack.c.b16 %v2857, %v2849
    %v4586 = vpack.c.b16 %v2858, %v2850
    %v4587 = vpack.c.b16 %v2859, %v2851
    %v4588 = vpack.c.b16 %v2860, %v2852
    %v4589 = vpack.c.b16 %v2861, %v2853
    %v4590 = vpack.c.b16 %v2862, %v2854
    %v4591 = vpack.c.b16 %v2863, %v2855
    %v4592 = vpack.c.b16 %v2864, %v2856
    %v4593 = vpack.c.b16 %v2873, %v2865
    %v4594 = vpack.c.b16 %v2874, %v2866
    %v4595 = vpack.c.b16 %v2875, %v2867
    %v4596 = vpack.c.b16 %v2876, %v2868
    %v4597 = vpack.c.b16 %v2877, %v2869
    %v4598 = vpack.c.b16 %v2878, %v2870
    %v4599 = vpack.c.b16 %v2879, %v2871
    %v4600 = vpack.c.b16 %v2880, %v2872
    %v4601 = vpack.c.b16 %v2889, %v2881
    %v4602 = vpack.c.b16 %v2890, %v2882
    %v4603 = vpack.c.b16 %v2891, %v2883
    %v4604 = vpack.c.b16 %v2892, %v2884
    %v4605 = vpack.c.b16 %v2893, %v2885
    %v4606 = vpack.c.b16 %v2894, %v2886
    %v4607 = vpack.c.b16 %v2895, %v2887
    %v4608 = vpack.c.b16 %v2896, %v2888
    %v4609 = vpack.c.b16 %v2905, %v2897
    %v4610 = vpack.c.b16 %v2906, %v2898
    %v4611 = vpack.c.b16 %v2907, %v2899
    %v4612 = vpack.c.b16 %v2908, %v2900
    %v4613 = vpack.c.b16 %v2909, %v2901
    %v4614 = vpack.c.b16 %v2910, %v2902
    %v4615 = vpack.c.b16 %v2911, %v2903
    %v4616 = vpack.c.b16 %v2912, %v2904
    %v4617 = vpack.c.b16 %v2921, %v2913
    %v4618 = vpack.c.b16 %v2922, %v2914
    %v4619 = vpack.c.b16 %v2923, %v2915
    %v4620 = vpack.c.b16 %v2924, %v2916
    %v4621 = vpack.c.b16 %v2925, %v2917
    %v4622 = vpack.c.b16 %v2926, %v2918
    %v4623 = vpack.c.b16 %v2927, %v2919
    %v4624 = vpack.c.b16 %v2928, %v2920
    %v4625 = vpack.c.b16 %v2937, %v2929
    %v4626 = vpack.c.b16 %v2938, %v2930
    %v4627 = vpack.c.b16 %v2939, %v2931
    %v4628 = vpack.c.b16 %v2940, %v2932
    %v4629 = vpack.c.b16 %v2941, %v2933
    %v4630 = vpack.c.b16 %v2942, %v2934
    %v4631 = vpack.c.b16 %v2943, %v2935
    %v4632 = vpack.c.b16 %v2944, %v2936
    %v4633 = vpack.c.b16 %v2953, %v2945
    %v4634 = vpack.c.b16 %v2954, %v2946
    %v4635 = vpack.c.b16 %v2955, %v2947
    %v4636 = vpack.c.b16 %v2956, %v2948
    %v4637 = vpack.c.b16 %v2957, %v2949
    %v4638 = vpack.c.b16 %v2958, %v2950
    %v4639 = vpack.c.b16 %v2959, %v2951
    %v4640 = vpack.c.b16 %v2960, %v2952
    %v4641 = vpack.c.b16 %v2969, %v2961
    %v4642 = vpack.c.b16 %v2970, %v2962
    %v4643 = vpack.c.b16 %v2971, %v2963
    %v4644 = vpack.c.b16 %v2972, %v2964
    %v4645 = vpack.c.b16 %v2973, %v2965
    %v4646 = vpack.c.b16 %v2974, %v2966
    %v4647 = vpack.c.b16 %v2975, %v2967
    %v4648 = vpack.c.b16 %v2976, %v2968
    %v4649 = vpack.c.b16 %v2985, %v2977
    %v4650 = vpack.c.b16 %v2986, %v2978
    %v4651 = vpack.c.b16 %v2987, %v2979
    %v4652 = vpack.c.b16 %v2988, %v2980
    %v4653 = vpack.c.b16 %v2989, %v2981
    %v4654 = vpack.c.b16 %v2990, %v2982
    %v4655 = vpack.c.b16 %v2991, %v2983
    %v4656 = vpack.c.b16 %v2992, %v2984
    %v4657 = vpack.c.b16 %v3001, %v2993
    %v4658 = vpack.c.b16 %v3002, %v2994
    %v4659 = vpack.c.b16 %v3003, %v2995
    %v4660 = vpack.c.b16 %v3004, %v2996
    %v4661 = vpack.c.b16 %v3005, %v2997
    %v4662 = vpack.c.b16 %v3006, %v2998
    %v4663 = vpack.c.b16 %v3007, %v2999
    %v4664 = vpack.c.b16 %v3008, %v3000
    %v4665 = vpack.c.b16 %v3017, %v3009
    %v4666 = vpack.c.b16 %v3018, %v3010
    %v4667 = vpack.c.b16 %v3019, %v3011
    %v4668 = vpack.c.b16 %v3020, %v3012
    %v4669 = vpack.c.b16 %v3021, %v3013
    %v4670 = vpack.c.b16 %v3022, %v3014
    %v4671 = vpack.c.b16 %v3023, %v3015
    %v4672 = vpack.c.b16 %v3024, %v3016
    %v4673 = vpack.c.b16 %v3033, %v3025
    %v4674 = vpack.c.b16 %v3034, %v3026
    %v4675 = vpack.c.b16 %v3035, %v3027
    %v4676 = vpack.c.b16 %v3036, %v3028
    %v4677 = vpack.c.b16 %v3037, %v3029
    %v4678 = vpack.c.b16 %v3038, %v3030
    %v4679 = vpack.c.b16 %v3039, %v3031
    %v4680 = vpack.c.b16 %v3040, %v3032
    %v4681 = vpack.c.b16 %v3049, %v3041
    %v4682 = vpack.c.b16 %v3050, %v3042
    %v4683 = vpack.c.b16 %v3051, %v3043
    %v4684 = vpack.c.b16 %v3052, %v3044
    %v4685 = vpack.c.b16 %v3053, %v3045
    %v4686 = vpack.c.b16 %v3054, %v3046
    %v4687 = vpack.c.b16 %v3055, %v3047
    %v4688 = vpack.c.b16 %v3056, %v3048
    %v4689 = vpack.c.b16 %v3065, %v3057
    %v4690 = vpack.c.b16 %v3066, %v3058
    %v4691 = vpack.c.b16 %v3067, %v3059
    %v4692 = vpack.c.b16 %v3068, %v3060
    %v4693 = vpack.c.b16 %v3069, %v3061
    %v4694 = vpack.c.b16 %v3070, %v3062
    %v4695 = vpack.c.b16 %v3071, %v3063
    %v4696 = vpack.c.b16 %v3072, %v3064
    %v4697 = vpack.c.b16 %v3081, %v3073
    %v4698 = vpack.c.b16 %v3082, %v3074
    %v4699 = vpack.c.b16 %v3083, %v3075
    %v4700 = vpack.c.b16 %v3084, %v3076
    %v4701 = vpack.c.b16 %v3085, %v3077
    %v4702 = vpack.c.b16 %v3086, %v3078
    %v4703 = vpack.c.b16 %v3087, %v3079
    %v4704 = vpack.c.b16 %v3088, %v3080
    %v4705 = vpack.c.b16 %v3097, %v3089
    %v4706 = vpack.c.b16 %v3098, %v3090
    %v4707 = vpack.c.b16 %v3099, %v3091
    %v4708 = vpack.c.b16 %v3100, %v3092
    %v4709 = vpack.c.b16 %v3101, %v3093
    %v4710 = vpack.c.b16 %v3102, %v3094
    %v4711 = vpack.c.b16 %v3103, %v3095
    %v4712 = vpack.c.b16 %v3104, %v3096
    %v4713 = vpack.c.b16 %v3113, %v3105
    %v4714 = vpack.c.b16 %v3114, %v3106
    %v4715 = vpack.c.b16 %v3115, %v3107
    %v4716 = vpack.c.b16 %v3116, %v3108
    %v4717 = vpack.c.b16 %v3117, %v3109
    %v4718 = vpack.c.b16 %v3118, %v3110
    %v4719 = vpack.c.b16 %v3119, %v3111
    %v4720 = vpack.c.b16 %v3120, %v3112
    %v4721 = vpack.c.b16 %v3129, %v3121
    %v4722 = vpack.c.b16 %v3130, %v3122
    %v4723 = vpack.c.b16 %v3131, %v3123
    %v4724 = vpack.c.b16 %v3132, %v3124
    %v4725 = vpack.c.b16 %v3133, %v3125
    %v4726 = vpack.c.b16 %v3134, %v3126
    %v4727 = vpack.c.b16 %v3135, %v3127
    %v4728 = vpack.c.b16 %v3136, %v3128
    %v4729 = vpack.c.b16 %v3145, %v3137
    %v4730 = vpack.c.b16 %v3146, %v3138
    %v4731 = vpack.c.b16 %v3147, %v3139
    %v4732 = vpack.c.b16 %v3148, %v3140
    %v4733 = vpack.c.b16 %v3149, %v3141
    %v4734 = vpack.c.b16 %v3150, %v3142
    %v4735 = vpack.c.b16 %v3151, %v3143
    %v4736 = vpack.c.b16 %v3152, %v3144
    %v4737 = vpack.c.b16 %v3161, %v3153
    %v4738 = vpack.c.b16 %v3162, %v3154
    %v4739 = vpack.c.b16 %v3163, %v3155
    %v4740 = vpack.c.b16 %v3164, %v3156
    %v4741 = vpack.c.b16 %v3165, %v3157
    %v4742 = vpack.c.b16 %v3166, %v3158
    %v4743 = vpack.c.b16 %v3167, %v3159
    %v4744 = vpack.c.b16 %v3168, %v3160
    %v4745 = vpack.c.b16 %v3177, %v3169
    %v4746 = vpack.c.b16 %v3178, %v3170
    %v4747 = vpack.c.b16 %v3179, %v3171
    %v4748 = vpack.c.b16 %v3180, %v3172
    %v4749 = vpack.c.b16 %v3181, %v3173
    %v4750 = vpack.c.b16 %v3182, %v3174
    %v4751 = vpack.c.b16 %v3183, %v3175
    %v4752 = vpack.c.b16 %v3184, %v3176
    %v4753 = vpack.c.b16 %v3193, %v3185
    %v4754 = vpack.c.b16 %v3194, %v3186
    %v4755 = vpack.c.b16 %v3195, %v3187
    %v4756 = vpack.c.b16 %v3196, %v3188
    %v4757 = vpack.c.b16 %v3197, %v3189
    %v4758 = vpack.c.b16 %v3198, %v3190
    %v4759 = vpack.c.b16 %v3199, %v3191
    %v4760 = vpack.c.b16 %v3200, %v3192
    %v4761 = vpack.c.b16 %v3209, %v3201
    %v4762 = vpack.c.b16 %v3210, %v3202
    %v4763 = vpack.c.b16 %v3211, %v3203
    %v4764 = vpack.c.b16 %v3212, %v3204
    %v4765 = vpack.c.b16 %v3213, %v3205
    %v4766 = vpack.c.b16 %v3214, %v3206
    %v4767 = vpack.c.b16 %v3215, %v3207
    %v4768 = vpack.c.b16 %v3216, %v3208
    %v4769 = vpack.c.b16 %v3225, %v3217
    %v4770 = vpack.c.b16 %v3226, %v3218
    %v4771 = vpack.c.b16 %v3227, %v3219
    %v4772 = vpack.c.b16 %v3228, %v3220
    %v4773 = vpack.c.b16 %v3229, %v3221
    %v4774 = vpack.c.b16 %v3230, %v3222
    %v4775 = vpack.c.b16 %v3231, %v3223
    %v4776 = vpack.c.b16 %v3232, %v3224
    %v4777 = vpack.c.b16 %v3241, %v3233
    %v4778 = vpack.c.b16 %v3242, %v3234
    %v4779 = vpack.c.b16 %v3243, %v3235
    %v4780 = vpack.c.b16 %v3244, %v3236
    %v4781 = vpack.c.b16 %v3245, %v3237
    %v4782 = vpack.c.b16 %v3246, %v3238
    %v4783 = vpack.c.b16 %v3247, %v3239
    %v4784 = vpack.c.b16 %v3248, %v3240
    %v4785 = vpack.c.b16 %v3257, %v3249
    %v4786 = vpack.c.b16 %v3258, %v3250
    %v4787 = vpack.c.b16 %v3259, %v3251
    %v4788 = vpack.c.b16 %v3260, %v3252
    %v4789 = vpack.c.b16 %v3261, %v3253
    %v4790 = vpack.c.b16 %v3262, %v3254
    %v4791 = vpack.c.b16 %v3263, %v3255
    %v4792 = vpack.c.b16 %v3264, %v3256
    %v4793 = vpack.c.b16 %v3273, %v3265
    %v4794 = vpack.c.b16 %v3274, %v3266
    %v4795 = vpack.c.b16 %v3275, %v3267
    %v4796 = vpack.c.b16 %v3276, %v3268
    %v4797 = vpack.c.b16 %v3277, %v3269
    %v4798 = vpack.c.b16 %v3278, %v3270
    %v4799 = vpack.c.b16 %v3279, %v3271
    %v4800 = vpack.c.b16 %v3280, %v3272
    %v4801 = vpack.c.b16 %v3289, %v3281
    %v4802 = vpack.c.b16 %v3290, %v3282
    %v4803 = vpack.c.b16 %v3291, %v3283
    %v4804 = vpack.c.b16 %v3292, %v3284
    %v4805 = vpack.c.b16 %v3293, %v3285
    %v4806 = vpack.c.b16 %v3294, %v3286
    %v4807 = vpack.c.b16 %v3295, %v3287
    %v4808 = vpack.c.b16 %v3296, %v3288
    %v4809 = vpack.c.b16 %v3305, %v3297
    %v4810 = vpack.c.b16 %v3306, %v3298
    %v4811 = vpack.c.b16 %v3307, %v3299
    %v4812 = vpack.c.b16 %v3308, %v3300
    %v4813 = vpack.c.b16 %v3309, %v3301
    %v4814 = vpack.c.b16 %v3310, %v3302
    %v4815 = vpack.c.b16 %v3311, %v3303
    %v4816 = vpack.c.b16 %v3312, %v3304
    %v4817 = vpack.c.b16 %v3321, %v3313
    %v4818 = vpack.c.b16 %v3322, %v3314
    %v4819 = vpack.c.b16 %v3323, %v3315
    %v4820 = vpack.c.b16 %v3324, %v3316
    %v4821 = vpack.c.b16 %v3325, %v3317
    %v4822 = vpack.c.b16 %v3326, %v3318
    %v4823 = vpack.c.b16 %v3327, %v3319
    %v4824 = vpack.c.b16 %v3328, %v3320
    %v4825 = vpack.c.b16 %v3337, %v3329
    %v4826 = vpack.c.b16 %v3338, %v3330
    %v4827 = vpack.c.b16 %v3339, %v3331
    %v4828 = vpack.c.b16 %v3340, %v3332
    %v4829 = vpack.c.b16 %v3341, %v3333
    %v4830 = vpack.c.b16 %v3342, %v3334
    %v4831 = vpack.c.b16 %v3343, %v3335
    %v4832 = vpack.c.b16 %v3344, %v3336
    %v4833 = vpack.c.b16 %v3353, %v3345
    %v4834 = vpack.c.b16 %v3354, %v3346
    %v4835 = vpack.c.b16 %v3355, %v3347
    %v4836 = vpack.c.b16 %v3356, %v3348
    %v4837 = vpack.c.b16 %v3357, %v3349
    %v4838 = vpack.c.b16 %v3358, %v3350
    %v4839 = vpack.c.b16 %v3359, %v3351
    %v4840 = vpack.c.b16 %v3360, %v3352
    %v4841 = vpack.c.b16 %v3369, %v3361
    %v4842 = vpack.c.b16 %v3370, %v3362
    %v4843 = vpack.c.b16 %v3371, %v3363
    %v4844 = vpack.c.b16 %v3372, %v3364
    %v4845 = vpack.c.b16 %v3373, %v3365
    %v4846 = vpack.c.b16 %v3374, %v3366
    %v4847 = vpack.c.b16 %v3375, %v3367
    %v4848 = vpack.c.b16 %v3376, %v3368
    %v4849 = vpack.c.b16 %v3385, %v3377
    %v4850 = vpack.c.b16 %v3386, %v3378
    %v4851 = vpack.c.b16 %v3387, %v3379
    %v4852 = vpack.c.b16 %v3388, %v3380
    %v4853 = vpack.c.b16 %v3389, %v3381
    %v4854 = vpack.c.b16 %v3390, %v3382
    %v4855 = vpack.c.b16 %v3391, %v3383
    %v4856 = vpack.c.b16 %v3392, %v3384
    %v4857 = vpack.c.b16 %v3401, %v3393
    %v4858 = vpack.c.b16 %v3402, %v3394
    %v4859 = vpack.c.b16 %v3403, %v3395
    %v4860 = vpack.c.b16 %v3404, %v3396
    %v4861 = vpack.c.b16 %v3405, %v3397
    %v4862 = vpack.c.b16 %v3406, %v3398
    %v4863 = vpack.c.b16 %v3407, %v3399
    %v4864 = vpack.c.b16 %v3408, %v3400
    %v4865 = vpack.c.b16 %v3417, %v3409
    %v4866 = vpack.c.b16 %v3418, %v3410
    %v4867 = vpack.c.b16 %v3419, %v3411
    %v4868 = vpack.c.b16 %v3420, %v3412
    %v4869 = vpack.c.b16 %v3421, %v3413
    %v4870 = vpack.c.b16 %v3422, %v3414
    %v4871 = vpack.c.b16 %v3423, %v3415
    %v4872 = vpack.c.b16 %v3424, %v3416
    %v4873 = vpack.c.b16 %v3433, %v3425
    %v4874 = vpack.c.b16 %v3434, %v3426
    %v4875 = vpack.c.b16 %v3435, %v3427
    %v4876 = vpack.c.b16 %v3436, %v3428
    %v4877 = vpack.c.b16 %v3437, %v3429
    %v4878 = vpack.c.b16 %v3438, %v3430
    %v4879 = vpack.c.b16 %v3439, %v3431
    %v4880 = vpack.c.b16 %v3440, %v3432
    %v4881 = vpack.c.b16 %v3449, %v3441
    %v4882 = vpack.c.b16 %v3450, %v3442
    %v4883 = vpack.c.b16 %v3451, %v3443
    %v4884 = vpack.c.b16 %v3452, %v3444
    %v4885 = vpack.c.b16 %v3453, %v3445
    %v4886 = vpack.c.b16 %v3454, %v3446
    %v4887 = vpack.c.b16 %v3455, %v3447
    %v4888 = vpack.c.b16 %v3456, %v3448
    %v4889 = vpack.c.b16 %v3465, %v3457
    %v4890 = vpack.c.b16 %v3466, %v3458
    %v4891 = vpack.c.b16 %v3467, %v3459
    %v4892 = vpack.c.b16 %v3468, %v3460
    %v4893 = vpack.c.b16 %v3469, %v3461
    %v4894 = vpack.c.b16 %v3470, %v3462
    %v4895 = vpack.c.b16 %v3471, %v3463
    %v4896 = vpack.c.b16 %v3472, %v3464
    %v4897 = vpack.c.b16 %v3481, %v3473
    %v4898 = vpack.c.b16 %v3482, %v3474
    %v4899 = vpack.c.b16 %v3483, %v3475
    %v4900 = vpack.c.b16 %v3484, %v3476
    %v4901 = vpack.c.b16 %v3485, %v3477
    %v4902 = vpack.c.b16 %v3486, %v3478
    %v4903 = vpack.c.b16 %v3487, %v3479
    %v4904 = vpack.c.b16 %v3488, %v3480
    %v4905 = vpack.c.b16 %v3497, %v3489
    %v4906 = vpack.c.b16 %v3498, %v3490
    %v4907 = vpack.c.b16 %v3499, %v3491
    %v4908 = vpack.c.b16 %v3500, %v3492
    %v4909 = vpack.c.b16 %v3501, %v3493
    %v4910 = vpack.c.b16 %v3502, %v3494
    %v4911 = vpack.c.b16 %v3503, %v3495
    %v4912 = vpack.c.b16 %v3504, %v3496
    %v4913 = vpack.c.b16 %v3513, %v3505
    %v4914 = vpack.c.b16 %v3514, %v3506
    %v4915 = vpack.c.b16 %v3515, %v3507
    %v4916 = vpack.c.b16 %v3516, %v3508
    %v4917 = vpack.c.b16 %v3517, %v3509
    %v4918 = vpack.c.b16 %v3518, %v3510
    %v4919 = vpack.c.b16 %v3519, %v3511
    %v4920 = vpack.c.b16 %v3520, %v3512
    %v4921 = vpack.c.b16 %v3529, %v3521
    %v4922 = vpack.c.b16 %v3530, %v3522
    %v4923 = vpack.c.b16 %v3531, %v3523
    %v4924 = vpack.c.b16 %v3532, %v3524
    %v4925 = vpack.c.b16 %v3533, %v3525
    %v4926 = vpack.c.b16 %v3534, %v3526
    %v4927 = vpack.c.b16 %v3535, %v3527
    %v4928 = vpack.c.b16 %v3536, %v3528
    %v4929 = vpack.c.b16 %v3545, %v3537
    %v4930 = vpack.c.b16 %v3546, %v3538
    %v4931 = vpack.c.b16 %v3547, %v3539
    %v4932 = vpack.c.b16 %v3548, %v3540
    %v4933 = vpack.c.b16 %v3549, %v3541
    %v4934 = vpack.c.b16 %v3550, %v3542
    %v4935 = vpack.c.b16 %v3551, %v3543
    %v4936 = vpack.c.b16 %v3552, %v3544
    %v4937 = vpack.c.b16 %v3561, %v3553
    %v4938 = vpack.c.b16 %v3562, %v3554
    %v4939 = vpack.c.b16 %v3563, %v3555
    %v4940 = vpack.c.b16 %v3564, %v3556
    %v4941 = vpack.c.b16 %v3565, %v3557
    %v4942 = vpack.c.b16 %v3566, %v3558
    %v4943 = vpack.c.b16 %v3567, %v3559
    %v4944 = vpack.c.b16 %v3568, %v3560
    %v4945 = vpack.c.b16 %v3577, %v3569
    %v4946 = vpack.c.b16 %v3578, %v3570
    %v4947 = vpack.c.b16 %v3579, %v3571
    %v4948 = vpack.c.b16 %v3580, %v3572
    %v4949 = vpack.c.b16 %v3581, %v3573
    %v4950 = vpack.c.b16 %v3582, %v3574
    %v4951 = vpack.c.b16 %v3583, %v3575
    %v4952 = vpack.c.b16 %v3584, %v3576
    %v4953 = vpack.c.b16 %v3593, %v3585
    %v4954 = vpack.c.b16 %v3594, %v3586
    %v4955 = vpack.c.b16 %v3595, %v3587
    %v4956 = vpack.c.b16 %v3596, %v3588
    %v4957 = vpack.c.b16 %v3597, %v3589
    %v4958 = vpack.c.b16 %v3598, %v3590
    %v4959 = vpack.c.b16 %v3599, %v3591
    %v4960 = vpack.c.b16 %v3600, %v3592
    %v4961 = vpack.c.b16 %v3609, %v3601
    %v4962 = vpack.c.b16 %v3610, %v3602
    %v4963 = vpack.c.b16 %v3611, %v3603
    %v4964 = vpack.c.b16 %v3612, %v3604
    %v4965 = vpack.c.b16 %v3613, %v3605
    %v4966 = vpack.c.b16 %v3614, %v3606
    %v4967 = vpack.c.b16 %v3615, %v3607
    %v4968 = vpack.c.b16 %v3616, %v3608
    %v4969 = vpack.c.b16 %v3625, %v3617
    %v4970 = vpack.c.b16 %v3626, %v3618
    %v4971 = vpack.c.b16 %v3627, %v3619
    %v4972 = vpack.c.b16 %v3628, %v3620
    %v4973 = vpack.c.b16 %v3629, %v3621
    %v4974 = vpack.c.b16 %v3630, %v3622
    %v4975 = vpack.c.b16 %v3631, %v3623
    %v4976 = vpack.c.b16 %v3632, %v3624
    %v4977 = vpack.c.b16 %v3641, %v3633
    %v4978 = vpack.c.b16 %v3642, %v3634
    %v4979 = vpack.c.b16 %v3643, %v3635
    %v4980 = vpack.c.b16 %v3644, %v3636
    %v4981 = vpack.c.b16 %v3645, %v3637
    %v4982 = vpack.c.b16 %v3646, %v3638
    %v4983 = vpack.c.b16 %v3647, %v3639
    %v4984 = vpack.c.b16 %v3648, %v3640
    %v4985 = vpack.c.b16 %v3657, %v3649
    %v4986 = vpack.c.b16 %v3658, %v3650
    %v4987 = vpack.c.b16 %v3659, %v3651
    %v4988 = vpack.c.b16 %v3660, %v3652
    %v4989 = vpack.c.b16 %v3661, %v3653
    %v4990 = vpack.c.b16 %v3662, %v3654
    %v4991 = vpack.c.b16 %v3663, %v3655
    %v4992 = vpack.c.b16 %v3664, %v3656
    %v4993 = vpack.c.b16 %v3673, %v3665
    %v4994 = vpack.c.b16 %v3674, %v3666
    %v4995 = vpack.c.b16 %v3675, %v3667
    %v4996 = vpack.c.b16 %v3676, %v3668
    %v4997 = vpack.c.b16 %v3677, %v3669
    %v4998 = vpack.c.b16 %v3678, %v3670
    %v4999 = vpack.c.b16 %v3679, %v3671
    %v5000 = vpack.c.b16 %v3680, %v3672
    %v5001 = vpack.c.b16 %v3689, %v3681
    %v5002 = vpack.c.b16 %v3690, %v3682
    %v5003 = vpack.c.b16 %v3691, %v3683
    %v5004 = vpack.c.b16 %v3692, %v3684
    %v5005 = vpack.c.b16 %v3693, %v3685
    %v5006 = vpack.c.b16 %v3694, %v3686
    %v5007 = vpack.c.b16 %v3695, %v3687
    %v5008 = vpack.c.b16 %v3696, %v3688
    %v5009 = vpack.c.b16 %v3705, %v3697
    %v5010 = vpack.c.b16 %v3706, %v3698
    %v5011 = vpack.c.b16 %v3707, %v3699
    %v5012 = vpack.c.b16 %v3708, %v3700
    %v5013 = vpack.c.b16 %v3709, %v3701
    %v5014 = vpack.c.b16 %v3710, %v3702
    %v5015 = vpack.c.b16 %v3711, %v3703
    %v5016 = vpack.c.b16 %v3712, %v3704
    %v5017 = vpack.c.b16 %v3721, %v3713
    %v5018 = vpack.c.b16 %v3722, %v3714
    %v5019 = vpack.c.b16 %v3723, %v3715
    %v5020 = vpack.c.b16 %v3724, %v3716
    %v5021 = vpack.c.b16 %v3725, %v3717
    %v5022 = vpack.c.b16 %v3726, %v3718
    %v5023 = vpack.c.b16 %v3727, %v3719
    %v5024 = vpack.c.b16 %v3728, %v3720
    %v5025 = vpack.c.b16 %v3737, %v3729
    %v5026 = vpack.c.b16 %v3738, %v3730
    %v5027 = vpack.c.b16 %v3739, %v3731
    %v5028 = vpack.c.b16 %v3740, %v3732
    %v5029 = vpack.c.b16 %v3741, %v3733
    %v5030 = vpack.c.b16 %v3742, %v3734
    %v5031 = vpack.c.b16 %v3743, %v3735
    %v5032 = vpack.c.b16 %v3744, %v3736
    %v5033 = vpack.c.b16 %v3753, %v3745
    %v5034 = vpack.c.b16 %v3754, %v3746
    %v5035 = vpack.c.b16 %v3755, %v3747
    %v5036 = vpack.c.b16 %v3756, %v3748
    %v5037 = vpack.c.b16 %v3757, %v3749
    %v5038 = vpack.c.b16 %v3758, %v3750
    %v5039 = vpack.c.b16 %v3759, %v3751
    %v5040 = vpack.c.b16 %v3760, %v3752
    %v5041 = vpack.c.b16 %v3769, %v3761
    %v5042 = vpack.c.b16 %v3770, %v3762
    %v5043 = vpack.c.b16 %v3771, %v3763
    %v5044 = vpack.c.b16 %v3772, %v3764
    %v5045 = vpack.c.b16 %v3773, %v3765
    %v5046 = vpack.c.b16 %v3774, %v3766
    %v5047 = vpack.c.b16 %v3775, %v3767
    %v5048 = vpack.c.b16 %v3776, %v3768
    %v5049 = vpack.c.b16 %v3785, %v3777
    %v5050 = vpack.c.b16 %v3786, %v3778
    %v5051 = vpack.c.b16 %v3787, %v3779
    %v5052 = vpack.c.b16 %v3788, %v3780
    %v5053 = vpack.c.b16 %v3789, %v3781
    %v5054 = vpack.c.b16 %v3790, %v3782
    %v5055 = vpack.c.b16 %v3791, %v3783
    %v5056 = vpack.c.b16 %v3792, %v3784
    %v5057 = vpack.c.b16 %v3801, %v3793
    %v5058 = vpack.c.b16 %v3802, %v3794
    %v5059 = vpack.c.b16 %v3803, %v3795
    %v5060 = vpack.c.b16 %v3804, %v3796
    %v5061 = vpack.c.b16 %v3805, %v3797
    %v5062 = vpack.c.b16 %v3806, %v3798
    %v5063 = vpack.c.b16 %v3807, %v3799
    %v5064 = vpack.c.b16 %v3808, %v3800
    %v5065 = vpack.c.b16 %v3817, %v3809
    %v5066 = vpack.c.b16 %v3818, %v3810
    %v5067 = vpack.c.b16 %v3819, %v3811
    %v5068 = vpack.c.b16 %v3820, %v3812
    %v5069 = vpack.c.b16 %v3821, %v3813
    %v5070 = vpack.c.b16 %v3822, %v3814
    %v5071 = vpack.c.b16 %v3823, %v3815
    %v5072 = vpack.c.b16 %v3824, %v3816
    %v5073 = vpack.c.b16 %v3833, %v3825
    %v5074 = vpack.c.b16 %v3834, %v3826
    %v5075 = vpack.c.b16 %v3835, %v3827
    %v5076 = vpack.c.b16 %v3836, %v3828
    %v5077 = vpack.c.b16 %v3837, %v3829
    %v5078 = vpack.c.b16 %v3838, %v3830
    %v5079 = vpack.c.b16 %v3839, %v3831
    %v5080 = vpack.c.b16 %v3840, %v3832
    %v5081 = vpack.c.b16 %v3849, %v3841
    %v5082 = vpack.c.b16 %v3850, %v3842
    %v5083 = vpack.c.b16 %v3851, %v3843
    %v5084 = vpack.c.b16 %v3852, %v3844
    %v5085 = vpack.c.b16 %v3853, %v3845
    %v5086 = vpack.c.b16 %v3854, %v3846
    %v5087 = vpack.c.b16 %v3855, %v3847
    %v5088 = vpack.c.b16 %v3856, %v3848
    %v5089 = vpack.c.b16 %v3865, %v3857
    %v5090 = vpack.c.b16 %v3866, %v3858
    %v5091 = vpack.c.b16 %v3867, %v3859
    %v5092 = vpack.c.b16 %v3868, %v3860
    %v5093 = vpack.c.b16 %v3869, %v3861
    %v5094 = vpack.c.b16 %v3870, %v3862
    %v5095 = vpack.c.b16 %v3871, %v3863
    %v5096 = vpack.c.b16 %v3872, %v3864
    %v5097 = vpack.c.b16 %v3881, %v3873
    %v5098 = vpack.c.b16 %v3882, %v3874
    %v5099 = vpack.c.b16 %v3883, %v3875
    %v5100 = vpack.c.b16 %v3884, %v3876
    %v5101 = vpack.c.b16 %v3885, %v3877
    %v5102 = vpack.c.b16 %v3886, %v3878
    %v5103 = vpack.c.b16 %v3887, %v3879
    %v5104 = vpack.c.b16 %v3888, %v3880
    %v5105 = vpack.c.b16 %v3897, %v3889
    %v5106 = vpack.c.b16 %v3898, %v3890
    %v5107 = vpack.c.b16 %v3899, %v3891
    %v5108 = vpack.c.b16 %v3900, %v3892
    %v5109 = vpack.c.b16 %v3901, %v3893
    %v5110 = vpack.c.b16 %v3902, %v3894
    %v5111 = vpack.c.b16 %v3903, %v3895
    %v5112 = vpack.c.b16 %v3904, %v3896
    %v5113 = vpack.c.b16 %v3913, %v3905
    %v5114 = vpack.c.b16 %v3914, %v3906
    %v5115 = vpack.c.b16 %v3915, %v3907
    %v5116 = vpack.c.b16 %v3916, %v3908
    %v5117 = vpack.c.b16 %v3917, %v3909
    %v5118 = vpack.c.b16 %v3918, %v3910
    %v5119 = vpack.c.b16 %v3919, %v3911
    %v5120 = vpack.c.b16 %v3920, %v3912
    %v5121 = vpack.c.b16 %v3929, %v3921
    %v5122 = vpack.c.b16 %v3930, %v3922
    %v5123 = vpack.c.b16 %v3931, %v3923
    %v5124 = vpack.c.b16 %v3932, %v3924
    %v5125 = vpack.c.b16 %v3933, %v3925
    %v5126 = vpack.c.b16 %v3934, %v3926
    %v5127 = vpack.c.b16 %v3935, %v3927
    %v5128 = vpack.c.b16 %v3936, %v3928
    %v5129 = vpack.c.b16 %v3945, %v3937
    %v5130 = vpack.c.b16 %v3946, %v3938
    %v5131 = vpack.c.b16 %v3947, %v3939
    %v5132 = vpack.c.b16 %v3948, %v3940
    %v5133 = vpack.c.b16 %v3949, %v3941
    %v5134 = vpack.c.b16 %v3950, %v3942
    %v5135 = vpack.c.b16 %v3951, %v3943
    %v5136 = vpack.c.b16 %v3952, %v3944
    %v5137 = vpack.c.b16 %v3961, %v3953
    %v5138 = vpack.c.b16 %v3962, %v3954
    %v5139 = vpack.c.b16 %v3963, %v3955
    %v5140 = vpack.c.b16 %v3964, %v3956
    %v5141 = vpack.c.b16 %v3965, %v3957
    %v5142 = vpack.c.b16 %v3966, %v3958
    %v5143 = vpack.c.b16 %v3967, %v3959
    %v5144 = vpack.c.b16 %v3968, %v3960
    %v5145 = vpack.c.b16 %v3977, %v3969
    %v5146 = vpack.c.b16 %v3978, %v3970
    %v5147 = vpack.c.b16 %v3979, %v3971
    %v5148 = vpack.c.b16 %v3980, %v3972
    %v5149 = vpack.c.b16 %v3981, %v3973
    %v5150 = vpack.c.b16 %v3982, %v3974
    %v5151 = vpack.c.b16 %v3983, %v3975
    %v5152 = vpack.c.b16 %v3984, %v3976
    %v5153 = vpack.c.b16 %v3993, %v3985
    %v5154 = vpack.c.b16 %v3994, %v3986
    %v5155 = vpack.c.b16 %v3995, %v3987
    %v5156 = vpack.c.b16 %v3996, %v3988
    %v5157 = vpack.c.b16 %v3997, %v3989
    %v5158 = vpack.c.b16 %v3998, %v3990
    %v5159 = vpack.c.b16 %v3999, %v3991
    %v5160 = vpack.c.b16 %v4000, %v3992
    %v5161 = vpack.c.b16 %v4009, %v4001
    %v5162 = vpack.c.b16 %v4010, %v4002
    %v5163 = vpack.c.b16 %v4011, %v4003
    %v5164 = vpack.c.b16 %v4012, %v4004
    %v5165 = vpack.c.b16 %v4013, %v4005
    %v5166 = vpack.c.b16 %v4014, %v4006
    %v5167 = vpack.c.b16 %v4015, %v4007
    %v5168 = vpack.c.b16 %v4016, %v4008
    %v5169 = vpack.c.b16 %v4025, %v4017
    %v5170 = vpack.c.b16 %v4026, %v4018
    %v5171 = vpack.c.b16 %v4027, %v4019
    %v5172 = vpack.c.b16 %v4028, %v4020
    %v5173 = vpack.c.b16 %v4029, %v4021
    %v5174 = vpack.c.b16 %v4030, %v4022
    %v5175 = vpack.c.b16 %v4031, %v4023
    %v5176 = vpack.c.b16 %v4032, %v4024
    %v5177 = vpack.c.b16 %v4041, %v4033
    %v5178 = vpack.c.b16 %v4042, %v4034
    %v5179 = vpack.c.b16 %v4043, %v4035
    %v5180 = vpack.c.b16 %v4044, %v4036
    %v5181 = vpack.c.b16 %v4045, %v4037
    %v5182 = vpack.c.b16 %v4046, %v4038
    %v5183 = vpack.c.b16 %v4047, %v4039
    %v5184 = vpack.c.b16 %v4048, %v4040
    %v5185 = vpack.c.b16 %v4057, %v4049
    %v5186 = vpack.c.b16 %v4058, %v4050
    %v5187 = vpack.c.b16 %v4059, %v4051
    %v5188 = vpack.c.b16 %v4060, %v4052
    %v5189 = vpack.c.b16 %v4061, %v4053
    %v5190 = vpack.c.b16 %v4062, %v4054
    %v5191 = vpack.c.b16 %v4063, %v4055
    %v5192 = vpack.c.b16 %v4064, %v4056
    %v5193 = vpack.c.b16 %v4073, %v4065
    %v5194 = vpack.c.b16 %v4074, %v4066
    %v5195 = vpack.c.b16 %v4075, %v4067
    %v5196 = vpack.c.b16 %v4076, %v4068
    %v5197 = vpack.c.b16 %v4077, %v4069
    %v5198 = vpack.c.b16 %v4078, %v4070
    %v5199 = vpack.c.b16 %v4079, %v4071
    %v5200 = vpack.c.b16 %v4080, %v4072
    %v5201 = vpack.c.b16 %v4089, %v4081
    %v5202 = vpack.c.b16 %v4090, %v4082
    %v5203 = vpack.c.b16 %v4091, %v4083
    %v5204 = vpack.c.b16 %v4092, %v4084
    %v5205 = vpack.c.b16 %v4093, %v4085
    %v5206 = vpack.c.b16 %v4094, %v4086
    %v5207 = vpack.c.b16 %v4095, %v4087
    %v5208 = vpack.c.b16 %v4096, %v4088
    %v5209 = vpack.c.b16 %v4105, %v4097
    %v5210 = vpack.c.b16 %v4106, %v4098
    %v5211 = vpack.c.b16 %v4107, %v4099
    %v5212 = vpack.c.b16 %v4108, %v4100
    %v5213 = vpack.c.b16 %v4109, %v4101
    %v5214 = vpack.c.b16 %v4110, %v4102
    %v5215 = vpack.c.b16 %v4111, %v4103
    %v5216 = vpack.c.b16 %v4112, %v4104
    %v5217 = vpack.c.b16 %v4121, %v4113
    %v5218 = vpack.c.b16 %v4122, %v4114
    %v5219 = vpack.c.b16 %v4123, %v4115
    %v5220 = vpack.c.b16 %v4124, %v4116
    %v5221 = vpack.c.b16 %v4125, %v4117
    %v5222 = vpack.c.b16 %v4126, %v4118
    %v5223 = vpack.c.b16 %v4127, %v4119
    %v5224 = vpack.c.b16 %v4128, %v4120
    %v5225 = vpack.c.b16 %v4137, %v4129
    %v5226 = vpack.c.b16 %v4138, %v4130
    %v5227 = vpack.c.b16 %v4139, %v4131
    %v5228 = vpack.c.b16 %v4140, %v4132
    %v5229 = vpack.c.b16 %v4141, %v4133
    %v5230 = vpack.c.b16 %v4142, %v4134
    %v5231 = vpack.c.b16 %v4143, %v4135
    %v5232 = vpack.c.b16 %v4144, %v4136
    %v5233 = vpack.c.b16 %v4153, %v4145
    %v5234 = vpack.c.b16 %v4154, %v4146
    %v5235 = vpack.c.b16 %v4155, %v4147
    %v5236 = vpack.c.b16 %v4156, %v4148
    %v5237 = vpack.c.b16 %v4157, %v4149
    %v5238 = vpack.c.b16 %v4158, %v4150
    %v5239 = vpack.c.b16 %v4159, %v4151
    %v5240 = vpack.c.b16 %v4160, %v4152
    %v5241 = vpack.c.b16 %v4169, %v4161
    %v5242 = vpack.c.b16 %v4170, %v4162
    %v5243 = vpack.c.b16 %v4171, %v4163
    %v5244 = vpack.c.b16 %v4172, %v4164
    %v5245 = vpack.c.b16 %v4173, %v4165
    %v5246 = vpack.c.b16 %v4174, %v4166
    %v5247 = vpack.c.b16 %v4175, %v4167
    %v5248 = vpack.c.b16 %v4176, %v4168
    %v5249 = vpack.c.b16 %v4185, %v4177
    %v5250 = vpack.c.b16 %v4186, %v4178
    %v5251 = vpack.c.b16 %v4187, %v4179
    %v5252 = vpack.c.b16 %v4188, %v4180
    %v5253 = vpack.c.b16 %v4189, %v4181
    %v5254 = vpack.c.b16 %v4190, %v4182
    %v5255 = vpack.c.b16 %v4191, %v4183
    %v5256 = vpack.c.b16 %v4192, %v4184
    %v5257 = vpack.c.b16 %v4201, %v4193
    %v5258 = vpack.c.b16 %v4202, %v4194
    %v5259 = vpack.c.b16 %v4203, %v4195
    %v5260 = vpack.c.b16 %v4204, %v4196
    %v5261 = vpack.c.b16 %v4205, %v4197
    %v5262 = vpack.c.b16 %v4206, %v4198
    %v5263 = vpack.c.b16 %v4207, %v4199
    %v5264 = vpack.c.b16 %v4208, %v4200
    %v5265 = vpack.c.b16 %v4217, %v4209
    %v5266 = vpack.c.b16 %v4218, %v4210
    %v5267 = vpack.c.b16 %v4219, %v4211
    %v5268 = vpack.c.b16 %v4220, %v4212
    %v5269 = vpack.c.b16 %v4221, %v4213
    %v5270 = vpack.c.b16 %v4222, %v4214
    %v5271 = vpack.c.b16 %v4223, %v4215
    %v5272 = vpack.c.b16 %v4224, %v4216
    %v5273 = vpack.c.b16 %v4233, %v4225
    %v5274 = vpack.c.b16 %v4234, %v4226
    %v5275 = vpack.c.b16 %v4235, %v4227
    %v5276 = vpack.c.b16 %v4236, %v4228
    %v5277 = vpack.c.b16 %v4237, %v4229
    %v5278 = vpack.c.b16 %v4238, %v4230
    %v5279 = vpack.c.b16 %v4239, %v4231
    %v5280 = vpack.c.b16 %v4240, %v4232
    %v5281 = vpack.c.b16 %v4249, %v4241
    %v5282 = vpack.c.b16 %v4250, %v4242
    %v5283 = vpack.c.b16 %v4251, %v4243
    %v5284 = vpack.c.b16 %v4252, %v4244
    %v5285 = vpack.c.b16 %v4253, %v4245
    %v5286 = vpack.c.b16 %v4254, %v4246
    %v5287 = vpack.c.b16 %v4255, %v4247
    %v5288 = vpack.c.b16 %v4256, %v4248
    %v5289 = vpack.c.b16 %v4265, %v4257
    %v5290 = vpack.c.b16 %v4266, %v4258
    %v5291 = vpack.c.b16 %v4267, %v4259
    %v5292 = vpack.c.b16 %v4268, %v4260
    %v5293 = vpack.c.b16 %v4269, %v4261
    %v5294 = vpack.c.b16 %v4270, %v4262
    %v5295 = vpack.c.b16 %v4271, %v4263
    %v5296 = vpack.c.b16 %v4272, %v4264
    %6321 = vmatprep.subr.bf16.mxu0 %v4330
    %6322 = vmatpush1.bf16.msra.mxu0 %v4329
    %6323 = vmatprep.subr.bf16.mxu0 %v4322
    %6324 = vmatpush1.bf16.msra.mxu0 %v4321
    %6325 = vmatprep.subr.bf16.mxu0 %v4314
    %6326 = vmatpush1.bf16.msra.mxu0 %v4313
    %6327 = vmatprep.subr.bf16.mxu0 %v4306
    %6328 = vmatpush1.bf16.msra.mxu0 %v4305
    %6329 = vmatprep.subr.bf16.mxu0 %v4298
    %6330 = vmatpush1.bf16.msra.mxu0 %v4297
    %6331 = vmatprep.subr.bf16.mxu0 %v4290
    %6332 = vmatpush1.bf16.msra.mxu0 %v4289
    %6333 = vmatprep.subr.bf16.mxu0 %v4282
    %6334 = vmatpush1.bf16.msra.mxu0 %v4281
    %6335 = vmatprep.subr.bf16.mxu0 %v4274
    %6336 = vmatpush1.bf16.msra.mxu0 %v4273
    %6337 = vmatprep.subr.bf16.mxu0 %v4394
    %6338 = vmatpush2.bf16.msra.mxu0 %v4393
    %6339 = vmatprep.subr.bf16.mxu0 %v4386
    %6340 = vmatpush2.bf16.msra.mxu0 %v4385
    %6341 = vmatprep.subr.bf16.mxu0 %v4378
    %6342 = vmatpush2.bf16.msra.mxu0 %v4377
    %6343 = vmatprep.subr.bf16.mxu0 %v4370
    %6344 = vmatpush2.bf16.msra.mxu0 %v4369
    %6345 = vmatprep.subr.bf16.mxu0 %v4362
    %6346 = vmatpush2.bf16.msra.mxu0 %v4361
    %6347 = vmatprep.subr.bf16.mxu0 %v4354
    %6348 = vmatpush2.bf16.msra.mxu0 %v4353
    %6349 = vmatprep.subr.bf16.mxu0 %v4346
    %6350 = vmatpush2.bf16.msra.mxu0 %v4345
    %6351 = vmatprep.subr.bf16.mxu0 %v4338
    %6352 = vmatpush2.bf16.msra.mxu0 %v4337
    %6353 = vmatprep.mubr.bf16.mxu0 %v1170
    %6354 = vmatmul.mubr.bf16.gmra.mxu0 %v1169
    %v6355 = vpop.f32.mrf.mxu0
    %v6356 = vadd.f32 %v1108, %v6355
    %v6357 = vpop.f32.mrf.mxu0
    %v6358 = vadd.f32 %v1112, %v6357
    %v6359 = vpop.f32.mrf.mxu0
    %v6360 = vpop.f32.mrf.mxu0
    %6361 = vdwg.mxu0
    %6362 = vmatprep.subr.bf16.mxu0 %v4458
    %6363 = vmatpush1.bf16.msra.mxu0 %v4457
    %6364 = vmatprep.subr.bf16.mxu0 %v4450
    %6365 = vmatpush1.bf16.msra.mxu0 %v4449
    %6366 = vmatprep.subr.bf16.mxu0 %v4442
    %6367 = vmatpush1.bf16.msra.mxu0 %v4441
    %6368 = vmatprep.subr.bf16.mxu0 %v4434
    %6369 = vmatpush1.bf16.msra.mxu0 %v4433
    %6370 = vmatprep.subr.bf16.mxu0 %v4426
    %6371 = vmatpush1.bf16.msra.mxu0 %v4425
    %6372 = vmatprep.subr.bf16.mxu0 %v4418
    %6373 = vmatpush1.bf16.msra.mxu0 %v4417
    %6374 = vmatprep.subr.bf16.mxu0 %v4410
    %6375 = vmatpush1.bf16.msra.mxu0 %v4409
    %6376 = vmatprep.subr.bf16.mxu0 %v4402
    %6377 = vmatpush1.bf16.msra.mxu0 %v4401
    %6378 = vmatprep.subr.bf16.mxu0 %v4522
    %6379 = vmatpush2.bf16.msra.mxu0 %v4521
    %6380 = vmatprep.subr.bf16.mxu0 %v4514
    %6381 = vmatpush2.bf16.msra.mxu0 %v4513
    %6382 = vmatprep.subr.bf16.mxu0 %v4506
    %6383 = vmatpush2.bf16.msra.mxu0 %v4505
    %6384 = vmatprep.subr.bf16.mxu0 %v4498
    %6385 = vmatpush2.bf16.msra.mxu0 %v4497
    %6386 = vmatprep.subr.bf16.mxu0 %v4490
    %6387 = vmatpush2.bf16.msra.mxu0 %v4489
    %6388 = vmatprep.subr.bf16.mxu0 %v4482
    %6389 = vmatpush2.bf16.msra.mxu0 %v4481
    %6390 = vmatprep.subr.bf16.mxu0 %v4474
    %6391 = vmatpush2.bf16.msra.mxu0 %v4473
    %6392 = vmatprep.subr.bf16.mxu0 %v4466
    %6393 = vmatpush2.bf16.msra.mxu0 %v4465
    %6394 = vmatprep.mubr.bf16.mxu0 %v1172
    %6395 = vmatmul.mubr.bf16.gmra.mxu0 %v1171
    %v6396 = vpop.f32.mrf.mxu0
    %v6397 = vadd.f32 %v6356, %v6396
    %v6398 = vpop.f32.mrf.mxu0
    %v6399 = vadd.f32 %v6358, %v6398
    %v6400 = vpop.f32.mrf.mxu0
    %v6401 = vpop.f32.mrf.mxu0
    %6402 = vdwg.mxu0
    %6403 = vmatprep.subr.bf16.mxu0 %v4586
    %6404 = vmatpush1.bf16.msra.mxu0 %v4585
    %6405 = vmatprep.subr.bf16.mxu0 %v4578
    %6406 = vmatpush1.bf16.msra.mxu0 %v4577
    %6407 = vmatprep.subr.bf16.mxu0 %v4570
    %6408 = vmatpush1.bf16.msra.mxu0 %v4569
    %6409 = vmatprep.subr.bf16.mxu0 %v4562
    %6410 = vmatpush1.bf16.msra.mxu0 %v4561
    %6411 = vmatprep.subr.bf16.mxu0 %v4554
    %6412 = vmatpush1.bf16.msra.mxu0 %v4553
    %6413 = vmatprep.subr.bf16.mxu0 %v4546
    %6414 = vmatpush1.bf16.msra.mxu0 %v4545
    %6415 = vmatprep.subr.bf16.mxu0 %v4538
    %6416 = vmatpush1.bf16.msra.mxu0 %v4537
    %6417 = vmatprep.subr.bf16.mxu0 %v4530
    %6418 = vmatpush1.bf16.msra.mxu0 %v4529
    %6419 = vmatprep.subr.bf16.mxu0 %v4650
    %6420 = vmatpush2.bf16.msra.mxu0 %v4649
    %6421 = vmatprep.subr.bf16.mxu0 %v4642
    %6422 = vmatpush2.bf16.msra.mxu0 %v4641
    %6423 = vmatprep.subr.bf16.mxu0 %v4634
    %6424 = vmatpush2.bf16.msra.mxu0 %v4633
    %6425 = vmatprep.subr.bf16.mxu0 %v4626
    %6426 = vmatpush2.bf16.msra.mxu0 %v4625
    %6427 = vmatprep.subr.bf16.mxu0 %v4618
    %6428 = vmatpush2.bf16.msra.mxu0 %v4617
    %6429 = vmatprep.subr.bf16.mxu0 %v4610
    %6430 = vmatpush2.bf16.msra.mxu0 %v4609
    %6431 = vmatprep.subr.bf16.mxu0 %v4602
    %6432 = vmatpush2.bf16.msra.mxu0 %v4601
    %6433 = vmatprep.subr.bf16.mxu0 %v4594
    %6434 = vmatpush2.bf16.msra.mxu0 %v4593
    %6435 = vmatprep.mubr.bf16.mxu0 %v1174
    %6436 = vmatmul.mubr.bf16.gmra.mxu0 %v1173
    %v6437 = vpop.f32.mrf.mxu0
    %v6438 = vadd.f32 %v6397, %v6437
    %v6439 = vpop.f32.mrf.mxu0
    %v6440 = vadd.f32 %v6399, %v6439
    %v6441 = vpop.f32.mrf.mxu0
    %v6442 = vpop.f32.mrf.mxu0
    %6443 = vdwg.mxu0
    %6444 = vmatprep.subr.bf16.mxu0 %v4714
    %6445 = vmatpush1.bf16.msra.mxu0 %v4713
    %6446 = vmatprep.subr.bf16.mxu0 %v4706
    %6447 = vmatpush1.bf16.msra.mxu0 %v4705
    %6448 = vmatprep.subr.bf16.mxu0 %v4698
    %6449 = vmatpush1.bf16.msra.mxu0 %v4697
    %6450 = vmatprep.subr.bf16.mxu0 %v4690
    %6451 = vmatpush1.bf16.msra.mxu0 %v4689
    %6452 = vmatprep.subr.bf16.mxu0 %v4682
    %6453 = vmatpush1.bf16.msra.mxu0 %v4681
    %6454 = vmatprep.subr.bf16.mxu0 %v4674
    %6455 = vmatpush1.bf16.msra.mxu0 %v4673
    %6456 = vmatprep.subr.bf16.mxu0 %v4666
    %6457 = vmatpush1.bf16.msra.mxu0 %v4665
    %6458 = vmatprep.subr.bf16.mxu0 %v4658
    %6459 = vmatpush1.bf16.msra.mxu0 %v4657
    %6460 = vmatprep.subr.bf16.mxu0 %v4778
    %6461 = vmatpush2.bf16.msra.mxu0 %v4777
    %6462 = vmatprep.subr.bf16.mxu0 %v4770
    %6463 = vmatpush2.bf16.msra.mxu0 %v4769
    %6464 = vmatprep.subr.bf16.mxu0 %v4762
    %6465 = vmatpush2.bf16.msra.mxu0 %v4761
    %6466 = vmatprep.subr.bf16.mxu0 %v4754
    %6467 = vmatpush2.bf16.msra.mxu0 %v4753
    %6468 = vmatprep.subr.bf16.mxu0 %v4746
    %6469 = vmatpush2.bf16.msra.mxu0 %v4745
    %6470 = vmatprep.subr.bf16.mxu0 %v4738
    %6471 = vmatpush2.bf16.msra.mxu0 %v4737
    %6472 = vmatprep.subr.bf16.mxu0 %v4730
    %6473 = vmatpush2.bf16.msra.mxu0 %v4729
    %6474 = vmatprep.subr.bf16.mxu0 %v4722
    %6475 = vmatpush2.bf16.msra.mxu0 %v4721
    %6476 = vmatprep.mubr.bf16.mxu0 %v1176
    %6477 = vmatmul.mubr.bf16.gmra.mxu0 %v1175
    %v6478 = vpop.f32.mrf.mxu0
    %v6479 = vadd.f32 %v6438, %v6478
    %v6480 = vpop.f32.mrf.mxu0
    %v6481 = vadd.f32 %v6440, %v6480
    %v6482 = vpop.f32.mrf.mxu0
    %v6483 = vpop.f32.mrf.mxu0
    %6484 = vdwg.mxu0
    %6485 = vmatprep.subr.bf16.mxu0 %v4842
    %6486 = vmatpush1.bf16.msra.mxu0 %v4841
    %6487 = vmatprep.subr.bf16.mxu0 %v4834
    %6488 = vmatpush1.bf16.msra.mxu0 %v4833
    %6489 = vmatprep.subr.bf16.mxu0 %v4826
    %6490 = vmatpush1.bf16.msra.mxu0 %v4825
    %6491 = vmatprep.subr.bf16.mxu0 %v4818
    %6492 = vmatpush1.bf16.msra.mxu0 %v4817
    %6493 = vmatprep.subr.bf16.mxu0 %v4810
    %6494 = vmatpush1.bf16.msra.mxu0 %v4809
    %6495 = vmatprep.subr.bf16.mxu0 %v4802
    %6496 = vmatpush1.bf16.msra.mxu0 %v4801
    %6497 = vmatprep.subr.bf16.mxu0 %v4794
    %6498 = vmatpush1.bf16.msra.mxu0 %v4793
    %6499 = vmatprep.subr.bf16.mxu0 %v4786
    %6500 = vmatpush1.bf16.msra.mxu0 %v4785
    %6501 = vmatprep.subr.bf16.mxu0 %v4906
    %6502 = vmatpush2.bf16.msra.mxu0 %v4905
    %6503 = vmatprep.subr.bf16.mxu0 %v4898
    %6504 = vmatpush2.bf16.msra.mxu0 %v4897
    %6505 = vmatprep.subr.bf16.mxu0 %v4890
    %6506 = vmatpush2.bf16.msra.mxu0 %v4889
    %6507 = vmatprep.subr.bf16.mxu0 %v4882
    %6508 = vmatpush2.bf16.msra.mxu0 %v4881
    %6509 = vmatprep.subr.bf16.mxu0 %v4874
    %6510 = vmatpush2.bf16.msra.mxu0 %v4873
    %6511 = vmatprep.subr.bf16.mxu0 %v4866
    %6512 = vmatpush2.bf16.msra.mxu0 %v4865
    %6513 = vmatprep.subr.bf16.mxu0 %v4858
    %6514 = vmatpush2.bf16.msra.mxu0 %v4857
    %6515 = vmatprep.subr.bf16.mxu0 %v4850
    %6516 = vmatpush2.bf16.msra.mxu0 %v4849
    %6517 = vmatprep.mubr.bf16.mxu0 %v1178
    %6518 = vmatmul.mubr.bf16.gmra.mxu0 %v1177
    %v6519 = vpop.f32.mrf.mxu0
    %v6520 = vadd.f32 %v6479, %v6519
    %v6521 = vpop.f32.mrf.mxu0
    %v6522 = vadd.f32 %v6481, %v6521
    %v6523 = vpop.f32.mrf.mxu0
    %v6524 = vpop.f32.mrf.mxu0
    %6525 = vdwg.mxu0
    %6526 = vmatprep.subr.bf16.mxu0 %v4970
    %6527 = vmatpush1.bf16.msra.mxu0 %v4969
    %6528 = vmatprep.subr.bf16.mxu0 %v4962
    %6529 = vmatpush1.bf16.msra.mxu0 %v4961
    %6530 = vmatprep.subr.bf16.mxu0 %v4954
    %6531 = vmatpush1.bf16.msra.mxu0 %v4953
    %6532 = vmatprep.subr.bf16.mxu0 %v4946
    %6533 = vmatpush1.bf16.msra.mxu0 %v4945
    %6534 = vmatprep.subr.bf16.mxu0 %v4938
    %6535 = vmatpush1.bf16.msra.mxu0 %v4937
    %6536 = vmatprep.subr.bf16.mxu0 %v4930
    %6537 = vmatpush1.bf16.msra.mxu0 %v4929
    %6538 = vmatprep.subr.bf16.mxu0 %v4922
    %6539 = vmatpush1.bf16.msra.mxu0 %v4921
    %6540 = vmatprep.subr.bf16.mxu0 %v4914
    %6541 = vmatpush1.bf16.msra.mxu0 %v4913
    %6542 = vmatprep.subr.bf16.mxu0 %v5034
    %6543 = vmatpush2.bf16.msra.mxu0 %v5033
    %6544 = vmatprep.subr.bf16.mxu0 %v5026
    %6545 = vmatpush2.bf16.msra.mxu0 %v5025
    %6546 = vmatprep.subr.bf16.mxu0 %v5018
    %6547 = vmatpush2.bf16.msra.mxu0 %v5017
    %6548 = vmatprep.subr.bf16.mxu0 %v5010
    %6549 = vmatpush2.bf16.msra.mxu0 %v5009
    %6550 = vmatprep.subr.bf16.mxu0 %v5002
    %6551 = vmatpush2.bf16.msra.mxu0 %v5001
    %6552 = vmatprep.subr.bf16.mxu0 %v4994
    %6553 = vmatpush2.bf16.msra.mxu0 %v4993
    %6554 = vmatprep.subr.bf16.mxu0 %v4986
    %6555 = vmatpush2.bf16.msra.mxu0 %v4985
    %6556 = vmatprep.subr.bf16.mxu0 %v4978
    %6557 = vmatpush2.bf16.msra.mxu0 %v4977
    %6558 = vmatprep.mubr.bf16.mxu0 %v1180
    %6559 = vmatmul.mubr.bf16.gmra.mxu0 %v1179
    %v6560 = vpop.f32.mrf.mxu0
    %v6561 = vadd.f32 %v6520, %v6560
    %v6562 = vpop.f32.mrf.mxu0
    %v6563 = vadd.f32 %v6522, %v6562
    %v6564 = vpop.f32.mrf.mxu0
    %v6565 = vpop.f32.mrf.mxu0
    %6566 = vdwg.mxu0
    %6567 = vmatprep.subr.bf16.mxu0 %v5098
    %6568 = vmatpush1.bf16.msra.mxu0 %v5097
    %6569 = vmatprep.subr.bf16.mxu0 %v5090
    %6570 = vmatpush1.bf16.msra.mxu0 %v5089
    %6571 = vmatprep.subr.bf16.mxu0 %v5082
    %6572 = vmatpush1.bf16.msra.mxu0 %v5081
    %6573 = vmatprep.subr.bf16.mxu0 %v5074
    %6574 = vmatpush1.bf16.msra.mxu0 %v5073
    %6575 = vmatprep.subr.bf16.mxu0 %v5066
    %6576 = vmatpush1.bf16.msra.mxu0 %v5065
    %6577 = vmatprep.subr.bf16.mxu0 %v5058
    %6578 = vmatpush1.bf16.msra.mxu0 %v5057
    %6579 = vmatprep.subr.bf16.mxu0 %v5050
    %6580 = vmatpush1.bf16.msra.mxu0 %v5049
    %6581 = vmatprep.subr.bf16.mxu0 %v5042
    %6582 = vmatpush1.bf16.msra.mxu0 %v5041
    %6583 = vmatprep.subr.bf16.mxu0 %v5162
    %6584 = vmatpush2.bf16.msra.mxu0 %v5161
    %6585 = vmatprep.subr.bf16.mxu0 %v5154
    %6586 = vmatpush2.bf16.msra.mxu0 %v5153
    %6587 = vmatprep.subr.bf16.mxu0 %v5146
    %6588 = vmatpush2.bf16.msra.mxu0 %v5145
    %6589 = vmatprep.subr.bf16.mxu0 %v5138
    %6590 = vmatpush2.bf16.msra.mxu0 %v5137
    %6591 = vmatprep.subr.bf16.mxu0 %v5130
    %6592 = vmatpush2.bf16.msra.mxu0 %v5129
    %6593 = vmatprep.subr.bf16.mxu0 %v5122
    %6594 = vmatpush2.bf16.msra.mxu0 %v5121
    %6595 = vmatprep.subr.bf16.mxu0 %v5114
    %6596 = vmatpush2.bf16.msra.mxu0 %v5113
    %6597 = vmatprep.subr.bf16.mxu0 %v5106
    %6598 = vmatpush2.bf16.msra.mxu0 %v5105
    %6599 = vmatprep.mubr.bf16.mxu0 %v1182
    %6600 = vmatmul.mubr.bf16.gmra.mxu0 %v1181
    %v6601 = vpop.f32.mrf.mxu0
    %v6602 = vadd.f32 %v6561, %v6601
    %v6603 = vpop.f32.mrf.mxu0
    %v6604 = vadd.f32 %v6563, %v6603
    %v6605 = vpop.f32.mrf.mxu0
    %v6606 = vpop.f32.mrf.mxu0
    %6607 = vdwg.mxu0
    %6608 = vmatprep.subr.bf16.mxu0 %v5226
    %6609 = vmatpush1.bf16.msra.mxu0 %v5225
    %6610 = vmatprep.subr.bf16.mxu0 %v5218
    %6611 = vmatpush1.bf16.msra.mxu0 %v5217
    %6612 = vmatprep.subr.bf16.mxu0 %v5210
    %6613 = vmatpush1.bf16.msra.mxu0 %v5209
    %6614 = vmatprep.subr.bf16.mxu0 %v5202
    %6615 = vmatpush1.bf16.msra.mxu0 %v5201
    %6616 = vmatprep.subr.bf16.mxu0 %v5194
    %6617 = vmatpush1.bf16.msra.mxu0 %v5193
    %6618 = vmatprep.subr.bf16.mxu0 %v5186
    %6619 = vmatpush1.bf16.msra.mxu0 %v5185
    %6620 = vmatprep.subr.bf16.mxu0 %v5178
    %6621 = vmatpush1.bf16.msra.mxu0 %v5177
    %6622 = vmatprep.subr.bf16.mxu0 %v5170
    %6623 = vmatpush1.bf16.msra.mxu0 %v5169
    %6624 = vmatprep.subr.bf16.mxu0 %v5290
    %6625 = vmatpush2.bf16.msra.mxu0 %v5289
    %6626 = vmatprep.subr.bf16.mxu0 %v5282
    %6627 = vmatpush2.bf16.msra.mxu0 %v5281
    %6628 = vmatprep.subr.bf16.mxu0 %v5274
    %6629 = vmatpush2.bf16.msra.mxu0 %v5273
    %6630 = vmatprep.subr.bf16.mxu0 %v5266
    %6631 = vmatpush2.bf16.msra.mxu0 %v5265
    %6632 = vmatprep.subr.bf16.mxu0 %v5258
    %6633 = vmatpush2.bf16.msra.mxu0 %v5257
    %6634 = vmatprep.subr.bf16.mxu0 %v5250
    %6635 = vmatpush2.bf16.msra.mxu0 %v5249
    %6636 = vmatprep.subr.bf16.mxu0 %v5242
    %6637 = vmatpush2.bf16.msra.mxu0 %v5241
    %6638 = vmatprep.subr.bf16.mxu0 %v5234
    %6639 = vmatpush2.bf16.msra.mxu0 %v5233
    %6640 = vmatprep.mubr.bf16.mxu0 %v1184
    %6641 = vmatmul.mubr.bf16.gmra.mxu0 %v1183
    %v6642 = vpop.f32.mrf.mxu0
    %v6643 = vadd.f32 %v6602, %v6642
    %v6644 = vpop.f32.mrf.mxu0
    %v6645 = vadd.f32 %v6604, %v6644
    %v6646 = vpop.f32.mrf.mxu0
    %v6647 = vpop.f32.mrf.mxu0
    %6648 = vdwg.mxu0
    %6649 = vmatprep.subr.bf16.mxu0 %v4332
    %6650 = vmatpush1.bf16.msra.mxu0 %v4331
    %6651 = vmatprep.subr.bf16.mxu0 %v4324
    %6652 = vmatpush1.bf16.msra.mxu0 %v4323
    %6653 = vmatprep.subr.bf16.mxu0 %v4316
    %6654 = vmatpush1.bf16.msra.mxu0 %v4315
    %6655 = vmatprep.subr.bf16.mxu0 %v4308
    %6656 = vmatpush1.bf16.msra.mxu0 %v4307
    %6657 = vmatprep.subr.bf16.mxu0 %v4300
    %6658 = vmatpush1.bf16.msra.mxu0 %v4299
    %6659 = vmatprep.subr.bf16.mxu0 %v4292
    %6660 = vmatpush1.bf16.msra.mxu0 %v4291
    %6661 = vmatprep.subr.bf16.mxu0 %v4284
    %6662 = vmatpush1.bf16.msra.mxu0 %v4283
    %6663 = vmatprep.subr.bf16.mxu0 %v4276
    %6664 = vmatpush1.bf16.msra.mxu0 %v4275
    %6665 = vmatprep.subr.bf16.mxu0 %v4396
    %6666 = vmatpush2.bf16.msra.mxu0 %v4395
    %6667 = vmatprep.subr.bf16.mxu0 %v4388
    %6668 = vmatpush2.bf16.msra.mxu0 %v4387
    %6669 = vmatprep.subr.bf16.mxu0 %v4380
    %6670 = vmatpush2.bf16.msra.mxu0 %v4379
    %6671 = vmatprep.subr.bf16.mxu0 %v4372
    %6672 = vmatpush2.bf16.msra.mxu0 %v4371
    %6673 = vmatprep.subr.bf16.mxu0 %v4364
    %6674 = vmatpush2.bf16.msra.mxu0 %v4363
    %6675 = vmatprep.subr.bf16.mxu0 %v4356
    %6676 = vmatpush2.bf16.msra.mxu0 %v4355
    %6677 = vmatprep.subr.bf16.mxu0 %v4348
    %6678 = vmatpush2.bf16.msra.mxu0 %v4347
    %6679 = vmatprep.subr.bf16.mxu0 %v4340
    %6680 = vmatpush2.bf16.msra.mxu0 %v4339
    %6681 = vmatprep.mubr.bf16.mxu0 %v1170
    %6682 = vmatmul.mubr.bf16.gmra.mxu0 %v1169
    %v6683 = vpop.f32.mrf.mxu0
    %v6684 = vadd.f32 %v1116, %v6683
    %v6685 = vpop.f32.mrf.mxu0
    %v6686 = vadd.f32 %v1120, %v6685
    %v6687 = vpop.f32.mrf.mxu0
    %v6688 = vpop.f32.mrf.mxu0
    %6689 = vdwg.mxu0
    %6690 = vmatprep.subr.bf16.mxu0 %v4460
    %6691 = vmatpush1.bf16.msra.mxu0 %v4459
    %6692 = vmatprep.subr.bf16.mxu0 %v4452
    %6693 = vmatpush1.bf16.msra.mxu0 %v4451
    %6694 = vmatprep.subr.bf16.mxu0 %v4444
    %6695 = vmatpush1.bf16.msra.mxu0 %v4443
    %6696 = vmatprep.subr.bf16.mxu0 %v4436
    %6697 = vmatpush1.bf16.msra.mxu0 %v4435
    %6698 = vmatprep.subr.bf16.mxu0 %v4428
    %6699 = vmatpush1.bf16.msra.mxu0 %v4427
    %6700 = vmatprep.subr.bf16.mxu0 %v4420
    %6701 = vmatpush1.bf16.msra.mxu0 %v4419
    %6702 = vmatprep.subr.bf16.mxu0 %v4412
    %6703 = vmatpush1.bf16.msra.mxu0 %v4411
    %6704 = vmatprep.subr.bf16.mxu0 %v4404
    %6705 = vmatpush1.bf16.msra.mxu0 %v4403
    %6706 = vmatprep.subr.bf16.mxu0 %v4524
    %6707 = vmatpush2.bf16.msra.mxu0 %v4523
    %6708 = vmatprep.subr.bf16.mxu0 %v4516
    %6709 = vmatpush2.bf16.msra.mxu0 %v4515
    %6710 = vmatprep.subr.bf16.mxu0 %v4508
    %6711 = vmatpush2.bf16.msra.mxu0 %v4507
    %6712 = vmatprep.subr.bf16.mxu0 %v4500
    %6713 = vmatpush2.bf16.msra.mxu0 %v4499
    %6714 = vmatprep.subr.bf16.mxu0 %v4492
    %6715 = vmatpush2.bf16.msra.mxu0 %v4491
    %6716 = vmatprep.subr.bf16.mxu0 %v4484
    %6717 = vmatpush2.bf16.msra.mxu0 %v4483
    %6718 = vmatprep.subr.bf16.mxu0 %v4476
    %6719 = vmatpush2.bf16.msra.mxu0 %v4475
    %6720 = vmatprep.subr.bf16.mxu0 %v4468
    %6721 = vmatpush2.bf16.msra.mxu0 %v4467
    %6722 = vmatprep.mubr.bf16.mxu0 %v1172
    %6723 = vmatmul.mubr.bf16.gmra.mxu0 %v1171
    %v6724 = vpop.f32.mrf.mxu0
    %v6725 = vadd.f32 %v6684, %v6724
    %v6726 = vpop.f32.mrf.mxu0
    %v6727 = vadd.f32 %v6686, %v6726
    %v6728 = vpop.f32.mrf.mxu0
    %v6729 = vpop.f32.mrf.mxu0
    %6730 = vdwg.mxu0
    %6731 = vmatprep.subr.bf16.mxu0 %v4588
    %6732 = vmatpush1.bf16.msra.mxu0 %v4587
    %6733 = vmatprep.subr.bf16.mxu0 %v4580
    %6734 = vmatpush1.bf16.msra.mxu0 %v4579
    %6735 = vmatprep.subr.bf16.mxu0 %v4572
    %6736 = vmatpush1.bf16.msra.mxu0 %v4571
    %6737 = vmatprep.subr.bf16.mxu0 %v4564
    %6738 = vmatpush1.bf16.msra.mxu0 %v4563
    %6739 = vmatprep.subr.bf16.mxu0 %v4556
    %6740 = vmatpush1.bf16.msra.mxu0 %v4555
    %6741 = vmatprep.subr.bf16.mxu0 %v4548
    %6742 = vmatpush1.bf16.msra.mxu0 %v4547
    %6743 = vmatprep.subr.bf16.mxu0 %v4540
    %6744 = vmatpush1.bf16.msra.mxu0 %v4539
    %6745 = vmatprep.subr.bf16.mxu0 %v4532
    %6746 = vmatpush1.bf16.msra.mxu0 %v4531
    %6747 = vmatprep.subr.bf16.mxu0 %v4652
    %6748 = vmatpush2.bf16.msra.mxu0 %v4651
    %6749 = vmatprep.subr.bf16.mxu0 %v4644
    %6750 = vmatpush2.bf16.msra.mxu0 %v4643
    %6751 = vmatprep.subr.bf16.mxu0 %v4636
    %6752 = vmatpush2.bf16.msra.mxu0 %v4635
    %6753 = vmatprep.subr.bf16.mxu0 %v4628
    %6754 = vmatpush2.bf16.msra.mxu0 %v4627
    %6755 = vmatprep.subr.bf16.mxu0 %v4620
    %6756 = vmatpush2.bf16.msra.mxu0 %v4619
    %6757 = vmatprep.subr.bf16.mxu0 %v4612
    %6758 = vmatpush2.bf16.msra.mxu0 %v4611
    %6759 = vmatprep.subr.bf16.mxu0 %v4604
    %6760 = vmatpush2.bf16.msra.mxu0 %v4603
    %6761 = vmatprep.subr.bf16.mxu0 %v4596
    %6762 = vmatpush2.bf16.msra.mxu0 %v4595
    %6763 = vmatprep.mubr.bf16.mxu0 %v1174
    %6764 = vmatmul.mubr.bf16.gmra.mxu0 %v1173
    %v6765 = vpop.f32.mrf.mxu0
    %v6766 = vadd.f32 %v6725, %v6765
    %v6767 = vpop.f32.mrf.mxu0
    %v6768 = vadd.f32 %v6727, %v6767
    %v6769 = vpop.f32.mrf.mxu0
    %v6770 = vpop.f32.mrf.mxu0
    %6771 = vdwg.mxu0
    %6772 = vmatprep.subr.bf16.mxu0 %v4716
    %6773 = vmatpush1.bf16.msra.mxu0 %v4715
    %6774 = vmatprep.subr.bf16.mxu0 %v4708
    %6775 = vmatpush1.bf16.msra.mxu0 %v4707
    %6776 = vmatprep.subr.bf16.mxu0 %v4700
    %6777 = vmatpush1.bf16.msra.mxu0 %v4699
    %6778 = vmatprep.subr.bf16.mxu0 %v4692
    %6779 = vmatpush1.bf16.msra.mxu0 %v4691
    %6780 = vmatprep.subr.bf16.mxu0 %v4684
    %6781 = vmatpush1.bf16.msra.mxu0 %v4683
    %6782 = vmatprep.subr.bf16.mxu0 %v4676
    %6783 = vmatpush1.bf16.msra.mxu0 %v4675
    %6784 = vmatprep.subr.bf16.mxu0 %v4668
    %6785 = vmatpush1.bf16.msra.mxu0 %v4667
    %6786 = vmatprep.subr.bf16.mxu0 %v4660
    %6787 = vmatpush1.bf16.msra.mxu0 %v4659
    %6788 = vmatprep.subr.bf16.mxu0 %v4780
    %6789 = vmatpush2.bf16.msra.mxu0 %v4779
    %6790 = vmatprep.subr.bf16.mxu0 %v4772
    %6791 = vmatpush2.bf16.msra.mxu0 %v4771
    %6792 = vmatprep.subr.bf16.mxu0 %v4764
    %6793 = vmatpush2.bf16.msra.mxu0 %v4763
    %6794 = vmatprep.subr.bf16.mxu0 %v4756
    %6795 = vmatpush2.bf16.msra.mxu0 %v4755
    %6796 = vmatprep.subr.bf16.mxu0 %v4748
    %6797 = vmatpush2.bf16.msra.mxu0 %v4747
    %6798 = vmatprep.subr.bf16.mxu0 %v4740
    %6799 = vmatpush2.bf16.msra.mxu0 %v4739
    %6800 = vmatprep.subr.bf16.mxu0 %v4732
    %6801 = vmatpush2.bf16.msra.mxu0 %v4731
    %6802 = vmatprep.subr.bf16.mxu0 %v4724
    %6803 = vmatpush2.bf16.msra.mxu0 %v4723
    %6804 = vmatprep.mubr.bf16.mxu0 %v1176
    %6805 = vmatmul.mubr.bf16.gmra.mxu0 %v1175
    %v6806 = vpop.f32.mrf.mxu0
    %v6807 = vadd.f32 %v6766, %v6806
    %v6808 = vpop.f32.mrf.mxu0
    %v6809 = vadd.f32 %v6768, %v6808
    %v6810 = vpop.f32.mrf.mxu0
    %v6811 = vpop.f32.mrf.mxu0
    %6812 = vdwg.mxu0
    %6813 = vmatprep.subr.bf16.mxu0 %v4844
    %6814 = vmatpush1.bf16.msra.mxu0 %v4843
    %6815 = vmatprep.subr.bf16.mxu0 %v4836
    %6816 = vmatpush1.bf16.msra.mxu0 %v4835
    %6817 = vmatprep.subr.bf16.mxu0 %v4828
    %6818 = vmatpush1.bf16.msra.mxu0 %v4827
    %6819 = vmatprep.subr.bf16.mxu0 %v4820
    %6820 = vmatpush1.bf16.msra.mxu0 %v4819
    %6821 = vmatprep.subr.bf16.mxu0 %v4812
    %6822 = vmatpush1.bf16.msra.mxu0 %v4811
    %6823 = vmatprep.subr.bf16.mxu0 %v4804
    %6824 = vmatpush1.bf16.msra.mxu0 %v4803
    %6825 = vmatprep.subr.bf16.mxu0 %v4796
    %6826 = vmatpush1.bf16.msra.mxu0 %v4795
    %6827 = vmatprep.subr.bf16.mxu0 %v4788
    %6828 = vmatpush1.bf16.msra.mxu0 %v4787
    %6829 = vmatprep.subr.bf16.mxu0 %v4908
    %6830 = vmatpush2.bf16.msra.mxu0 %v4907
    %6831 = vmatprep.subr.bf16.mxu0 %v4900
    %6832 = vmatpush2.bf16.msra.mxu0 %v4899
    %6833 = vmatprep.subr.bf16.mxu0 %v4892
    %6834 = vmatpush2.bf16.msra.mxu0 %v4891
    %6835 = vmatprep.subr.bf16.mxu0 %v4884
    %6836 = vmatpush2.bf16.msra.mxu0 %v4883
    %6837 = vmatprep.subr.bf16.mxu0 %v4876
    %6838 = vmatpush2.bf16.msra.mxu0 %v4875
    %6839 = vmatprep.subr.bf16.mxu0 %v4868
    %6840 = vmatpush2.bf16.msra.mxu0 %v4867
    %6841 = vmatprep.subr.bf16.mxu0 %v4860
    %6842 = vmatpush2.bf16.msra.mxu0 %v4859
    %6843 = vmatprep.subr.bf16.mxu0 %v4852
    %6844 = vmatpush2.bf16.msra.mxu0 %v4851
    %6845 = vmatprep.mubr.bf16.mxu0 %v1178
    %6846 = vmatmul.mubr.bf16.gmra.mxu0 %v1177
    %v6847 = vpop.f32.mrf.mxu0
    %v6848 = vadd.f32 %v6807, %v6847
    %v6849 = vpop.f32.mrf.mxu0
    %v6850 = vadd.f32 %v6809, %v6849
    %v6851 = vpop.f32.mrf.mxu0
    %v6852 = vpop.f32.mrf.mxu0
    %6853 = vdwg.mxu0
    %6854 = vmatprep.subr.bf16.mxu0 %v4972
    %6855 = vmatpush1.bf16.msra.mxu0 %v4971
    %6856 = vmatprep.subr.bf16.mxu0 %v4964
    %6857 = vmatpush1.bf16.msra.mxu0 %v4963
    %6858 = vmatprep.subr.bf16.mxu0 %v4956
    %6859 = vmatpush1.bf16.msra.mxu0 %v4955
    %6860 = vmatprep.subr.bf16.mxu0 %v4948
    %6861 = vmatpush1.bf16.msra.mxu0 %v4947
    %6862 = vmatprep.subr.bf16.mxu0 %v4940
    %6863 = vmatpush1.bf16.msra.mxu0 %v4939
    %6864 = vmatprep.subr.bf16.mxu0 %v4932
    %6865 = vmatpush1.bf16.msra.mxu0 %v4931
    %6866 = vmatprep.subr.bf16.mxu0 %v4924
    %6867 = vmatpush1.bf16.msra.mxu0 %v4923
    %6868 = vmatprep.subr.bf16.mxu0 %v4916
    %6869 = vmatpush1.bf16.msra.mxu0 %v4915
    %6870 = vmatprep.subr.bf16.mxu0 %v5036
    %6871 = vmatpush2.bf16.msra.mxu0 %v5035
    %6872 = vmatprep.subr.bf16.mxu0 %v5028
    %6873 = vmatpush2.bf16.msra.mxu0 %v5027
    %6874 = vmatprep.subr.bf16.mxu0 %v5020
    %6875 = vmatpush2.bf16.msra.mxu0 %v5019
    %6876 = vmatprep.subr.bf16.mxu0 %v5012
    %6877 = vmatpush2.bf16.msra.mxu0 %v5011
    %6878 = vmatprep.subr.bf16.mxu0 %v5004
    %6879 = vmatpush2.bf16.msra.mxu0 %v5003
    %6880 = vmatprep.subr.bf16.mxu0 %v4996
    %6881 = vmatpush2.bf16.msra.mxu0 %v4995
    %6882 = vmatprep.subr.bf16.mxu0 %v4988
    %6883 = vmatpush2.bf16.msra.mxu0 %v4987
    %6884 = vmatprep.subr.bf16.mxu0 %v4980
    %6885 = vmatpush2.bf16.msra.mxu0 %v4979
    %6886 = vmatprep.mubr.bf16.mxu0 %v1180
    %6887 = vmatmul.mubr.bf16.gmra.mxu0 %v1179
    %v6888 = vpop.f32.mrf.mxu0
    %v6889 = vadd.f32 %v6848, %v6888
    %v6890 = vpop.f32.mrf.mxu0
    %v6891 = vadd.f32 %v6850, %v6890
    %v6892 = vpop.f32.mrf.mxu0
    %v6893 = vpop.f32.mrf.mxu0
    %6894 = vdwg.mxu0
    %6895 = vmatprep.subr.bf16.mxu0 %v5100
    %6896 = vmatpush1.bf16.msra.mxu0 %v5099
    %6897 = vmatprep.subr.bf16.mxu0 %v5092
    %6898 = vmatpush1.bf16.msra.mxu0 %v5091
    %6899 = vmatprep.subr.bf16.mxu0 %v5084
    %6900 = vmatpush1.bf16.msra.mxu0 %v5083
    %6901 = vmatprep.subr.bf16.mxu0 %v5076
    %6902 = vmatpush1.bf16.msra.mxu0 %v5075
    %6903 = vmatprep.subr.bf16.mxu0 %v5068
    %6904 = vmatpush1.bf16.msra.mxu0 %v5067
    %6905 = vmatprep.subr.bf16.mxu0 %v5060
    %6906 = vmatpush1.bf16.msra.mxu0 %v5059
    %6907 = vmatprep.subr.bf16.mxu0 %v5052
    %6908 = vmatpush1.bf16.msra.mxu0 %v5051
    %6909 = vmatprep.subr.bf16.mxu0 %v5044
    %6910 = vmatpush1.bf16.msra.mxu0 %v5043
    %6911 = vmatprep.subr.bf16.mxu0 %v5164
    %6912 = vmatpush2.bf16.msra.mxu0 %v5163
    %6913 = vmatprep.subr.bf16.mxu0 %v5156
    %6914 = vmatpush2.bf16.msra.mxu0 %v5155
    %6915 = vmatprep.subr.bf16.mxu0 %v5148
    %6916 = vmatpush2.bf16.msra.mxu0 %v5147
    %6917 = vmatprep.subr.bf16.mxu0 %v5140
    %6918 = vmatpush2.bf16.msra.mxu0 %v5139
    %6919 = vmatprep.subr.bf16.mxu0 %v5132
    %6920 = vmatpush2.bf16.msra.mxu0 %v5131
    %6921 = vmatprep.subr.bf16.mxu0 %v5124
    %6922 = vmatpush2.bf16.msra.mxu0 %v5123
    %6923 = vmatprep.subr.bf16.mxu0 %v5116
    %6924 = vmatpush2.bf16.msra.mxu0 %v5115
    %6925 = vmatprep.subr.bf16.mxu0 %v5108
    %6926 = vmatpush2.bf16.msra.mxu0 %v5107
    %6927 = vmatprep.mubr.bf16.mxu0 %v1182
    %6928 = vmatmul.mubr.bf16.gmra.mxu0 %v1181
    %v6929 = vpop.f32.mrf.mxu0
    %v6930 = vadd.f32 %v6889, %v6929
    %v6931 = vpop.f32.mrf.mxu0
    %v6932 = vadd.f32 %v6891, %v6931
    %v6933 = vpop.f32.mrf.mxu0
    %v6934 = vpop.f32.mrf.mxu0
    %6935 = vdwg.mxu0
    %6936 = vmatprep.subr.bf16.mxu0 %v5228
    %6937 = vmatpush1.bf16.msra.mxu0 %v5227
    %6938 = vmatprep.subr.bf16.mxu0 %v5220
    %6939 = vmatpush1.bf16.msra.mxu0 %v5219
    %6940 = vmatprep.subr.bf16.mxu0 %v5212
    %6941 = vmatpush1.bf16.msra.mxu0 %v5211
    %6942 = vmatprep.subr.bf16.mxu0 %v5204
    %6943 = vmatpush1.bf16.msra.mxu0 %v5203
    %6944 = vmatprep.subr.bf16.mxu0 %v5196
    %6945 = vmatpush1.bf16.msra.mxu0 %v5195
    %6946 = vmatprep.subr.bf16.mxu0 %v5188
    %6947 = vmatpush1.bf16.msra.mxu0 %v5187
    %6948 = vmatprep.subr.bf16.mxu0 %v5180
    %6949 = vmatpush1.bf16.msra.mxu0 %v5179
    %6950 = vmatprep.subr.bf16.mxu0 %v5172
    %6951 = vmatpush1.bf16.msra.mxu0 %v5171
    %6952 = vmatprep.subr.bf16.mxu0 %v5292
    %6953 = vmatpush2.bf16.msra.mxu0 %v5291
    %6954 = vmatprep.subr.bf16.mxu0 %v5284
    %6955 = vmatpush2.bf16.msra.mxu0 %v5283
    %6956 = vmatprep.subr.bf16.mxu0 %v5276
    %6957 = vmatpush2.bf16.msra.mxu0 %v5275
    %6958 = vmatprep.subr.bf16.mxu0 %v5268
    %6959 = vmatpush2.bf16.msra.mxu0 %v5267
    %6960 = vmatprep.subr.bf16.mxu0 %v5260
    %6961 = vmatpush2.bf16.msra.mxu0 %v5259
    %6962 = vmatprep.subr.bf16.mxu0 %v5252
    %6963 = vmatpush2.bf16.msra.mxu0 %v5251
    %6964 = vmatprep.subr.bf16.mxu0 %v5244
    %6965 = vmatpush2.bf16.msra.mxu0 %v5243
    %6966 = vmatprep.subr.bf16.mxu0 %v5236
    %6967 = vmatpush2.bf16.msra.mxu0 %v5235
    %6968 = vmatprep.mubr.bf16.mxu0 %v1184
    %6969 = vmatmul.mubr.bf16.gmra.mxu0 %v1183
    %v6970 = vpop.f32.mrf.mxu0
    %v6971 = vadd.f32 %v6930, %v6970
    %v6972 = vpop.f32.mrf.mxu0
    %v6973 = vadd.f32 %v6932, %v6972
    %v6974 = vpop.f32.mrf.mxu0
    %v6975 = vpop.f32.mrf.mxu0
    %6976 = vdwg.mxu0
    %6977 = vmatprep.subr.bf16.mxu0 %v4334
    %6978 = vmatpush1.bf16.msra.mxu0 %v4333
    %6979 = vmatprep.subr.bf16.mxu0 %v4326
    %6980 = vmatpush1.bf16.msra.mxu0 %v4325
    %6981 = vmatprep.subr.bf16.mxu0 %v4318
    %6982 = vmatpush1.bf16.msra.mxu0 %v4317
    %6983 = vmatprep.subr.bf16.mxu0 %v4310
    %6984 = vmatpush1.bf16.msra.mxu0 %v4309
    %6985 = vmatprep.subr.bf16.mxu0 %v4302
    %6986 = vmatpush1.bf16.msra.mxu0 %v4301
    %6987 = vmatprep.subr.bf16.mxu0 %v4294
    %6988 = vmatpush1.bf16.msra.mxu0 %v4293
    %6989 = vmatprep.subr.bf16.mxu0 %v4286
    %6990 = vmatpush1.bf16.msra.mxu0 %v4285
    %6991 = vmatprep.subr.bf16.mxu0 %v4278
    %6992 = vmatpush1.bf16.msra.mxu0 %v4277
    %6993 = vmatprep.subr.bf16.mxu0 %v4398
    %6994 = vmatpush2.bf16.msra.mxu0 %v4397
    %6995 = vmatprep.subr.bf16.mxu0 %v4390
    %6996 = vmatpush2.bf16.msra.mxu0 %v4389
    %6997 = vmatprep.subr.bf16.mxu0 %v4382
    %6998 = vmatpush2.bf16.msra.mxu0 %v4381
    %6999 = vmatprep.subr.bf16.mxu0 %v4374
    %7000 = vmatpush2.bf16.msra.mxu0 %v4373
    %7001 = vmatprep.subr.bf16.mxu0 %v4366
    %7002 = vmatpush2.bf16.msra.mxu0 %v4365
    %7003 = vmatprep.subr.bf16.mxu0 %v4358
    %7004 = vmatpush2.bf16.msra.mxu0 %v4357
    %7005 = vmatprep.subr.bf16.mxu0 %v4350
    %7006 = vmatpush2.bf16.msra.mxu0 %v4349
    %7007 = vmatprep.subr.bf16.mxu0 %v4342
    %7008 = vmatpush2.bf16.msra.mxu0 %v4341
    %7009 = vmatprep.mubr.bf16.mxu0 %v1170
    %7010 = vmatmul.mubr.bf16.gmra.mxu0 %v1169
    %v7011 = vpop.f32.mrf.mxu0
    %v7012 = vadd.f32 %v1124, %v7011
    %v7013 = vpop.f32.mrf.mxu0
    %v7014 = vadd.f32 %v1128, %v7013
    %v7015 = vpop.f32.mrf.mxu0
    %v7016 = vpop.f32.mrf.mxu0
    %7017 = vdwg.mxu0
    %7018 = vmatprep.subr.bf16.mxu0 %v4462
    %7019 = vmatpush1.bf16.msra.mxu0 %v4461
    %7020 = vmatprep.subr.bf16.mxu0 %v4454
    %7021 = vmatpush1.bf16.msra.mxu0 %v4453
    %7022 = vmatprep.subr.bf16.mxu0 %v4446
    %7023 = vmatpush1.bf16.msra.mxu0 %v4445
    %7024 = vmatprep.subr.bf16.mxu0 %v4438
    %7025 = vmatpush1.bf16.msra.mxu0 %v4437
    %7026 = vmatprep.subr.bf16.mxu0 %v4430
    %7027 = vmatpush1.bf16.msra.mxu0 %v4429
    %7028 = vmatprep.subr.bf16.mxu0 %v4422
    %7029 = vmatpush1.bf16.msra.mxu0 %v4421
    %7030 = vmatprep.subr.bf16.mxu0 %v4414
    %7031 = vmatpush1.bf16.msra.mxu0 %v4413
    %7032 = vmatprep.subr.bf16.mxu0 %v4406
    %7033 = vmatpush1.bf16.msra.mxu0 %v4405
    %7034 = vmatprep.subr.bf16.mxu0 %v4526
    %7035 = vmatpush2.bf16.msra.mxu0 %v4525
    %7036 = vmatprep.subr.bf16.mxu0 %v4518
    %7037 = vmatpush2.bf16.msra.mxu0 %v4517
    %7038 = vmatprep.subr.bf16.mxu0 %v4510
    %7039 = vmatpush2.bf16.msra.mxu0 %v4509
    %7040 = vmatprep.subr.bf16.mxu0 %v4502
    %7041 = vmatpush2.bf16.msra.mxu0 %v4501
    %7042 = vmatprep.subr.bf16.mxu0 %v4494
    %7043 = vmatpush2.bf16.msra.mxu0 %v4493
    %7044 = vmatprep.subr.bf16.mxu0 %v4486
    %7045 = vmatpush2.bf16.msra.mxu0 %v4485
    %7046 = vmatprep.subr.bf16.mxu0 %v4478
    %7047 = vmatpush2.bf16.msra.mxu0 %v4477
    %7048 = vmatprep.subr.bf16.mxu0 %v4470
    %7049 = vmatpush2.bf16.msra.mxu0 %v4469
    %7050 = vmatprep.mubr.bf16.mxu0 %v1172
    %7051 = vmatmul.mubr.bf16.gmra.mxu0 %v1171
    %v7052 = vpop.f32.mrf.mxu0
    %v7053 = vadd.f32 %v7012, %v7052
    %v7054 = vpop.f32.mrf.mxu0
    %v7055 = vadd.f32 %v7014, %v7054
    %v7056 = vpop.f32.mrf.mxu0
    %v7057 = vpop.f32.mrf.mxu0
    %7058 = vdwg.mxu0
    %7059 = vmatprep.subr.bf16.mxu0 %v4590
    %7060 = vmatpush1.bf16.msra.mxu0 %v4589
    %7061 = vmatprep.subr.bf16.mxu0 %v4582
    %7062 = vmatpush1.bf16.msra.mxu0 %v4581
    %7063 = vmatprep.subr.bf16.mxu0 %v4574
    %7064 = vmatpush1.bf16.msra.mxu0 %v4573
    %7065 = vmatprep.subr.bf16.mxu0 %v4566
    %7066 = vmatpush1.bf16.msra.mxu0 %v4565
    %7067 = vmatprep.subr.bf16.mxu0 %v4558
    %7068 = vmatpush1.bf16.msra.mxu0 %v4557
    %7069 = vmatprep.subr.bf16.mxu0 %v4550
    %7070 = vmatpush1.bf16.msra.mxu0 %v4549
    %7071 = vmatprep.subr.bf16.mxu0 %v4542
    %7072 = vmatpush1.bf16.msra.mxu0 %v4541
    %7073 = vmatprep.subr.bf16.mxu0 %v4534
    %7074 = vmatpush1.bf16.msra.mxu0 %v4533
    %7075 = vmatprep.subr.bf16.mxu0 %v4654
    %7076 = vmatpush2.bf16.msra.mxu0 %v4653
    %7077 = vmatprep.subr.bf16.mxu0 %v4646
    %7078 = vmatpush2.bf16.msra.mxu0 %v4645
    %7079 = vmatprep.subr.bf16.mxu0 %v4638
    %7080 = vmatpush2.bf16.msra.mxu0 %v4637
    %7081 = vmatprep.subr.bf16.mxu0 %v4630
    %7082 = vmatpush2.bf16.msra.mxu0 %v4629
    %7083 = vmatprep.subr.bf16.mxu0 %v4622
    %7084 = vmatpush2.bf16.msra.mxu0 %v4621
    %7085 = vmatprep.subr.bf16.mxu0 %v4614
    %7086 = vmatpush2.bf16.msra.mxu0 %v4613
    %7087 = vmatprep.subr.bf16.mxu0 %v4606
    %7088 = vmatpush2.bf16.msra.mxu0 %v4605
    %7089 = vmatprep.subr.bf16.mxu0 %v4598
    %7090 = vmatpush2.bf16.msra.mxu0 %v4597
    %7091 = vmatprep.mubr.bf16.mxu0 %v1174
    %7092 = vmatmul.mubr.bf16.gmra.mxu0 %v1173
    %v7093 = vpop.f32.mrf.mxu0
    %v7094 = vadd.f32 %v7053, %v7093
    %v7095 = vpop.f32.mrf.mxu0
    %v7096 = vadd.f32 %v7055, %v7095
    %v7097 = vpop.f32.mrf.mxu0
    %v7098 = vpop.f32.mrf.mxu0
    %7099 = vdwg.mxu0
    %7100 = vmatprep.subr.bf16.mxu0 %v4718
    %7101 = vmatpush1.bf16.msra.mxu0 %v4717
    %7102 = vmatprep.subr.bf16.mxu0 %v4710
    %7103 = vmatpush1.bf16.msra.mxu0 %v4709
    %7104 = vmatprep.subr.bf16.mxu0 %v4702
    %7105 = vmatpush1.bf16.msra.mxu0 %v4701
    %7106 = vmatprep.subr.bf16.mxu0 %v4694
    %7107 = vmatpush1.bf16.msra.mxu0 %v4693
    %7108 = vmatprep.subr.bf16.mxu0 %v4686
    %7109 = vmatpush1.bf16.msra.mxu0 %v4685
    %7110 = vmatprep.subr.bf16.mxu0 %v4678
    %7111 = vmatpush1.bf16.msra.mxu0 %v4677
    %7112 = vmatprep.subr.bf16.mxu0 %v4670
    %7113 = vmatpush1.bf16.msra.mxu0 %v4669
    %7114 = vmatprep.subr.bf16.mxu0 %v4662
    %7115 = vmatpush1.bf16.msra.mxu0 %v4661
    %7116 = vmatprep.subr.bf16.mxu0 %v4782
    %7117 = vmatpush2.bf16.msra.mxu0 %v4781
    %7118 = vmatprep.subr.bf16.mxu0 %v4774
    %7119 = vmatpush2.bf16.msra.mxu0 %v4773
    %7120 = vmatprep.subr.bf16.mxu0 %v4766
    %7121 = vmatpush2.bf16.msra.mxu0 %v4765
    %7122 = vmatprep.subr.bf16.mxu0 %v4758
    %7123 = vmatpush2.bf16.msra.mxu0 %v4757
    %7124 = vmatprep.subr.bf16.mxu0 %v4750
    %7125 = vmatpush2.bf16.msra.mxu0 %v4749
    %7126 = vmatprep.subr.bf16.mxu0 %v4742
    %7127 = vmatpush2.bf16.msra.mxu0 %v4741
    %7128 = vmatprep.subr.bf16.mxu0 %v4734
    %7129 = vmatpush2.bf16.msra.mxu0 %v4733
    %7130 = vmatprep.subr.bf16.mxu0 %v4726
    %7131 = vmatpush2.bf16.msra.mxu0 %v4725
    %7132 = vmatprep.mubr.bf16.mxu0 %v1176
    %7133 = vmatmul.mubr.bf16.gmra.mxu0 %v1175
    %v7134 = vpop.f32.mrf.mxu0
    %v7135 = vadd.f32 %v7094, %v7134
    %v7136 = vpop.f32.mrf.mxu0
    %v7137 = vadd.f32 %v7096, %v7136
    %v7138 = vpop.f32.mrf.mxu0
    %v7139 = vpop.f32.mrf.mxu0
    %7140 = vdwg.mxu0
    %7141 = vmatprep.subr.bf16.mxu0 %v4846
    %7142 = vmatpush1.bf16.msra.mxu0 %v4845
    %7143 = vmatprep.subr.bf16.mxu0 %v4838
    %7144 = vmatpush1.bf16.msra.mxu0 %v4837
    %7145 = vmatprep.subr.bf16.mxu0 %v4830
    %7146 = vmatpush1.bf16.msra.mxu0 %v4829
    %7147 = vmatprep.subr.bf16.mxu0 %v4822
    %7148 = vmatpush1.bf16.msra.mxu0 %v4821
    %7149 = vmatprep.subr.bf16.mxu0 %v4814
    %7150 = vmatpush1.bf16.msra.mxu0 %v4813
    %7151 = vmatprep.subr.bf16.mxu0 %v4806
    %7152 = vmatpush1.bf16.msra.mxu0 %v4805
    %7153 = vmatprep.subr.bf16.mxu0 %v4798
    %7154 = vmatpush1.bf16.msra.mxu0 %v4797
    %7155 = vmatprep.subr.bf16.mxu0 %v4790
    %7156 = vmatpush1.bf16.msra.mxu0 %v4789
    %7157 = vmatprep.subr.bf16.mxu0 %v4910
    %7158 = vmatpush2.bf16.msra.mxu0 %v4909
    %7159 = vmatprep.subr.bf16.mxu0 %v4902
    %7160 = vmatpush2.bf16.msra.mxu0 %v4901
    %7161 = vmatprep.subr.bf16.mxu0 %v4894
    %7162 = vmatpush2.bf16.msra.mxu0 %v4893
    %7163 = vmatprep.subr.bf16.mxu0 %v4886
    %7164 = vmatpush2.bf16.msra.mxu0 %v4885
    %7165 = vmatprep.subr.bf16.mxu0 %v4878
    %7166 = vmatpush2.bf16.msra.mxu0 %v4877
    %7167 = vmatprep.subr.bf16.mxu0 %v4870
    %7168 = vmatpush2.bf16.msra.mxu0 %v4869
    %7169 = vmatprep.subr.bf16.mxu0 %v4862
    %7170 = vmatpush2.bf16.msra.mxu0 %v4861
    %7171 = vmatprep.subr.bf16.mxu0 %v4854
    %7172 = vmatpush2.bf16.msra.mxu0 %v4853
    %7173 = vmatprep.mubr.bf16.mxu0 %v1178
    %7174 = vmatmul.mubr.bf16.gmra.mxu0 %v1177
    %v7175 = vpop.f32.mrf.mxu0
    %v7176 = vadd.f32 %v7135, %v7175
    %v7177 = vpop.f32.mrf.mxu0
    %v7178 = vadd.f32 %v7137, %v7177
    %v7179 = vpop.f32.mrf.mxu0
    %v7180 = vpop.f32.mrf.mxu0
    %7181 = vdwg.mxu0
    %7182 = vmatprep.subr.bf16.mxu0 %v4974
    %7183 = vmatpush1.bf16.msra.mxu0 %v4973
    %7184 = vmatprep.subr.bf16.mxu0 %v4966
    %7185 = vmatpush1.bf16.msra.mxu0 %v4965
    %7186 = vmatprep.subr.bf16.mxu0 %v4958
    %7187 = vmatpush1.bf16.msra.mxu0 %v4957
    %7188 = vmatprep.subr.bf16.mxu0 %v4950
    %7189 = vmatpush1.bf16.msra.mxu0 %v4949
    %7190 = vmatprep.subr.bf16.mxu0 %v4942
    %7191 = vmatpush1.bf16.msra.mxu0 %v4941
    %7192 = vmatprep.subr.bf16.mxu0 %v4934
    %7193 = vmatpush1.bf16.msra.mxu0 %v4933
    %7194 = vmatprep.subr.bf16.mxu0 %v4926
    %7195 = vmatpush1.bf16.msra.mxu0 %v4925
    %7196 = vmatprep.subr.bf16.mxu0 %v4918
    %7197 = vmatpush1.bf16.msra.mxu0 %v4917
    %7198 = vmatprep.subr.bf16.mxu0 %v5038
    %7199 = vmatpush2.bf16.msra.mxu0 %v5037
    %7200 = vmatprep.subr.bf16.mxu0 %v5030
    %7201 = vmatpush2.bf16.msra.mxu0 %v5029
    %7202 = vmatprep.subr.bf16.mxu0 %v5022
    %7203 = vmatpush2.bf16.msra.mxu0 %v5021
    %7204 = vmatprep.subr.bf16.mxu0 %v5014
    %7205 = vmatpush2.bf16.msra.mxu0 %v5013
    %7206 = vmatprep.subr.bf16.mxu0 %v5006
    %7207 = vmatpush2.bf16.msra.mxu0 %v5005
    %7208 = vmatprep.subr.bf16.mxu0 %v4998
    %7209 = vmatpush2.bf16.msra.mxu0 %v4997
    %7210 = vmatprep.subr.bf16.mxu0 %v4990
    %7211 = vmatpush2.bf16.msra.mxu0 %v4989
    %7212 = vmatprep.subr.bf16.mxu0 %v4982
    %7213 = vmatpush2.bf16.msra.mxu0 %v4981
    %7214 = vmatprep.mubr.bf16.mxu0 %v1180
    %7215 = vmatmul.mubr.bf16.gmra.mxu0 %v1179
    %v7216 = vpop.f32.mrf.mxu0
    %v7217 = vadd.f32 %v7176, %v7216
    %v7218 = vpop.f32.mrf.mxu0
    %v7219 = vadd.f32 %v7178, %v7218
    %v7220 = vpop.f32.mrf.mxu0
    %v7221 = vpop.f32.mrf.mxu0
    %7222 = vdwg.mxu0
    %7223 = vmatprep.subr.bf16.mxu0 %v5102
    %7224 = vmatpush1.bf16.msra.mxu0 %v5101
    %7225 = vmatprep.subr.bf16.mxu0 %v5094
    %7226 = vmatpush1.bf16.msra.mxu0 %v5093
    %7227 = vmatprep.subr.bf16.mxu0 %v5086
    %7228 = vmatpush1.bf16.msra.mxu0 %v5085
    %7229 = vmatprep.subr.bf16.mxu0 %v5078
    %7230 = vmatpush1.bf16.msra.mxu0 %v5077
    %7231 = vmatprep.subr.bf16.mxu0 %v5070
    %7232 = vmatpush1.bf16.msra.mxu0 %v5069
    %7233 = vmatprep.subr.bf16.mxu0 %v5062
    %7234 = vmatpush1.bf16.msra.mxu0 %v5061
    %7235 = vmatprep.subr.bf16.mxu0 %v5054
    %7236 = vmatpush1.bf16.msra.mxu0 %v5053
    %7237 = vmatprep.subr.bf16.mxu0 %v5046
    %7238 = vmatpush1.bf16.msra.mxu0 %v5045
    %7239 = vmatprep.subr.bf16.mxu0 %v5166
    %7240 = vmatpush2.bf16.msra.mxu0 %v5165
    %7241 = vmatprep.subr.bf16.mxu0 %v5158
    %7242 = vmatpush2.bf16.msra.mxu0 %v5157
    %7243 = vmatprep.subr.bf16.mxu0 %v5150
    %7244 = vmatpush2.bf16.msra.mxu0 %v5149
    %7245 = vmatprep.subr.bf16.mxu0 %v5142
    %7246 = vmatpush2.bf16.msra.mxu0 %v5141
    %7247 = vmatprep.subr.bf16.mxu0 %v5134
    %7248 = vmatpush2.bf16.msra.mxu0 %v5133
    %7249 = vmatprep.subr.bf16.mxu0 %v5126
    %7250 = vmatpush2.bf16.msra.mxu0 %v5125
    %7251 = vmatprep.subr.bf16.mxu0 %v5118
    %7252 = vmatpush2.bf16.msra.mxu0 %v5117
    %7253 = vmatprep.subr.bf16.mxu0 %v5110
    %7254 = vmatpush2.bf16.msra.mxu0 %v5109
    %7255 = vmatprep.mubr.bf16.mxu0 %v1182
    %7256 = vmatmul.mubr.bf16.gmra.mxu0 %v1181
    %v7257 = vpop.f32.mrf.mxu0
    %v7258 = vadd.f32 %v7217, %v7257
    %v7259 = vpop.f32.mrf.mxu0
    %v7260 = vadd.f32 %v7219, %v7259
    %v7261 = vpop.f32.mrf.mxu0
    %v7262 = vpop.f32.mrf.mxu0
    %7263 = vdwg.mxu0
    %7264 = vmatprep.subr.bf16.mxu0 %v5230
    %7265 = vmatpush1.bf16.msra.mxu0 %v5229
    %7266 = vmatprep.subr.bf16.mxu0 %v5222
    %7267 = vmatpush1.bf16.msra.mxu0 %v5221
    %7268 = vmatprep.subr.bf16.mxu0 %v5214
    %7269 = vmatpush1.bf16.msra.mxu0 %v5213
    %7270 = vmatprep.subr.bf16.mxu0 %v5206
    %7271 = vmatpush1.bf16.msra.mxu0 %v5205
    %7272 = vmatprep.subr.bf16.mxu0 %v5198
    %7273 = vmatpush1.bf16.msra.mxu0 %v5197
    %7274 = vmatprep.subr.bf16.mxu0 %v5190
    %7275 = vmatpush1.bf16.msra.mxu0 %v5189
    %7276 = vmatprep.subr.bf16.mxu0 %v5182
    %7277 = vmatpush1.bf16.msra.mxu0 %v5181
    %7278 = vmatprep.subr.bf16.mxu0 %v5174
    %7279 = vmatpush1.bf16.msra.mxu0 %v5173
    %7280 = vmatprep.subr.bf16.mxu0 %v5294
    %7281 = vmatpush2.bf16.msra.mxu0 %v5293
    %7282 = vmatprep.subr.bf16.mxu0 %v5286
    %7283 = vmatpush2.bf16.msra.mxu0 %v5285
    %7284 = vmatprep.subr.bf16.mxu0 %v5278
    %7285 = vmatpush2.bf16.msra.mxu0 %v5277
    %7286 = vmatprep.subr.bf16.mxu0 %v5270
    %7287 = vmatpush2.bf16.msra.mxu0 %v5269
    %7288 = vmatprep.subr.bf16.mxu0 %v5262
    %7289 = vmatpush2.bf16.msra.mxu0 %v5261
    %7290 = vmatprep.subr.bf16.mxu0 %v5254
    %7291 = vmatpush2.bf16.msra.mxu0 %v5253
    %7292 = vmatprep.subr.bf16.mxu0 %v5246
    %7293 = vmatpush2.bf16.msra.mxu0 %v5245
    %7294 = vmatprep.subr.bf16.mxu0 %v5238
    %7295 = vmatpush2.bf16.msra.mxu0 %v5237
    %7296 = vmatprep.mubr.bf16.mxu0 %v1184
    %7297 = vmatmul.mubr.bf16.gmra.mxu0 %v1183
    %v7298 = vpop.f32.mrf.mxu0
    %v7299 = vadd.f32 %v7258, %v7298
    %v7300 = vpop.f32.mrf.mxu0
    %v7301 = vadd.f32 %v7260, %v7300
    %v7302 = vpop.f32.mrf.mxu0
    %v7303 = vpop.f32.mrf.mxu0
    %7304 = vdwg.mxu0
    %7305 = vmatprep.subr.bf16.mxu0 %v4336
    %7306 = vmatpush1.bf16.msra.mxu0 %v4335
    %7307 = vmatprep.subr.bf16.mxu0 %v4328
    %7308 = vmatpush1.bf16.msra.mxu0 %v4327
    %7309 = vmatprep.subr.bf16.mxu0 %v4320
    %7310 = vmatpush1.bf16.msra.mxu0 %v4319
    %7311 = vmatprep.subr.bf16.mxu0 %v4312
    %7312 = vmatpush1.bf16.msra.mxu0 %v4311
    %7313 = vmatprep.subr.bf16.mxu0 %v4304
    %7314 = vmatpush1.bf16.msra.mxu0 %v4303
    %7315 = vmatprep.subr.bf16.mxu0 %v4296
    %7316 = vmatpush1.bf16.msra.mxu0 %v4295
    %7317 = vmatprep.subr.bf16.mxu0 %v4288
    %7318 = vmatpush1.bf16.msra.mxu0 %v4287
    %7319 = vmatprep.subr.bf16.mxu0 %v4280
    %7320 = vmatpush1.bf16.msra.mxu0 %v4279
    %7321 = vmatprep.subr.bf16.mxu0 %v4400
    %7322 = vmatpush2.bf16.msra.mxu0 %v4399
    %7323 = vmatprep.subr.bf16.mxu0 %v4392
    %7324 = vmatpush2.bf16.msra.mxu0 %v4391
    %7325 = vmatprep.subr.bf16.mxu0 %v4384
    %7326 = vmatpush2.bf16.msra.mxu0 %v4383
    %7327 = vmatprep.subr.bf16.mxu0 %v4376
    %7328 = vmatpush2.bf16.msra.mxu0 %v4375
    %7329 = vmatprep.subr.bf16.mxu0 %v4368
    %7330 = vmatpush2.bf16.msra.mxu0 %v4367
    %7331 = vmatprep.subr.bf16.mxu0 %v4360
    %7332 = vmatpush2.bf16.msra.mxu0 %v4359
    %7333 = vmatprep.subr.bf16.mxu0 %v4352
    %7334 = vmatpush2.bf16.msra.mxu0 %v4351
    %7335 = vmatprep.subr.bf16.mxu0 %v4344
    %7336 = vmatpush2.bf16.msra.mxu0 %v4343
    %7337 = vmatprep.mubr.bf16.mxu0 %v1170
    %7338 = vmatmul.mubr.bf16.gmra.mxu0 %v1169
    %v7339 = vpop.f32.mrf.mxu0
    %v7340 = vadd.f32 %v1132, %v7339
    %v7341 = vpop.f32.mrf.mxu0
    %v7342 = vadd.f32 %v1136, %v7341
    %v7343 = vpop.f32.mrf.mxu0
    %v7344 = vpop.f32.mrf.mxu0
    %7345 = vdwg.mxu0
    %7346 = vmatprep.subr.bf16.mxu0 %v4464
    %7347 = vmatpush1.bf16.msra.mxu0 %v4463
    %7348 = vmatprep.subr.bf16.mxu0 %v4456
    %7349 = vmatpush1.bf16.msra.mxu0 %v4455
    %7350 = vmatprep.subr.bf16.mxu0 %v4448
    %7351 = vmatpush1.bf16.msra.mxu0 %v4447
    %7352 = vmatprep.subr.bf16.mxu0 %v4440
    %7353 = vmatpush1.bf16.msra.mxu0 %v4439
    %7354 = vmatprep.subr.bf16.mxu0 %v4432
    %7355 = vmatpush1.bf16.msra.mxu0 %v4431
    %7356 = vmatprep.subr.bf16.mxu0 %v4424
    %7357 = vmatpush1.bf16.msra.mxu0 %v4423
    %7358 = vmatprep.subr.bf16.mxu0 %v4416
    %7359 = vmatpush1.bf16.msra.mxu0 %v4415
    %7360 = vmatprep.subr.bf16.mxu0 %v4408
    %7361 = vmatpush1.bf16.msra.mxu0 %v4407
    %7362 = vmatprep.subr.bf16.mxu0 %v4528
    %7363 = vmatpush2.bf16.msra.mxu0 %v4527
    %7364 = vmatprep.subr.bf16.mxu0 %v4520
    %7365 = vmatpush2.bf16.msra.mxu0 %v4519
    %7366 = vmatprep.subr.bf16.mxu0 %v4512
    %7367 = vmatpush2.bf16.msra.mxu0 %v4511
    %7368 = vmatprep.subr.bf16.mxu0 %v4504
    %7369 = vmatpush2.bf16.msra.mxu0 %v4503
    %7370 = vmatprep.subr.bf16.mxu0 %v4496
    %7371 = vmatpush2.bf16.msra.mxu0 %v4495
    %7372 = vmatprep.subr.bf16.mxu0 %v4488
    %7373 = vmatpush2.bf16.msra.mxu0 %v4487
    %7374 = vmatprep.subr.bf16.mxu0 %v4480
    %7375 = vmatpush2.bf16.msra.mxu0 %v4479
    %7376 = vmatprep.subr.bf16.mxu0 %v4472
    %7377 = vmatpush2.bf16.msra.mxu0 %v4471
    %7378 = vmatprep.mubr.bf16.mxu0 %v1172
    %7379 = vmatmul.mubr.bf16.gmra.mxu0 %v1171
    %v7380 = vpop.f32.mrf.mxu0
    %v7381 = vadd.f32 %v7340, %v7380
    %v7382 = vpop.f32.mrf.mxu0
    %v7383 = vadd.f32 %v7342, %v7382
    %v7384 = vpop.f32.mrf.mxu0
    %v7385 = vpop.f32.mrf.mxu0
    %7386 = vdwg.mxu0
    %7387 = vmatprep.subr.bf16.mxu0 %v4592
    %7388 = vmatpush1.bf16.msra.mxu0 %v4591
    %7389 = vmatprep.subr.bf16.mxu0 %v4584
    %7390 = vmatpush1.bf16.msra.mxu0 %v4583
    %7391 = vmatprep.subr.bf16.mxu0 %v4576
    %7392 = vmatpush1.bf16.msra.mxu0 %v4575
    %7393 = vmatprep.subr.bf16.mxu0 %v4568
    %7394 = vmatpush1.bf16.msra.mxu0 %v4567
    %7395 = vmatprep.subr.bf16.mxu0 %v4560
    %7396 = vmatpush1.bf16.msra.mxu0 %v4559
    %7397 = vmatprep.subr.bf16.mxu0 %v4552
    %7398 = vmatpush1.bf16.msra.mxu0 %v4551
    %7399 = vmatprep.subr.bf16.mxu0 %v4544
    %7400 = vmatpush1.bf16.msra.mxu0 %v4543
    %7401 = vmatprep.subr.bf16.mxu0 %v4536
    %7402 = vmatpush1.bf16.msra.mxu0 %v4535
    %7403 = vmatprep.subr.bf16.mxu0 %v4656
    %7404 = vmatpush2.bf16.msra.mxu0 %v4655
    %7405 = vmatprep.subr.bf16.mxu0 %v4648
    %7406 = vmatpush2.bf16.msra.mxu0 %v4647
    %7407 = vmatprep.subr.bf16.mxu0 %v4640
    %7408 = vmatpush2.bf16.msra.mxu0 %v4639
    %7409 = vmatprep.subr.bf16.mxu0 %v4632
    %7410 = vmatpush2.bf16.msra.mxu0 %v4631
    %7411 = vmatprep.subr.bf16.mxu0 %v4624
    %7412 = vmatpush2.bf16.msra.mxu0 %v4623
    %7413 = vmatprep.subr.bf16.mxu0 %v4616
    %7414 = vmatpush2.bf16.msra.mxu0 %v4615
    %7415 = vmatprep.subr.bf16.mxu0 %v4608
    %7416 = vmatpush2.bf16.msra.mxu0 %v4607
    %7417 = vmatprep.subr.bf16.mxu0 %v4600
    %7418 = vmatpush2.bf16.msra.mxu0 %v4599
    %7419 = vmatprep.mubr.bf16.mxu0 %v1174
    %7420 = vmatmul.mubr.bf16.gmra.mxu0 %v1173
    %v7421 = vpop.f32.mrf.mxu0
    %v7422 = vadd.f32 %v7381, %v7421
    %v7423 = vpop.f32.mrf.mxu0
    %v7424 = vadd.f32 %v7383, %v7423
    %v7425 = vpop.f32.mrf.mxu0
    %v7426 = vpop.f32.mrf.mxu0
    %7427 = vdwg.mxu0
    %7428 = vmatprep.subr.bf16.mxu0 %v4720
    %7429 = vmatpush1.bf16.msra.mxu0 %v4719
    %7430 = vmatprep.subr.bf16.mxu0 %v4712
    %7431 = vmatpush1.bf16.msra.mxu0 %v4711
    %7432 = vmatprep.subr.bf16.mxu0 %v4704
    %7433 = vmatpush1.bf16.msra.mxu0 %v4703
    %7434 = vmatprep.subr.bf16.mxu0 %v4696
    %7435 = vmatpush1.bf16.msra.mxu0 %v4695
    %7436 = vmatprep.subr.bf16.mxu0 %v4688
    %7437 = vmatpush1.bf16.msra.mxu0 %v4687
    %7438 = vmatprep.subr.bf16.mxu0 %v4680
    %7439 = vmatpush1.bf16.msra.mxu0 %v4679
    %7440 = vmatprep.subr.bf16.mxu0 %v4672
    %7441 = vmatpush1.bf16.msra.mxu0 %v4671
    %7442 = vmatprep.subr.bf16.mxu0 %v4664
    %7443 = vmatpush1.bf16.msra.mxu0 %v4663
    %7444 = vmatprep.subr.bf16.mxu0 %v4784
    %7445 = vmatpush2.bf16.msra.mxu0 %v4783
    %7446 = vmatprep.subr.bf16.mxu0 %v4776
    %7447 = vmatpush2.bf16.msra.mxu0 %v4775
    %7448 = vmatprep.subr.bf16.mxu0 %v4768
    %7449 = vmatpush2.bf16.msra.mxu0 %v4767
    %7450 = vmatprep.subr.bf16.mxu0 %v4760
    %7451 = vmatpush2.bf16.msra.mxu0 %v4759
    %7452 = vmatprep.subr.bf16.mxu0 %v4752
    %7453 = vmatpush2.bf16.msra.mxu0 %v4751
    %7454 = vmatprep.subr.bf16.mxu0 %v4744
    %7455 = vmatpush2.bf16.msra.mxu0 %v4743
    %7456 = vmatprep.subr.bf16.mxu0 %v4736
    %7457 = vmatpush2.bf16.msra.mxu0 %v4735
    %7458 = vmatprep.subr.bf16.mxu0 %v4728
    %7459 = vmatpush2.bf16.msra.mxu0 %v4727
    %7460 = vmatprep.mubr.bf16.mxu0 %v1176
    %7461 = vmatmul.mubr.bf16.gmra.mxu0 %v1175
    %v7462 = vpop.f32.mrf.mxu0
    %v7463 = vadd.f32 %v7422, %v7462
    %v7464 = vpop.f32.mrf.mxu0
    %v7465 = vadd.f32 %v7424, %v7464
    %v7466 = vpop.f32.mrf.mxu0
    %v7467 = vpop.f32.mrf.mxu0
    %7468 = vdwg.mxu0
    %7469 = vmatprep.subr.bf16.mxu0 %v4848
    %7470 = vmatpush1.bf16.msra.mxu0 %v4847
    %7471 = vmatprep.subr.bf16.mxu0 %v4840
    %7472 = vmatpush1.bf16.msra.mxu0 %v4839
    %7473 = vmatprep.subr.bf16.mxu0 %v4832
    %7474 = vmatpush1.bf16.msra.mxu0 %v4831
    %7475 = vmatprep.subr.bf16.mxu0 %v4824
    %7476 = vmatpush1.bf16.msra.mxu0 %v4823
    %7477 = vmatprep.subr.bf16.mxu0 %v4816
    %7478 = vmatpush1.bf16.msra.mxu0 %v4815
    %7479 = vmatprep.subr.bf16.mxu0 %v4808
    %7480 = vmatpush1.bf16.msra.mxu0 %v4807
    %7481 = vmatprep.subr.bf16.mxu0 %v4800
    %7482 = vmatpush1.bf16.msra.mxu0 %v4799
    %7483 = vmatprep.subr.bf16.mxu0 %v4792
    %7484 = vmatpush1.bf16.msra.mxu0 %v4791
    %7485 = vmatprep.subr.bf16.mxu0 %v4912
    %7486 = vmatpush2.bf16.msra.mxu0 %v4911
    %7487 = vmatprep.subr.bf16.mxu0 %v4904
    %7488 = vmatpush2.bf16.msra.mxu0 %v4903
    %7489 = vmatprep.subr.bf16.mxu0 %v4896
    %7490 = vmatpush2.bf16.msra.mxu0 %v4895
    %7491 = vmatprep.subr.bf16.mxu0 %v4888
    %7492 = vmatpush2.bf16.msra.mxu0 %v4887
    %7493 = vmatprep.subr.bf16.mxu0 %v4880
    %7494 = vmatpush2.bf16.msra.mxu0 %v4879
    %7495 = vmatprep.subr.bf16.mxu0 %v4872
    %7496 = vmatpush2.bf16.msra.mxu0 %v4871
    %7497 = vmatprep.subr.bf16.mxu0 %v4864
    %7498 = vmatpush2.bf16.msra.mxu0 %v4863
    %7499 = vmatprep.subr.bf16.mxu0 %v4856
    %7500 = vmatpush2.bf16.msra.mxu0 %v4855
    %7501 = vmatprep.mubr.bf16.mxu0 %v1178
    %7502 = vmatmul.mubr.bf16.gmra.mxu0 %v1177
    %v7503 = vpop.f32.mrf.mxu0
    %v7504 = vadd.f32 %v7463, %v7503
    %v7505 = vpop.f32.mrf.mxu0
    %v7506 = vadd.f32 %v7465, %v7505
    %v7507 = vpop.f32.mrf.mxu0
    %v7508 = vpop.f32.mrf.mxu0
    %7509 = vdwg.mxu0
    %7510 = vmatprep.subr.bf16.mxu0 %v4976
    %7511 = vmatpush1.bf16.msra.mxu0 %v4975
    %7512 = vmatprep.subr.bf16.mxu0 %v4968
    %7513 = vmatpush1.bf16.msra.mxu0 %v4967
    %7514 = vmatprep.subr.bf16.mxu0 %v4960
    %7515 = vmatpush1.bf16.msra.mxu0 %v4959
    %7516 = vmatprep.subr.bf16.mxu0 %v4952
    %7517 = vmatpush1.bf16.msra.mxu0 %v4951
    %7518 = vmatprep.subr.bf16.mxu0 %v4944
    %7519 = vmatpush1.bf16.msra.mxu0 %v4943
    %7520 = vmatprep.subr.bf16.mxu0 %v4936
    %7521 = vmatpush1.bf16.msra.mxu0 %v4935
    %7522 = vmatprep.subr.bf16.mxu0 %v4928
    %7523 = vmatpush1.bf16.msra.mxu0 %v4927
    %7524 = vmatprep.subr.bf16.mxu0 %v4920
    %7525 = vmatpush1.bf16.msra.mxu0 %v4919
    %7526 = vmatprep.subr.bf16.mxu0 %v5040
    %7527 = vmatpush2.bf16.msra.mxu0 %v5039
    %7528 = vmatprep.subr.bf16.mxu0 %v5032
    %7529 = vmatpush2.bf16.msra.mxu0 %v5031
    %7530 = vmatprep.subr.bf16.mxu0 %v5024
    %7531 = vmatpush2.bf16.msra.mxu0 %v5023
    %7532 = vmatprep.subr.bf16.mxu0 %v5016
    %7533 = vmatpush2.bf16.msra.mxu0 %v5015
    %7534 = vmatprep.subr.bf16.mxu0 %v5008
    %7535 = vmatpush2.bf16.msra.mxu0 %v5007
    %7536 = vmatprep.subr.bf16.mxu0 %v5000
    %7537 = vmatpush2.bf16.msra.mxu0 %v4999
    %7538 = vmatprep.subr.bf16.mxu0 %v4992
    %7539 = vmatpush2.bf16.msra.mxu0 %v4991
    %7540 = vmatprep.subr.bf16.mxu0 %v4984
    %7541 = vmatpush2.bf16.msra.mxu0 %v4983
    %7542 = vmatprep.mubr.bf16.mxu0 %v1180
    %7543 = vmatmul.mubr.bf16.gmra.mxu0 %v1179
    %v7544 = vpop.f32.mrf.mxu0
    %v7545 = vadd.f32 %v7504, %v7544
    %v7546 = vpop.f32.mrf.mxu0
    %v7547 = vadd.f32 %v7506, %v7546
    %v7548 = vpop.f32.mrf.mxu0
    %v7549 = vpop.f32.mrf.mxu0
    %7550 = vdwg.mxu0
    %7551 = vmatprep.subr.bf16.mxu0 %v5104
    %7552 = vmatpush1.bf16.msra.mxu0 %v5103
    %7553 = vmatprep.subr.bf16.mxu0 %v5096
    %7554 = vmatpush1.bf16.msra.mxu0 %v5095
    %7555 = vmatprep.subr.bf16.mxu0 %v5088
    %7556 = vmatpush1.bf16.msra.mxu0 %v5087
    %7557 = vmatprep.subr.bf16.mxu0 %v5080
    %7558 = vmatpush1.bf16.msra.mxu0 %v5079
    %7559 = vmatprep.subr.bf16.mxu0 %v5072
    %7560 = vmatpush1.bf16.msra.mxu0 %v5071
    %7561 = vmatprep.subr.bf16.mxu0 %v5064
    %7562 = vmatpush1.bf16.msra.mxu0 %v5063
    %7563 = vmatprep.subr.bf16.mxu0 %v5056
    %7564 = vmatpush1.bf16.msra.mxu0 %v5055
    %7565 = vmatprep.subr.bf16.mxu0 %v5048
    %7566 = vmatpush1.bf16.msra.mxu0 %v5047
    %7567 = vmatprep.subr.bf16.mxu0 %v5168
    %7568 = vmatpush2.bf16.msra.mxu0 %v5167
    %7569 = vmatprep.subr.bf16.mxu0 %v5160
    %7570 = vmatpush2.bf16.msra.mxu0 %v5159
    %7571 = vmatprep.subr.bf16.mxu0 %v5152
    %7572 = vmatpush2.bf16.msra.mxu0 %v5151
    %7573 = vmatprep.subr.bf16.mxu0 %v5144
    %7574 = vmatpush2.bf16.msra.mxu0 %v5143
    %7575 = vmatprep.subr.bf16.mxu0 %v5136
    %7576 = vmatpush2.bf16.msra.mxu0 %v5135
    %7577 = vmatprep.subr.bf16.mxu0 %v5128
    %7578 = vmatpush2.bf16.msra.mxu0 %v5127
    %7579 = vmatprep.subr.bf16.mxu0 %v5120
    %7580 = vmatpush2.bf16.msra.mxu0 %v5119
    %7581 = vmatprep.subr.bf16.mxu0 %v5112
    %7582 = vmatpush2.bf16.msra.mxu0 %v5111
    %7583 = vmatprep.mubr.bf16.mxu0 %v1182
    %7584 = vmatmul.mubr.bf16.gmra.mxu0 %v1181
    %v7585 = vpop.f32.mrf.mxu0
    %v7586 = vadd.f32 %v7545, %v7585
    %v7587 = vpop.f32.mrf.mxu0
    %v7588 = vadd.f32 %v7547, %v7587
    %v7589 = vpop.f32.mrf.mxu0
    %v7590 = vpop.f32.mrf.mxu0
    %7591 = vdwg.mxu0
    %7592 = vmatprep.subr.bf16.mxu0 %v5232
    %7593 = vmatpush1.bf16.msra.mxu0 %v5231
    %7594 = vmatprep.subr.bf16.mxu0 %v5224
    %7595 = vmatpush1.bf16.msra.mxu0 %v5223
    %7596 = vmatprep.subr.bf16.mxu0 %v5216
    %7597 = vmatpush1.bf16.msra.mxu0 %v5215
    %7598 = vmatprep.subr.bf16.mxu0 %v5208
    %7599 = vmatpush1.bf16.msra.mxu0 %v5207
    %7600 = vmatprep.subr.bf16.mxu0 %v5200
    %7601 = vmatpush1.bf16.msra.mxu0 %v5199
    %7602 = vmatprep.subr.bf16.mxu0 %v5192
    %7603 = vmatpush1.bf16.msra.mxu0 %v5191
    %7604 = vmatprep.subr.bf16.mxu0 %v5184
    %7605 = vmatpush1.bf16.msra.mxu0 %v5183
    %7606 = vmatprep.subr.bf16.mxu0 %v5176
    %7607 = vmatpush1.bf16.msra.mxu0 %v5175
    %7608 = vmatprep.subr.bf16.mxu0 %v5296
    %7609 = vmatpush2.bf16.msra.mxu0 %v5295
    %7610 = vmatprep.subr.bf16.mxu0 %v5288
    %7611 = vmatpush2.bf16.msra.mxu0 %v5287
    %7612 = vmatprep.subr.bf16.mxu0 %v5280
    %7613 = vmatpush2.bf16.msra.mxu0 %v5279
    %7614 = vmatprep.subr.bf16.mxu0 %v5272
    %7615 = vmatpush2.bf16.msra.mxu0 %v5271
    %7616 = vmatprep.subr.bf16.mxu0 %v5264
    %7617 = vmatpush2.bf16.msra.mxu0 %v5263
    %7618 = vmatprep.subr.bf16.mxu0 %v5256
    %7619 = vmatpush2.bf16.msra.mxu0 %v5255
    %7620 = vmatprep.subr.bf16.mxu0 %v5248
    %7621 = vmatpush2.bf16.msra.mxu0 %v5247
    %7622 = vmatprep.subr.bf16.mxu0 %v5240
    %7623 = vmatpush2.bf16.msra.mxu0 %v5239
    %7624 = vmatprep.mubr.bf16.mxu0 %v1184
    %7625 = vmatmul.mubr.bf16.gmra.mxu0 %v1183
    %v7626 = vpop.f32.mrf.mxu0
    %v7627 = vadd.f32 %v7586, %v7626
    %v7628 = vpop.f32.mrf.mxu0
    %v7629 = vadd.f32 %v7588, %v7628
    %v7630 = vpop.f32.mrf.mxu0
    %v7631 = vpop.f32.mrf.mxu0
    %7632 = vdwg.mxu0
    %v7633 = vmul.f32 %v6643, 0.01
    %v7634 = vmul.f32 %v6645, 0.01
    %v7635 = vmul.f32 %v6971, 0.01
    %v7636 = vmul.f32 %v6973, 0.01
    %v7637 = vmul.f32 %v7299, 0.01
    %v7638 = vmul.f32 %v7301, 0.01
    %v7639 = vmul.f32 %v7627, 0.01
    %v7640 = vmul.f32 %v7629, 0.01
    %v7641 = vmax.f32 %v6643, %v7633
    %v7642 = vmax.f32 %v6645, %v7634
    %v7643 = vmax.f32 %v6971, %v7635
    %v7644 = vmax.f32 %v6973, %v7636
    %v7645 = vmax.f32 %v7299, %v7637
    %v7646 = vmax.f32 %v7301, %v7638
    %v7647 = vmax.f32 %v7627, %v7639
    %v7648 = vmax.f32 %v7629, %v7640
    %v7649 = vld [vmem:[#allocation8] sm:$0xff]
    %v7651 = vlaneseq
    %v7652 = vshrl.u32 %v7651, 7
    %v7653 = vsub.s32 0, %v7652
    %v7654 = vrot.slane %v7649, %v7653
    %v7655 = vlaneseq
    %v7656 = vshrl.u32 %v7655, 7
    %v7657 = vsub.s32 1, %v7656
    %v7658 = vrot.slane %v7649, %v7657
    %v7659 = vlaneseq
    %v7660 = vshrl.u32 %v7659, 7
    %v7661 = vsub.s32 2, %v7660
    %v7662 = vrot.slane %v7649, %v7661
    %v7663 = vlaneseq
    %v7664 = vshrl.u32 %v7663, 7
    %v7665 = vsub.s32 3, %v7664
    %v7666 = vrot.slane %v7649, %v7665
    %v7667 = vlaneseq
    %v7668 = vshrl.u32 %v7667, 7
    %v7669 = vsub.s32 4, %v7668
    %v7670 = vrot.slane %v7649, %v7669
    %v7671 = vlaneseq
    %v7672 = vshrl.u32 %v7671, 7
    %v7673 = vsub.s32 5, %v7672
    %v7674 = vrot.slane %v7649, %v7673
    %v7675 = vlaneseq
    %v7676 = vshrl.u32 %v7675, 7
    %v7677 = vsub.s32 6, %v7676
    %v7678 = vrot.slane %v7649, %v7677
    %v7679 = vlaneseq
    %v7680 = vshrl.u32 %v7679, 7
    %v7681 = vsub.s32 7, %v7680
    %v7682 = vrot.slane %v7649, %v7681
    %v7691 = vmul.f32 %v7641, %v7654
    %v7692 = vmul.f32 %v7642, %v7658
    %v7693 = vmul.f32 %v7643, %v7662
    %v7694 = vmul.f32 %v7644, %v7666
    %v7695 = vmul.f32 %v7645, %v7670
    %v7696 = vmul.f32 %v7646, %v7674
    %v7697 = vmul.f32 %v7647, %v7678
    %v7698 = vmul.f32 %v7648, %v7682
    %v7699 = vadd.f32 %v7691, %v7692
    %v7700 = vadd.f32 %v7699, %v7693
    %v7701 = vadd.f32 %v7700, %v7694
    %v7702 = vadd.f32 %v7701, %v7695
    %v7703 = vadd.f32 %v7702, %v7696
    %v7704 = vadd.f32 %v7703, %v7697
    %v7705 = vadd.f32 %v7704, %v7698
    %7706 = vadd.xlane.f32.xlu0 %v7705
    %v7707 = vpop.xlane.xlu0 %7706
    %v7708 = vld [vmem:[#allocation2] sm:$0x1]
    %v7710 = vlaneseq
    %v7711 = vshrl.u32 %v7710, 7
    %v7712 = vsub.s32 0, %v7711
    %v7713 = vrot.slane %v7708, %v7712
    %v7715 = vadd.f32 %v7707, %v7713
    %vm7716 = vcmask 7168
    %7717 = vst.msk [vmem:[%s5] sm:$0xff] %vm7716, %v7715
    // Predicated region
    $region38: #{tpu_custom_call.1} parent=1 // pred_check
      _
    $region39: #{tpu_custom_call.1} parent=1 // pred_check_branch
      %7719 = sbr.rel (0) target = $region41
    $region40: #{tpu_custom_call.1} parent=1 // pred_region
      _
    $region41: #{tpu_custom_call.1} parent=1 // pred_fallthru
      _
    // Predicated region
    $region42: #{tpu_custom_call.1} parent=1 // pred_check
      _
    $region43: #{tpu_custom_call.1} parent=1 // pred_check_branch
      %7721 = sbr.rel (0) target = $region45
    $region44: #{tpu_custom_call.1} parent=1 // pred_region
      _
    $region45: #{tpu_custom_call.1} parent=1 // pred_fallthru
      _
    %7722 = vsyncpa [#allocation4], 1
    %7723 = vsyncpa [#allocation6], 1
    %7724 = vsyncpa [#allocation9], 1

</llo_original>
